<compile_context>
chip_gen: v6e
topology: v6e:2x2x1
jax: 0.10.0
libtpu: 0.0.40
codegen_flags: <defaults>
</compile_context>

<pallas_src>
import functools

import jax
import jax.numpy as jnp
from jax.experimental import pallas as pl
from jax.experimental.pallas import tpu as pltpu


def _round_up(n, m):
    return ((n + m - 1) // m) * m


# ---------------------------------------------------------------------------
# Fused Pallas kernel: qkv projection + windowed attention + output projection
# ---------------------------------------------------------------------------

def _fused_window_mhsa_kernel(x_ref, wqkv_ref, bqkv_ref, wout_ref, o_ref, *,
                              heads, inv_scale):
    # x_ref / o_ref blocks: (1, w_tile, T, C) -- lane-dense channels last.
    _, w_tile, T, C = x_ref.shape
    hd = C // heads

    # ---- qkv 1x1 projection: one (w_tile*T, C) @ (C, 3C) MXU matmul --------
    x = x_ref[0].reshape(w_tile * T, C)
    qkv = jnp.dot(x, wqkv_ref[...], preferred_element_type=jnp.float32)
    qkv = (qkv + bqkv_ref[...]).astype(x.dtype)   # native dtype for MXU operands

    out = None
    for h in range(heads):  # static unroll; head-major lanes -> static slices
        q = (qkv[:, h * hd:(h + 1) * hd] * inv_scale).reshape(w_tile, T, hd)
        k = qkv[:, C + h * hd:C + (h + 1) * hd].reshape(w_tile, T, hd)
        v = qkv[:, 2 * C + h * hd:2 * C + (h + 1) * hd].reshape(w_tile, T, hd)

        # Scores & softmax stay in f32 (v5e has no bf16 VPU/EUP path).
        s = jnp.einsum("wqd,wkd->wqk", q, k, preferred_element_type=jnp.float32)
        s = s - jnp.max(s, axis=-1, keepdims=True)
        p = jnp.exp(s)
        p = p * pl.reciprocal(jnp.sum(p, axis=-1, keepdims=True), approx=True)

        o_h = jnp.einsum("wqk,wkd->wqd", p.astype(v.dtype), v,
                         preferred_element_type=jnp.float32)

        # Output 1x1 projection (no bias), folded in as a per-head block-row
        # matmul and accumulated -> avoids narrow-lane concatenation and keeps
        # the store C-wide (lane dense).
        contrib = jnp.dot(o_h.reshape(w_tile * T, hd).astype(x.dtype),
                          wout_ref[h * hd:(h + 1) * hd, :],
                          preferred_element_type=jnp.float32)
        out = contrib if out is None else out + contrib

    o_ref[0] = out.reshape(w_tile, T, C).astype(o_ref.dtype)


# ---------------------------------------------------------------------------
# Tile selection: conservative VMEM budget + enough grid steps for megacore
# ---------------------------------------------------------------------------

def _pick_window_tile(batch, n_win, T, C, dtype, *,
                      vmem_budget_bytes=8 * 1024 * 1024, min_grid=4):
    """Largest divisor of n_win whose per-step working set (double-buffered
    in/out blocks + f32 intermediates + resident weights) fits a budget that is
    safe on every generation (v7x: 64 MiB physical / 32 MiB scoped default),
    then shrunk until the grid has >= min_grid parallel steps so both v7x
    TensorCores get work and DMA overlaps compute."""
    itemsize = jnp.dtype(dtype).itemsize

    def est(wt):
        io_blk = wt * _round_up(T, 8) * _round_up(C, 128) * itemsize
        qkv = wt * _round_up(T, 8) * _round_up(3 * C, 128) * 4
        scores = 2 * wt * _round_up(T, 8) * _round_up(T, 128) * 4
        attn = wt * _round_up(T, 8) * _round_up(C, 128) * 4
        weights = (_round_up(C, 8) * _round_up(3 * C, 128)
                   + 8 * _round_up(3 * C, 128)
                   + _round_up(C, 8) * _round_up(C, 128)) * itemsize
        return 4 * io_blk + qkv + scores + attn + 2 * weights

    divisors = [d for d in range(1, n_win + 1) if n_win % d == 0]
    fitting = [d for d in divisors if est(d) <= vmem_budget_bytes] or [1]
    wt = fitting[-1]
    target = min(min_grid, batch * n_win)
    while batch * (n_win // wt) < target:
        smaller = [d for d in fitting if d < wt]
        if not smaller:
            break
        wt = smaller[-1]
    return wt


# ---------------------------------------------------------------------------
# Module forward
# ---------------------------------------------------------------------------

def windowed_mhsa(x_nchw, params, *, heads, window_size):
    B, C, H0, W0 = x_nchw.shape
    ws = window_size
    hd = C // heads
    inv_scale = 1.0 / float((C / heads) ** 0.5)

    # pad_if_necessary: zero-pad bottom/right so H, W are multiples of ws.
    pad_h = (-H0) % ws
    pad_w = (-W0) % ws
    x = jnp.pad(x_nchw, ((0, 0), (0, 0), (0, pad_h), (0, pad_w)))
    H, W = x.shape[-2:]
    nH, nW = H // ws, W // ws
    n_win, T = nH * nW, ws * ws

    # Window partition with lane-dense channels: NCHW -> (B, n_win, T, C).
    xw = jnp.transpose(x, (0, 2, 3, 1)).reshape(B, nH, ws, nW, ws, C)
    xw = jnp.transpose(xw, (0, 1, 3, 2, 4, 5)).reshape(B, n_win, T, C)

    # Head-major weight permutation: kernel lane l = head*hd + feat corresponds
    # to torch qkv channel feat*heads + head.  w_out columns are permuted the
    # same way, so the final output channel order is unchanged.
    lane = jnp.arange(C)
    perm = (lane % hd) * heads + (lane // hd)
    perm3 = jnp.concatenate([perm, C + perm, 2 * C + perm])
    w_qkv_k = jnp.asarray(params["w_qkv"])[perm3, :].T            # (C, 3C)
    b_qkv_k = jnp.asarray(params["b_qkv"])[perm3].reshape(1, 3 * C)
    w_out_k = jnp.asarray(params["w_out"])[:, perm].T             # (C, C)

    w_tile = _pick_window_tile(B, n_win, T, C, x.dtype)
    grid = (B, n_win // w_tile)

    tok_spec = pl.BlockSpec((1, w_tile, T, C), lambda b, w: (b, w, 0, 0))
    wqkv_spec = pl.BlockSpec((C, 3 * C), lambda b, w: (0, 0))   # resident
    bqkv_spec = pl.BlockSpec((1, 3 * C), lambda b, w: (0, 0))   # resident
    wout_spec = pl.BlockSpec((C, C), lambda b, w: (0, 0))       # resident

    kern = functools.partial(_fused_window_mhsa_kernel,
                             heads=heads, inv_scale=inv_scale)
    ow = pl.pallas_call(
        kern,
        grid=grid,
        in_specs=[tok_spec, wqkv_spec, bqkv_spec, wout_spec],
        out_specs=tok_spec,
        out_shape=jax.ShapeDtypeStruct((B, n_win, T, C), x.dtype),
        compiler_params=pltpu.CompilerParams(
            dimension_semantics=("parallel", "parallel"),
            vmem_limit_bytes=32 * 1024 * 1024),
    )(xw, w_qkv_k, b_qkv_k, w_out_k)

    # Un-window, crop the padding, back to NCHW (matching PyTorch).
    o = ow.reshape(B, nH, nW, ws, ws, C)
    o = jnp.transpose(o, (0, 1, 3, 2, 4, 5)).reshape(B, H, W, C)
    o = o[:, :H0, :W0, :]
    return jnp.transpose(o, (0, 3, 1, 2))


# ---------------------------------------------------------------------------
# Pure-JAX reference (direct transcription of the torch forward) for checking
# ---------------------------------------------------------------------------

def _reference(x, params, heads, ws):
    B, C, H0, W0 = x.shape
    pad_h = (-H0) % ws
    pad_w = (-W0) % ws
    xp = jnp.pad(x, ((0, 0), (0, 0), (0, pad_h), (0, pad_w)))
    Hp, Wp = xp.shape[-2:]
    scale = (C / heads) ** 0.5
    qkv = jnp.einsum("oc,bchw->bohw", params["w_qkv"], xp) \
        + params["b_qkv"][None, :, None, None]
    q, k, v = qkv[:, :C], qkv[:, C:2 * C], qkv[:, 2 * C:]

    def rs(t):
        t = t.reshape(B, C // heads, heads, Hp // ws, ws, Wp // ws, ws)
        t = jnp.transpose(t, (0, 2, 3, 5, 4, 6, 1))
        return t.reshape(B, heads, Hp // ws, Wp // ws, ws * ws, C // heads)

    q, k, v = rs(q), rs(k), rs(v)
    attn = jax.nn.softmax(
        jnp.einsum("bhijqd,bhijkd->bhijqk", q, k) / scale, axis=-1)
    out = jnp.einsum("bhijqk,bhijkd->bhijqd", attn, v)
    out = out.reshape(B, heads, Hp // ws, Wp // ws, ws, ws, C // heads)
    out = jnp.transpose(out, (0, 6, 1, 2, 4, 3, 5))
    out = out.reshape(B, C, Hp, Wp)
    out = out[..., :H0, :W0]
    return jnp.einsum("oc,bchw->bohw", params["w_out"], out)


# ---------------------------------------------------------------------------

if __name__ == "__main__":
    B, C, H, W = 2, 12, 16, 16
    heads, window_size = 3, 4

    key = jax.random.PRNGKey(0)
    k1, k2, k3, k4 = jax.random.split(key, 4)
    x = jax.random.normal(k1, (B, C, H, W), jnp.float32)
    params = {
        "w_qkv": jax.random.normal(k2, (3 * C, C), jnp.float32) * 0.1,  # Conv2d(C,3C,1).weight
        "b_qkv": jax.random.normal(k3, (3 * C,), jnp.float32) * 0.1,    # Conv2d(C,3C,1).bias
        "w_out": jax.random.normal(k4, (C, C), jnp.float32) * 0.1,      # Conv2d(C,C,1,bias=False).weight
        # relative_bias exists in the module but is never used in forward().
        "relative_bias": jnp.zeros(((2 * window_size - 1) ** 2,), jnp.float32),
    }

    fwd = jax.jit(functools.partial(windowed_mhsa, heads=heads,
                                    window_size=window_size))
    out = jax.block_until_ready(fwd(x, params))

    ref = _reference(x, params, heads, window_size)
    assert out.shape == (B, C, H, W), out.shape
    max_err = float(jnp.max(jnp.abs(out - ref)))
    # approx reciprocal in the softmax denominator -> slightly looser tolerance
    assert jnp.allclose(out, ref, atol=2e-3, rtol=2e-3), max_err
    print("KERNEL_OK")
</pallas_src>

<mosaic_0001>
module attributes {stable_mosaic.version = 11 : i64} {
  func.func @_fused_window_mhsa_kernel(%arg0: i32, %arg1: i32, %arg2: memref<1x8x16x12xf32, #tpu.memory_space<vmem>>, %arg3: memref<12x36xf32, #tpu.memory_space<vmem>>, %arg4: memref<1x36xf32, #tpu.memory_space<vmem>>, %arg5: memref<12x12xf32, #tpu.memory_space<vmem>>, %arg6: memref<1x8x16x12xf32, #tpu.memory_space<vmem>>) attributes {dimension_semantics = [#tpu.dimension_semantics<parallel>, #tpu.dimension_semantics<parallel>], iteration_bounds = array<i64: 2, 2>, scalar_prefetch = 0 : i64, scratch_operands = 0 : i64, tpu.core_type = #tpu.core_type<tc>, window_params = [{transform_indices = @transform_0, window_bounds = array<i64: 1, 8, 16, 12>}, {pipeline_mode = #tpu.pipeline_mode<synchronous>, transform_indices = @transform_1, window_bounds = array<i64: 12, 36>}, {pipeline_mode = #tpu.pipeline_mode<synchronous>, transform_indices = @transform_2, window_bounds = array<i64: 1, 36>}, {pipeline_mode = #tpu.pipeline_mode<synchronous>, transform_indices = @transform_3, window_bounds = array<i64: 12, 12>}, {transform_indices = @transform_4, window_bounds = array<i64: 1, 8, 16, 12>}]} {
    %c0 = arith.constant 0 : index
    %c0_0 = arith.constant 0 : index
    %c0_1 = arith.constant 0 : index
    %c0_2 = arith.constant 0 : index
    %0 = vector.load %arg2[%c0, %c0_0, %c0_1, %c0_2] : memref<1x8x16x12xf32, #tpu.memory_space<vmem>>, vector<1x8x16x12xf32>
    %1 = vector.shape_cast %0 : vector<1x8x16x12xf32> to vector<8x16x12xf32>
    %2 = vector.shape_cast %1 : vector<8x16x12xf32> to vector<128x12xf32>
    %c0_3 = arith.constant 0 : index
    %c0_4 = arith.constant 0 : index
    %3 = vector.load %arg3[%c0_3, %c0_4] : memref<12x36xf32, #tpu.memory_space<vmem>>, vector<12x36xf32>
    %cst = arith.constant dense<0.000000e+00> : vector<128x36xf32>
    %4 = tpu.matmul %2, %3, %cst {dimension_numbers = #tpu.dot_dimension_numbers<[1], [0], [0], [1], [0, 0, 1, 1], [], []>} : vector<128x12xf32>, vector<12x36xf32>, vector<128x36xf32> -> vector<128x36xf32>
    %c0_5 = arith.constant 0 : index
    %c0_6 = arith.constant 0 : index
    %5 = vector.load %arg4[%c0_5, %c0_6] : memref<1x36xf32, #tpu.memory_space<vmem>>, vector<1x36xf32>
    %6 = vector.broadcast %5 : vector<1x36xf32> to vector<128x36xf32>
    %7 = arith.addf %4, %6 : vector<128x36xf32>
    %8 = vector.extract_strided_slice %7 {offsets = [0, 0], sizes = [128, 4], strides = [1, 1]} : vector<128x36xf32> to vector<128x4xf32>
    %cst_7 = arith.constant 5.000000e-01 : f32
    %9 = vector.broadcast %cst_7 : f32 to vector<128x4xf32>
    %10 = arith.mulf %8, %9 : vector<128x4xf32>
    %11 = vector.shape_cast %10 : vector<128x4xf32> to vector<8x16x4xf32>
    %12 = vector.extract_strided_slice %7 {offsets = [0, 12], sizes = [128, 4], strides = [1, 1]} : vector<128x36xf32> to vector<128x4xf32>
    %13 = vector.shape_cast %12 : vector<128x4xf32> to vector<8x16x4xf32>
    %14 = vector.extract_strided_slice %7 {offsets = [0, 24], sizes = [128, 4], strides = [1, 1]} : vector<128x36xf32> to vector<128x4xf32>
    %15 = vector.shape_cast %14 : vector<128x4xf32> to vector<8x16x4xf32>
    "tpu.trace_start"() <{level = 10 : i32, message = "wqd,wkd->wqk"}> : () -> ()
    %cst_8 = arith.constant dense<0.000000e+00> : vector<8x16x16xf32>
    %16 = tpu.matmul %11, %13, %cst_8 {dimension_numbers = #tpu.dot_dimension_numbers<[2], [2], [1], [1], [0, 0, 0, 1, 1, 1], [0], [0]>} : vector<8x16x4xf32>, vector<8x16x4xf32>, vector<8x16x16xf32> -> vector<8x16x16xf32>
    "tpu.trace_stop"() : () -> ()
    %cst_9 = arith.constant dense<0xFF800000> : vector<8x16xf32>
    %17 = vector.multi_reduction <maximumf>, %16, %cst_9 [2] : vector<8x16x16xf32> to vector<8x16xf32>
    %18 = vector.shape_cast %17 : vector<8x16xf32> to vector<8x16x1xf32>
    %19 = vector.broadcast %18 : vector<8x16x1xf32> to vector<8x16x16xf32>
    %20 = arith.subf %16, %19 : vector<8x16x16xf32>
    %21 = math.exp %20 : vector<8x16x16xf32>
    %cst_10 = arith.constant dense<0.000000e+00> : vector<8x16xf32>
    %22 = vector.multi_reduction <add>, %21, %cst_10 [2] : vector<8x16x16xf32> to vector<8x16xf32>
    %23 = vector.shape_cast %22 : vector<8x16xf32> to vector<8x16x1xf32>
    %24 = tpu.reciprocal %23 {approx = true} : vector<8x16x1xf32> -> vector<8x16x1xf32>
    %25 = vector.broadcast %24 : vector<8x16x1xf32> to vector<8x16x16xf32>
    %26 = arith.mulf %21, %25 : vector<8x16x16xf32>
    "tpu.trace_start"() <{level = 10 : i32, message = "wqk,wkd->wqd"}> : () -> ()
    %cst_11 = arith.constant dense<0.000000e+00> : vector<8x16x4xf32>
    %27 = tpu.matmul %26, %15, %cst_11 {dimension_numbers = #tpu.dot_dimension_numbers<[2], [1], [1], [2], [0, 0, 0, 1, 1, 2], [0], [0]>} : vector<8x16x16xf32>, vector<8x16x4xf32>, vector<8x16x4xf32> -> vector<8x16x4xf32>
    "tpu.trace_stop"() : () -> ()
    %28 = vector.shape_cast %27 : vector<8x16x4xf32> to vector<128x4xf32>
    %c0_12 = arith.constant 0 : index
    %c0_13 = arith.constant 0 : index
    %29 = vector.load %arg5[%c0_12, %c0_13] : memref<12x12xf32, #tpu.memory_space<vmem>>, vector<4x12xf32>
    %cst_14 = arith.constant dense<0.000000e+00> : vector<128x12xf32>
    %30 = tpu.matmul %28, %29, %cst_14 {dimension_numbers = #tpu.dot_dimension_numbers<[1], [0], [0], [1], [0, 0, 1, 1], [], []>} : vector<128x4xf32>, vector<4x12xf32>, vector<128x12xf32> -> vector<128x12xf32>
    %31 = vector.extract_strided_slice %7 {offsets = [0, 4], sizes = [128, 4], strides = [1, 1]} : vector<128x36xf32> to vector<128x4xf32>
    %cst_15 = arith.constant 5.000000e-01 : f32
    %32 = vector.broadcast %cst_15 : f32 to vector<128x4xf32>
    %33 = arith.mulf %31, %32 : vector<128x4xf32>
    %34 = vector.shape_cast %33 : vector<128x4xf32> to vector<8x16x4xf32>
    %35 = vector.extract_strided_slice %7 {offsets = [0, 16], sizes = [128, 4], strides = [1, 1]} : vector<128x36xf32> to vector<128x4xf32>
    %36 = vector.shape_cast %35 : vector<128x4xf32> to vector<8x16x4xf32>
    %37 = vector.extract_strided_slice %7 {offsets = [0, 28], sizes = [128, 4], strides = [1, 1]} : vector<128x36xf32> to vector<128x4xf32>
    %38 = vector.shape_cast %37 : vector<128x4xf32> to vector<8x16x4xf32>
    "tpu.trace_start"() <{level = 10 : i32, message = "wqd,wkd->wqk"}> : () -> ()
    %cst_16 = arith.constant dense<0.000000e+00> : vector<8x16x16xf32>
    %39 = tpu.matmul %34, %36, %cst_16 {dimension_numbers = #tpu.dot_dimension_numbers<[2], [2], [1], [1], [0, 0, 0, 1, 1, 1], [0], [0]>} : vector<8x16x4xf32>, vector<8x16x4xf32>, vector<8x16x16xf32> -> vector<8x16x16xf32>
    "tpu.trace_stop"() : () -> ()
    %cst_17 = arith.constant dense<0xFF800000> : vector<8x16xf32>
    %40 = vector.multi_reduction <maximumf>, %39, %cst_17 [2] : vector<8x16x16xf32> to vector<8x16xf32>
    %41 = vector.shape_cast %40 : vector<8x16xf32> to vector<8x16x1xf32>
    %42 = vector.broadcast %41 : vector<8x16x1xf32> to vector<8x16x16xf32>
    %43 = arith.subf %39, %42 : vector<8x16x16xf32>
    %44 = math.exp %43 : vector<8x16x16xf32>
    %cst_18 = arith.constant dense<0.000000e+00> : vector<8x16xf32>
    %45 = vector.multi_reduction <add>, %44, %cst_18 [2] : vector<8x16x16xf32> to vector<8x16xf32>
    %46 = vector.shape_cast %45 : vector<8x16xf32> to vector<8x16x1xf32>
    %47 = tpu.reciprocal %46 {approx = true} : vector<8x16x1xf32> -> vector<8x16x1xf32>
    %48 = vector.broadcast %47 : vector<8x16x1xf32> to vector<8x16x16xf32>
    %49 = arith.mulf %44, %48 : vector<8x16x16xf32>
    "tpu.trace_start"() <{level = 10 : i32, message = "wqk,wkd->wqd"}> : () -> ()
    %cst_19 = arith.constant dense<0.000000e+00> : vector<8x16x4xf32>
    %50 = tpu.matmul %49, %38, %cst_19 {dimension_numbers = #tpu.dot_dimension_numbers<[2], [1], [1], [2], [0, 0, 0, 1, 1, 2], [0], [0]>} : vector<8x16x16xf32>, vector<8x16x4xf32>, vector<8x16x4xf32> -> vector<8x16x4xf32>
    "tpu.trace_stop"() : () -> ()
    %51 = vector.shape_cast %50 : vector<8x16x4xf32> to vector<128x4xf32>
    %c4 = arith.constant 4 : index
    %c0_20 = arith.constant 0 : index
    %52 = vector.load %arg5[%c4, %c0_20] : memref<12x12xf32, #tpu.memory_space<vmem>>, vector<4x12xf32>
    %cst_21 = arith.constant dense<0.000000e+00> : vector<128x12xf32>
    %53 = tpu.matmul %51, %52, %cst_21 {dimension_numbers = #tpu.dot_dimension_numbers<[1], [0], [0], [1], [0, 0, 1, 1], [], []>} : vector<128x4xf32>, vector<4x12xf32>, vector<128x12xf32> -> vector<128x12xf32>
    %54 = arith.addf %30, %53 : vector<128x12xf32>
    %55 = vector.extract_strided_slice %7 {offsets = [0, 8], sizes = [128, 4], strides = [1, 1]} : vector<128x36xf32> to vector<128x4xf32>
    %cst_22 = arith.constant 5.000000e-01 : f32
    %56 = vector.broadcast %cst_22 : f32 to vector<128x4xf32>
    %57 = arith.mulf %55, %56 : vector<128x4xf32>
    %58 = vector.shape_cast %57 : vector<128x4xf32> to vector<8x16x4xf32>
    %59 = vector.extract_strided_slice %7 {offsets = [0, 20], sizes = [128, 4], strides = [1, 1]} : vector<128x36xf32> to vector<128x4xf32>
    %60 = vector.shape_cast %59 : vector<128x4xf32> to vector<8x16x4xf32>
    %61 = vector.extract_strided_slice %7 {offsets = [0, 32], sizes = [128, 4], strides = [1, 1]} : vector<128x36xf32> to vector<128x4xf32>
    %62 = vector.shape_cast %61 : vector<128x4xf32> to vector<8x16x4xf32>
    "tpu.trace_start"() <{level = 10 : i32, message = "wqd,wkd->wqk"}> : () -> ()
    %cst_23 = arith.constant dense<0.000000e+00> : vector<8x16x16xf32>
    %63 = tpu.matmul %58, %60, %cst_23 {dimension_numbers = #tpu.dot_dimension_numbers<[2], [2], [1], [1], [0, 0, 0, 1, 1, 1], [0], [0]>} : vector<8x16x4xf32>, vector<8x16x4xf32>, vector<8x16x16xf32> -> vector<8x16x16xf32>
    "tpu.trace_stop"() : () -> ()
    %cst_24 = arith.constant dense<0xFF800000> : vector<8x16xf32>
    %64 = vector.multi_reduction <maximumf>, %63, %cst_24 [2] : vector<8x16x16xf32> to vector<8x16xf32>
    %65 = vector.shape_cast %64 : vector<8x16xf32> to vector<8x16x1xf32>
    %66 = vector.broadcast %65 : vector<8x16x1xf32> to vector<8x16x16xf32>
    %67 = arith.subf %63, %66 : vector<8x16x16xf32>
    %68 = math.exp %67 : vector<8x16x16xf32>
    %cst_25 = arith.constant dense<0.000000e+00> : vector<8x16xf32>
    %69 = vector.multi_reduction <add>, %68, %cst_25 [2] : vector<8x16x16xf32> to vector<8x16xf32>
    %70 = vector.shape_cast %69 : vector<8x16xf32> to vector<8x16x1xf32>
    %71 = tpu.reciprocal %70 {approx = true} : vector<8x16x1xf32> -> vector<8x16x1xf32>
    %72 = vector.broadcast %71 : vector<8x16x1xf32> to vector<8x16x16xf32>
    %73 = arith.mulf %68, %72 : vector<8x16x16xf32>
    "tpu.trace_start"() <{level = 10 : i32, message = "wqk,wkd->wqd"}> : () -> ()
    %cst_26 = arith.constant dense<0.000000e+00> : vector<8x16x4xf32>
    %74 = tpu.matmul %73, %62, %cst_26 {dimension_numbers = #tpu.dot_dimension_numbers<[2], [1], [1], [2], [0, 0, 0, 1, 1, 2], [0], [0]>} : vector<8x16x16xf32>, vector<8x16x4xf32>, vector<8x16x4xf32> -> vector<8x16x4xf32>
    "tpu.trace_stop"() : () -> ()
    %75 = vector.shape_cast %74 : vector<8x16x4xf32> to vector<128x4xf32>
    %c8 = arith.constant 8 : index
    %c0_27 = arith.constant 0 : index
    %76 = vector.load %arg5[%c8, %c0_27] : memref<12x12xf32, #tpu.memory_space<vmem>>, vector<4x12xf32>
    %cst_28 = arith.constant dense<0.000000e+00> : vector<128x12xf32>
    %77 = tpu.matmul %75, %76, %cst_28 {dimension_numbers = #tpu.dot_dimension_numbers<[1], [0], [0], [1], [0, 0, 1, 1], [], []>} : vector<128x4xf32>, vector<4x12xf32>, vector<128x12xf32> -> vector<128x12xf32>
    %78 = arith.addf %54, %77 : vector<128x12xf32>
    %79 = vector.shape_cast %78 : vector<128x12xf32> to vector<8x16x12xf32>
    %c0_29 = arith.constant 0 : index
    %c0_30 = arith.constant 0 : index
    %c0_31 = arith.constant 0 : index
    %c0_32 = arith.constant 0 : index
    %80 = vector.load %arg6[%c0_29, %c0_30, %c0_31, %c0_32] : memref<1x8x16x12xf32, #tpu.memory_space<vmem>>, vector<1x8x16x12xf32>
    %81 = vector.shape_cast %80 : vector<1x8x16x12xf32> to vector<8x16x12xf32>
    %82 = vector.shape_cast %79 : vector<8x16x12xf32> to vector<1x8x16x12xf32>
    tpu.vector_store %arg6[%c0_29, %c0_30, %c0_31, %c0_32], %82 {strides = array<i32>} : memref<1x8x16x12xf32, #tpu.memory_space<vmem>>, vector<1x8x16x12xf32>,
    return
  }
  func.func @transform_0(%arg0: i32, %arg1: i32) -> (i32, i32, i32, i32) {
    %c0_i32 = arith.constant 0 : i32
    %c0_i32_0 = arith.constant 0 : i32
    %c0_i32_1 = arith.constant 0 : i32
    return %arg0, %arg1, %c0_i32, %c0_i32_0 : i32, i32, i32, i32
  }
  func.func @transform_1(%arg0: i32, %arg1: i32) -> (i32, i32) {
    %c0_i32 = arith.constant 0 : i32
    %c0_i32_0 = arith.constant 0 : i32
    %c0_i32_1 = arith.constant 0 : i32
    return %c0_i32, %c0_i32_0 : i32, i32
  }
  func.func @transform_2(%arg0: i32, %arg1: i32) -> (i32, i32) {
    %c0_i32 = arith.constant 0 : i32
    %c0_i32_0 = arith.constant 0 : i32
    %c0_i32_1 = arith.constant 0 : i32
    return %c0_i32, %c0_i32_0 : i32, i32
  }
  func.func @transform_3(%arg0: i32, %arg1: i32) -> (i32, i32) {
    %c0_i32 = arith.constant 0 : i32
    %c0_i32_0 = arith.constant 0 : i32
    %c0_i32_1 = arith.constant 0 : i32
    return %c0_i32, %c0_i32_0 : i32, i32
  }
  func.func @transform_4(%arg0: i32, %arg1: i32) -> (i32, i32, i32, i32) {
    %c0_i32 = arith.constant 0 : i32
    %c0_i32_0 = arith.constant 0 : i32
    %c0_i32_1 = arith.constant 0 : i32
    return %arg0, %arg1, %c0_i32, %c0_i32_0 : i32, i32, i32, i32
  }
}

</mosaic_0001>

<llo_original>
// kernel: windowed_mhsa.1
$region0: #{windowed_mhsa.1}
  #allocation0 [shape = 'u32[]', space=smem, size = 0x4, offset = 0x4, fixed_abs, tag = 'smem constant byte address 0x4 - core index']
  #allocation1 [shape = 'u32[144,128]{1,0:T(1,128)}', space=vmem, size = 0x12000, scoped, tag = 'internal scratch']
  %s0 = inlined_call_operand.vmem [shape: f32[2,16,16,12], index: 0, kind: input, shape index: {}]
  %s1 = inlined_call_operand.vmem [shape: f32[12,36], index: 1, kind: input, shape index: {}]
  %s2 = inlined_call_operand.vmem [shape: f32[1,36], index: 2, kind: input, shape index: {}]
  %s3 = inlined_call_operand.vmem [shape: f32[12,12], index: 3, kind: input, shape index: {}]
  %s4 = inlined_call_operand.vmem [shape: f32[2,16,16,12], index: 4, kind: output, shape index: {}]
  %s5 = sld [smem:[#allocation0]]
  $region49: #{windowed_mhsa.1} parent=0
    _
  %s7 = ssub.s32 1, %s5
  %s8 = scalar_select 0, %s7, %s5
  loop: start=0, step=1, limit=6
  $region2: #{windowed_mhsa.1} parent=0 // loop_pre_header
    _
  $region3: #{windowed_mhsa.1} parent=0 // loop_header
    %s10 = sphi 0, %s14
    %p11 = scmp.ge.s32.totalorder %s10, 6
    %s17 = sphi 0, %s29
    %s18 = sphi 0, %s25
    %s19 = sphi 0, %s17
    %s20 = sphi 0, %s18
    %s21 = sphi 0, %s19
    %s22 = sphi 0, %s20
    %s34 = sphi 0, %s36
    %s37 = sphi 0, %s34
    %s38 = sphi 0, %s37
    %s54 = sphi 0, %s38
    %s58 = sphi 0, %s58
    %s60 = sphi 0, %s58
    %s61 = sphi 0, %s60
    %s75 = sphi 0, %s61
    %s79 = sphi 0, %s79
    %s81 = sphi 0, %s79
    %s82 = sphi 0, %s81
    %s96 = sphi 0, %s82
    %s100 = sphi 0, %s100
    %s102 = sphi 0, %s100
    %s103 = sphi 0, %s102
    %s117 = sphi 0, %s103
    %s125 = sphi 0, %s127
    %s128 = sphi 0, %s125
    %s129 = sphi 0, %s128
    %s145 = sphi 0, %s129
  $region4: #{windowed_mhsa.1} parent=0 // loop_header_branch
    %13 = sbr.rel (%p11) target = $region8
  $region5: #{windowed_mhsa.1} parent=0 // loop_body
    %s15 = ssub.s32 %s10, 1
    %s16 = ssub.s32 %s10, 2
    %s23 = sadd.s32 1, %s18
    %p24 = scmp.ge.s32.totalorder %s23, 2
    %s25 = scalar_select %p24, 0, %s23
    %s26 = sadd.s32 1, %s17
    %s27 = scalar_select %p24, %s26, %s17
    %p28 = scmp.ge.s32.totalorder %s27, 2
    %s29 = scalar_select %p28, 0, %s27
    %s30 = ssub.s32 %s17, %s29
    %s31 = ssub.s32 %s18, %s25
    %s32 = sor.u32 %s30, %s31
    %p33 = scmp.eq.s32.totalorder %s32, 0
    %s35 = sadd.s32 %s34, 1
    %s36 = scalar_select %p33, %s34, %s35
    %p39 = pneg %p33
    %p40 = scmp.eq.s32.totalorder %s10, 3
    %p41 = por %p39, %p40
    %p42 = scmp.ne.s32.totalorder %s34, %s37
    %p43 = scmp.eq.s32.totalorder %s10, 0
    %p44 = por %p42, %p43
    %p45 = scmp.ne.s32.totalorder %s34, %s37
    %p46 = scmp.eq.s32.totalorder %s15, 3
    %p47 = por %p45, %p46
    %p48 = scmp.ne.s32.totalorder %s37, %s38
    %p49 = scmp.eq.s32.totalorder %s15, 0
    %p50 = por %p48, %p49
    %p51 = scmp.ne.s32.totalorder %s37, %s38
    %p52 = scmp.eq.s32.totalorder %s16, 3
    %p53 = por %p51, %p52
    %p55 = scmp.ne.s32.totalorder %s38, %s54
    %p56 = scmp.eq.s32.totalorder %s16, 0
    %p57 = por %p55, %p56
    %s59 = sadd.s32 %s58, 1
    %p62 = scmp.eq.s32.totalorder %s10, 3
    %p63 = scmp.ne.s32.totalorder %s58, %s60
    %p64 = scmp.eq.s32.totalorder %s10, 0
    %p65 = por %p63, %p64
    %p66 = scmp.ne.s32.totalorder %s58, %s60
    %p67 = scmp.eq.s32.totalorder %s15, 3
    %p68 = por %p66, %p67
    %p69 = scmp.ne.s32.totalorder %s60, %s61
    %p70 = scmp.eq.s32.totalorder %s15, 0
    %p71 = por %p69, %p70
    %p72 = scmp.ne.s32.totalorder %s60, %s61
    %p73 = scmp.eq.s32.totalorder %s16, 3
    %p74 = por %p72, %p73
    %p76 = scmp.ne.s32.totalorder %s61, %s75
    %p77 = scmp.eq.s32.totalorder %s16, 0
    %p78 = por %p76, %p77
    %s80 = sadd.s32 %s79, 1
    %p83 = scmp.eq.s32.totalorder %s10, 3
    %p84 = scmp.ne.s32.totalorder %s79, %s81
    %p85 = scmp.eq.s32.totalorder %s10, 0
    %p86 = por %p84, %p85
    %p87 = scmp.ne.s32.totalorder %s79, %s81
    %p88 = scmp.eq.s32.totalorder %s15, 3
    %p89 = por %p87, %p88
    %p90 = scmp.ne.s32.totalorder %s81, %s82
    %p91 = scmp.eq.s32.totalorder %s15, 0
    %p92 = por %p90, %p91
    %p93 = scmp.ne.s32.totalorder %s81, %s82
    %p94 = scmp.eq.s32.totalorder %s16, 3
    %p95 = por %p93, %p94
    %p97 = scmp.ne.s32.totalorder %s82, %s96
    %p98 = scmp.eq.s32.totalorder %s16, 0
    %p99 = por %p97, %p98
    %s101 = sadd.s32 %s100, 1
    %p104 = scmp.eq.s32.totalorder %s10, 3
    %p105 = scmp.ne.s32.totalorder %s100, %s102
    %p106 = scmp.eq.s32.totalorder %s10, 0
    %p107 = por %p105, %p106
    %p108 = scmp.ne.s32.totalorder %s100, %s102
    %p109 = scmp.eq.s32.totalorder %s15, 3
    %p110 = por %p108, %p109
    %p111 = scmp.ne.s32.totalorder %s102, %s103
    %p112 = scmp.eq.s32.totalorder %s15, 0
    %p113 = por %p111, %p112
    %p114 = scmp.ne.s32.totalorder %s102, %s103
    %p115 = scmp.eq.s32.totalorder %s16, 3
    %p116 = por %p114, %p115
    %p118 = scmp.ne.s32.totalorder %s103, %s117
    %p119 = scmp.eq.s32.totalorder %s16, 0
    %p120 = por %p118, %p119
    %s121 = ssub.s32 %s17, %s29
    %s122 = ssub.s32 %s18, %s25
    %s123 = sor.u32 %s121, %s122
    %p124 = scmp.eq.s32.totalorder %s123, 0
    %s126 = sadd.s32 %s125, 1
    %s127 = scalar_select %p124, %s125, %s126
    %p130 = pneg %p124
    %p131 = scmp.eq.s32.totalorder %s10, 3
    %p132 = por %p130, %p131
    %p133 = scmp.ne.s32.totalorder %s125, %s128
    %p134 = scmp.eq.s32.totalorder %s10, 0
    %p135 = por %p133, %p134
    %p136 = scmp.ne.s32.totalorder %s125, %s128
    %p137 = scmp.eq.s32.totalorder %s15, 3
    %p138 = por %p136, %p137
    %p139 = scmp.ne.s32.totalorder %s128, %s129
    %p140 = scmp.eq.s32.totalorder %s15, 0
    %p141 = por %p139, %p140
    %p142 = scmp.ne.s32.totalorder %s128, %s129
    %p143 = scmp.eq.s32.totalorder %s16, 3
    %p144 = por %p142, %p143
    %p146 = scmp.ne.s32.totalorder %s129, %s145
    %p147 = scmp.eq.s32.totalorder %s16, 0
    %p148 = por %p146, %p147
    %p149 = scmp.le.s32.totalorder 1, %s10
    %p150 = scmp.lt.s32.totalorder %s10, 5
    %p151 = pnand %p149, %p150
    %p152 = pneg %p151
    // Predicated region
    $region9: #{windowed_mhsa.1} parent=5 // pred_check
      _
    $region10: #{windowed_mhsa.1} parent=5 // pred_check_branch
      %154 = sbr.rel (%p151) target = $region12
    $region11: #{windowed_mhsa.1} parent=5 // pred_region
      %s155 = ssub.s32 %s10, 1
      // Predicated region
      $region13: #{windowed_mhsa.1} parent=11 // pred_check
        %p156 = pneg %p71
      $region14: #{windowed_mhsa.1} parent=11 // pred_check_branch
        %158 = sbr.rel (%p156) target = $region16
      $region15: #{windowed_mhsa.1} parent=11 // pred_region
        _
      $region16: #{windowed_mhsa.1} parent=11 // pred_fallthru
        _
      // Predicated region
      $region17: #{windowed_mhsa.1} parent=11 // pred_check
        %p159 = pneg %p92
      $region18: #{windowed_mhsa.1} parent=11 // pred_check_branch
        %161 = sbr.rel (%p159) target = $region20
      $region19: #{windowed_mhsa.1} parent=11 // pred_region
        _
      $region20: #{windowed_mhsa.1} parent=11 // pred_fallthru
        _
      // Predicated region
      $region21: #{windowed_mhsa.1} parent=11 // pred_check
        %p162 = pneg %p113
      $region22: #{windowed_mhsa.1} parent=11 // pred_check_branch
        %164 = sbr.rel (%p162) target = $region24
      $region23: #{windowed_mhsa.1} parent=11 // pred_region
        _
      $region24: #{windowed_mhsa.1} parent=11 // pred_fallthru
        _
    $region12: #{windowed_mhsa.1} parent=5 // pred_fallthru
      _
    %p165 = scmp.lt.s32.totalorder %s10, 4
    // Predicated region
    $region25: #{windowed_mhsa.1} parent=5 // pred_check
      %p166 = pneg %p165
    $region26: #{windowed_mhsa.1} parent=5 // pred_check_branch
      %168 = sbr.rel (%p166) target = $region28
    $region27: #{windowed_mhsa.1} parent=5 // pred_region
      // Predicated region
      $region29: #{windowed_mhsa.1} parent=27 // pred_check
        %p169 = pneg %p44
      $region30: #{windowed_mhsa.1} parent=27 // pred_check_branch
        %171 = sbr.rel (%p169) target = $region32
      $region31: #{windowed_mhsa.1} parent=27 // pred_region
        %s172 = smul.u32 8, %s18
        %p173 = scmp.lt.s32.totalorder %s17, 1
        %s174 = scalar_select %p173, %s17, 1
        %p175 = scmp.lt.s32.totalorder %s172, 15
        %s176 = scalar_select %p175, %s172, 15
        %s177 = smul.addr %s176, 2
        %s178 = smul.addr %s174, 32
        %s179 = sadd.s32 %s177, %s178
        %s180 = smul.addr %s179, 8
        %s181 = scalar_lea.vmem %s0, %s180
        %s182 = smul.u32 8, %s18
      $region32: #{windowed_mhsa.1} parent=27 // pred_fallthru
        _
    $region28: #{windowed_mhsa.1} parent=5 // pred_fallthru
      _
    %p183 = scmp.le.s32.totalorder 1, %s10
    %p184 = scmp.lt.s32.totalorder %s10, 5
    %p185 = pnand %p183, %p184
    %p186 = pneg %p185
    // Predicated region
    $region33: #{windowed_mhsa.1} parent=5 // pred_check
      _
    $region34: #{windowed_mhsa.1} parent=5 // pred_check_branch
      %188 = sbr.rel (%p185) target = $region36
    $region35: #{windowed_mhsa.1} parent=5 // pred_region
      %s189 = ssub.s32 %s10, 1
      %s190 = smul.u32 8, %s20
      %p191 = scmp.lt.s32.totalorder %s19, 1
      %s192 = scalar_select %p191, %s19, 1
      %p193 = scmp.lt.s32.totalorder %s190, 15
      %s194 = scalar_select %p193, %s190, 15
      %s195 = smul.addr %s194, 2
      %s196 = smul.addr %s192, 32
      %s197 = sadd.s32 %s195, %s196
      %s198 = smul.addr %s197, 8
      %s199 = scalar_lea.vmem %s0, %s198
      %p200 = pneg %p50
      %p201 = pneg %p47
      %p202 = pneg %p71
      %p203 = pneg %p68
      %p204 = pneg %p92
      %p205 = pneg %p89
      %p206 = pneg %p113
      %p207 = pneg %p110
      %p208 = pneg %p141
      %p209 = pneg %p138
      %s210 = smul.u32 8, %s20
      %p211 = scmp.lt.s32.totalorder %s19, 1
      %s212 = scalar_select %p211, %s19, 1
      %p213 = scmp.lt.s32.totalorder %s210, 15
      %s214 = scalar_select %p213, %s210, 15
      %s215 = smul.addr %s214, 2
      %s216 = smul.addr %s212, 32
      %s217 = sadd.s32 %s215, %s216
      %s218 = smul.addr %s217, 8
      %s219 = scalar_lea.vmem %s4, %s218
      %s220 = smul.u32 8, %s20
      %p221 = scmp.lt.s32.totalorder %s19, 1
      %s222 = scalar_select %p221, %s19, 1
      %p223 = scmp.lt.s32.totalorder %s220, 15
      %s224 = scalar_select %p223, %s220, 15
      %s225 = smul.addr %s224, 2
      %s226 = smul.addr %s222, 32
      %s227 = sadd.s32 %s225, %s226
      %s228 = smul.addr %s227, 8
      %s229 = scalar_lea.vmem %s0, %s228
      %s230 = smul.u32 8, %s20
      %s231 = smul.u32 8, %s20
      %p232 = scmp.lt.s32.totalorder %s19, 1
      %s233 = scalar_select %p232, %s19, 1
      %p234 = scmp.lt.s32.totalorder %s231, 15
      %s235 = scalar_select %p234, %s231, 15
      %s236 = smul.addr %s235, 2
      %s237 = smul.addr %s233, 32
      %s238 = sadd.s32 %s236, %s237
      %s239 = smul.addr %s238, 8
      %s240 = scalar_lea.vmem %s4, %s239
      %s241 = smul.u32 8, %s20
      %v242 = vld [vmem:[%s229] sm:$0xff]
      %v243 = vld [vmem:[%s229 + $0x8] sm:$0xff]
      %v244 = vld [vmem:[%s229 + $0x10] sm:$0xff]
      %v245 = vld [vmem:[%s229 + $0x18] sm:$0xff]
      %v246 = vld [vmem:[%s229 + $0x20] sm:$0xff]
      %v247 = vld [vmem:[%s229 + $0x28] sm:$0xff]
      %v248 = vld [vmem:[%s229 + $0x30] sm:$0xff]
      %v249 = vld [vmem:[%s229 + $0x38] sm:$0xff]
      %v250 = vld [vmem:[%s229 + $0x40] sm:$0xff]
      %v251 = vld [vmem:[%s229 + $0x48] sm:$0xff]
      %v252 = vld [vmem:[%s229 + $0x50] sm:$0xff]
      %v253 = vld [vmem:[%s229 + $0x58] sm:$0xff]
      %v254 = vld [vmem:[%s229 + $0x60] sm:$0xff]
      %v255 = vld [vmem:[%s229 + $0x68] sm:$0xff]
      %v256 = vld [vmem:[%s229 + $0x70] sm:$0xff]
      %v257 = vld [vmem:[%s229 + $0x78] sm:$0xff]
      %v258 = vld [vmem:[%s1] sm:$0xff]
      %v259 = vld [vmem:[%s1 + $0x8] sm:$0xf]
      %v260 = vld [vmem:[%s2] sm:$0x1]
      %v262 = vlaneseq
      %v263 = vshrl.u32 %v262, 7
      %v264 = vsub.s32 0, %v263
      %v265 = vrot.slane %v260, %v264
      %vm267 = vcmask 97280
      %v269 = vsel %vm267, %v242, 0
      %v272 = vsel %vm267, %v243, 0
      %v275 = vsel %vm267, %v244, 0
      %v278 = vsel %vm267, %v245, 0
      %v281 = vsel %vm267, %v246, 0
      %v284 = vsel %vm267, %v247, 0
      %v287 = vsel %vm267, %v248, 0
      %v290 = vsel %vm267, %v249, 0
      %v293 = vsel %vm267, %v250, 0
      %v296 = vsel %vm267, %v251, 0
      %v299 = vsel %vm267, %v252, 0
      %v302 = vsel %vm267, %v253, 0
      %v305 = vsel %vm267, %v254, 0
      %v308 = vsel %vm267, %v255, 0
      %v311 = vsel %vm267, %v256, 0
      %v314 = vsel %vm267, %v257, 0
      %vm316 = vcmask 1043456
      %v318 = vsel %vm316, %v259, 0
      %320 = vmatprep.subr.mxu0 0.0
      %321 = vmatpush1.msra.mxu0 0.0
      %322 = vmatprep.subr.mxu0 0.0
      %323 = vmatpush1.msra.mxu0 0.0
      %324 = vmatprep.subr.mxu0 0.0
      %325 = vmatpush1.msra.mxu0 0.0
      %326 = vmatprep.subr.mxu0 0.0
      %327 = vmatpush1.msra.mxu0 0.0
      %328 = vmatprep.subr.mxu0 0.0
      %329 = vmatpush1.msra.mxu0 0.0
      %330 = vmatprep.subr.mxu0 0.0
      %331 = vmatpush1.msra.mxu0 0.0
      %332 = vmatprep.subr.mxu0 0.0
      %333 = vmatpush1.msra.mxu0 0.0
      %334 = vmatprep.subr.mxu0 0.0
      %335 = vmatpush1.msra.mxu0 0.0
      %336 = vmatprep.subr.mxu0 0.0
      %337 = vmatpush1.msra.mxu0 0.0
      %338 = vmatprep.subr.mxu0 0.0
      %339 = vmatpush1.msra.mxu0 0.0
      %340 = vmatprep.subr.mxu0 0.0
      %341 = vmatpush1.msra.mxu0 0.0
      %342 = vmatprep.subr.mxu0 0.0
      %343 = vmatpush1.msra.mxu0 0.0
      %344 = vmatprep.subr.mxu0 0.0
      %345 = vmatpush1.msra.mxu0 0.0
      %346 = vmatprep.subr.mxu0 0.0
      %347 = vmatpush1.msra.mxu0 0.0
      %348 = vmatprep.subr.mxu0 0.0
      %349 = vmatpush1.msra.mxu0 %v318
      %350 = vmatprep.subr.mxu0 0.0
      %351 = vmatpush1.msra.mxu0 %v258
      %352 = vmatprep.subr.mxu0 0.0
      %353 = vmatpush2.msra.mxu0 0.0
      %354 = vmatprep.subr.mxu0 0.0
      %355 = vmatpush2.msra.mxu0 0.0
      %356 = vmatprep.subr.mxu0 0.0
      %357 = vmatpush2.msra.mxu0 0.0
      %358 = vmatprep.subr.mxu0 0.0
      %359 = vmatpush2.msra.mxu0 0.0
      %360 = vmatprep.subr.mxu0 0.0
      %361 = vmatpush2.msra.mxu0 0.0
      %362 = vmatprep.subr.mxu0 0.0
      %363 = vmatpush2.msra.mxu0 0.0
      %364 = vmatprep.subr.mxu0 0.0
      %365 = vmatpush2.msra.mxu0 0.0
      %366 = vmatprep.subr.mxu0 0.0
      %367 = vmatpush2.msra.mxu0 0.0
      %368 = vmatprep.subr.mxu0 0.0
      %369 = vmatpush2.msra.mxu0 0.0
      %370 = vmatprep.subr.mxu0 0.0
      %371 = vmatpush2.msra.mxu0 0.0
      %372 = vmatprep.subr.mxu0 0.0
      %373 = vmatpush2.msra.mxu0 0.0
      %374 = vmatprep.subr.mxu0 0.0
      %375 = vmatpush2.msra.mxu0 0.0
      %376 = vmatprep.subr.mxu0 0.0
      %377 = vmatpush2.msra.mxu0 0.0
      %378 = vmatprep.subr.mxu0 0.0
      %379 = vmatpush2.msra.mxu0 0.0
      %380 = vmatprep.subr.mxu0 0.0
      %381 = vmatpush2.msra.mxu0 0.0
      %382 = vmatprep.subr.mxu0 0.0
      %383 = vmatpush2.msra.mxu0 0.0
      %384 = vmatprep.mubr.f32.mxu0 0.0
      %385 = vmatmul.mubr.f32.gmra.mxu0 %v269
      %v386 = vpop.f32.mrf.mxu0
      %v387 = vadd.f32 %v265, %v386
      %v388 = vpop.f32.mrf.mxu0
      %389 = vmatprep.mubr.f32.mxu0 0.0
      %390 = vmatmul.mubr.f32.gmra.mxu0 %v272
      %v391 = vpop.f32.mrf.mxu0
      %v392 = vadd.f32 %v265, %v391
      %v393 = vpop.f32.mrf.mxu0
      %394 = vmatprep.mubr.f32.mxu0 0.0
      %395 = vmatmul.mubr.f32.gmra.mxu0 %v275
      %v396 = vpop.f32.mrf.mxu0
      %v397 = vadd.f32 %v265, %v396
      %v398 = vpop.f32.mrf.mxu0
      %399 = vmatprep.mubr.f32.mxu0 0.0
      %400 = vmatmul.mubr.f32.gmra.mxu0 %v278
      %v401 = vpop.f32.mrf.mxu0
      %v402 = vadd.f32 %v265, %v401
      %v403 = vpop.f32.mrf.mxu0
      %404 = vmatprep.mubr.f32.mxu0 0.0
      %405 = vmatmul.mubr.f32.gmra.mxu0 %v281
      %v406 = vpop.f32.mrf.mxu0
      %v407 = vadd.f32 %v265, %v406
      %v408 = vpop.f32.mrf.mxu0
      %409 = vmatprep.mubr.f32.mxu0 0.0
      %410 = vmatmul.mubr.f32.gmra.mxu0 %v284
      %v411 = vpop.f32.mrf.mxu0
      %v412 = vadd.f32 %v265, %v411
      %v413 = vpop.f32.mrf.mxu0
      %414 = vmatprep.mubr.f32.mxu0 0.0
      %415 = vmatmul.mubr.f32.gmra.mxu0 %v287
      %v416 = vpop.f32.mrf.mxu0
      %v417 = vadd.f32 %v265, %v416
      %v418 = vpop.f32.mrf.mxu0
      %419 = vmatprep.mubr.f32.mxu0 0.0
      %420 = vmatmul.mubr.f32.gmra.mxu0 %v290
      %v421 = vpop.f32.mrf.mxu0
      %v422 = vadd.f32 %v265, %v421
      %v423 = vpop.f32.mrf.mxu0
      %424 = vmatprep.mubr.f32.mxu0 0.0
      %425 = vmatmul.mubr.f32.gmra.mxu0 %v293
      %v426 = vpop.f32.mrf.mxu0
      %v427 = vadd.f32 %v265, %v426
      %v428 = vpop.f32.mrf.mxu0
      %429 = vmatprep.mubr.f32.mxu0 0.0
      %430 = vmatmul.mubr.f32.gmra.mxu0 %v296
      %v431 = vpop.f32.mrf.mxu0
      %v432 = vadd.f32 %v265, %v431
      %v433 = vpop.f32.mrf.mxu0
      %434 = vmatprep.mubr.f32.mxu0 0.0
      %435 = vmatmul.mubr.f32.gmra.mxu0 %v299
      %v436 = vpop.f32.mrf.mxu0
      %v437 = vadd.f32 %v265, %v436
      %v438 = vpop.f32.mrf.mxu0
      %439 = vmatprep.mubr.f32.mxu0 0.0
      %440 = vmatmul.mubr.f32.gmra.mxu0 %v302
      %v441 = vpop.f32.mrf.mxu0
      %v442 = vadd.f32 %v265, %v441
      %v443 = vpop.f32.mrf.mxu0
      %444 = vmatprep.mubr.f32.mxu0 0.0
      %445 = vmatmul.mubr.f32.gmra.mxu0 %v305
      %v446 = vpop.f32.mrf.mxu0
      %v447 = vadd.f32 %v265, %v446
      %v448 = vpop.f32.mrf.mxu0
      %449 = vmatprep.mubr.f32.mxu0 0.0
      %450 = vmatmul.mubr.f32.gmra.mxu0 %v308
      %v451 = vpop.f32.mrf.mxu0
      %v452 = vadd.f32 %v265, %v451
      %v453 = vpop.f32.mrf.mxu0
      %454 = vmatprep.mubr.f32.mxu0 0.0
      %455 = vmatmul.mubr.f32.gmra.mxu0 %v311
      %v456 = vpop.f32.mrf.mxu0
      %v457 = vadd.f32 %v265, %v456
      %v458 = vpop.f32.mrf.mxu0
      %459 = vmatprep.mubr.f32.mxu0 0.0
      %460 = vmatmul.mubr.f32.gmra.mxu0 %v314
      %v461 = vpop.f32.mrf.mxu0
      %v462 = vadd.f32 %v265, %v461
      %v463 = vpop.f32.mrf.mxu0
      %464 = vdwg.mxu0
      %v465 = vmul.f32 %v387, 0.5
      %v466 = vmul.f32 %v392, 0.5
      %v467 = vmul.f32 %v397, 0.5
      %v468 = vmul.f32 %v402, 0.5
      %v469 = vmul.f32 %v407, 0.5
      %v470 = vmul.f32 %v412, 0.5
      %v471 = vmul.f32 %v417, 0.5
      %v472 = vmul.f32 %v422, 0.5
      %v473 = vmul.f32 %v427, 0.5
      %v474 = vmul.f32 %v432, 0.5
      %v475 = vmul.f32 %v437, 0.5
      %v476 = vmul.f32 %v442, 0.5
      %v477 = vmul.f32 %v447, 0.5
      %v478 = vmul.f32 %v452, 0.5
      %v479 = vmul.f32 %v457, 0.5
      %v480 = vmul.f32 %v462, 0.5
      %483 = vrot.lane.b32.xlu0 %v387, 116
      %v484 = vpop.permute.xlu0 %483
      %485 = vrot.lane.b32.xlu0 %v392, 116
      %v486 = vpop.permute.xlu0 %485
      %vm487 = vcmask 31744
      %v489 = vsel %vm487, %v465, 0
      %v492 = vsel %vm487, %v466, 0
      %v494 = vsel %vm487, %v484, 0
      %v496 = vsel %vm487, %v486, 0
      %498 = vmatprep.subr.mxu0 0.0
      %499 = vmatpush1.xpose.msra.mxu0 0.0
      %500 = vmatprep.subr.mxu0 0.0
      %501 = vmatpush1.xpose.msra.mxu0 0.0
      %502 = vmatprep.subr.mxu0 0.0
      %503 = vmatpush1.xpose.msra.mxu0 0.0
      %504 = vmatprep.subr.mxu0 0.0
      %505 = vmatpush1.xpose.msra.mxu0 0.0
      %506 = vmatprep.subr.mxu0 0.0
      %507 = vmatpush1.xpose.msra.mxu0 0.0
      %508 = vmatprep.subr.mxu0 0.0
      %509 = vmatpush1.xpose.msra.mxu0 0.0
      %510 = vmatprep.subr.mxu0 0.0
      %511 = vmatpush1.xpose.msra.mxu0 0.0
      %512 = vmatprep.subr.mxu0 0.0
      %513 = vmatpush1.xpose.msra.mxu0 0.0
      %514 = vmatprep.subr.mxu0 0.0
      %515 = vmatpush1.xpose.msra.mxu0 0.0
      %516 = vmatprep.subr.mxu0 0.0
      %517 = vmatpush1.xpose.msra.mxu0 0.0
      %518 = vmatprep.subr.mxu0 0.0
      %519 = vmatpush1.xpose.msra.mxu0 0.0
      %520 = vmatprep.subr.mxu0 0.0
      %521 = vmatpush1.xpose.msra.mxu0 0.0
      %522 = vmatprep.subr.mxu0 0.0
      %523 = vmatpush1.xpose.msra.mxu0 0.0
      %524 = vmatprep.subr.mxu0 0.0
      %525 = vmatpush1.xpose.msra.mxu0 0.0
      %526 = vmatprep.subr.mxu0 0.0
      %527 = vmatpush1.xpose.msra.mxu0 %v496
      %528 = vmatprep.subr.mxu0 0.0
      %529 = vmatpush1.xpose.msra.mxu0 %v494
      %530 = vmatprep.subr.mxu0 0.0
      %531 = vmatpush2.xpose.msra.mxu0 0.0
      %532 = vmatprep.subr.mxu0 0.0
      %533 = vmatpush2.xpose.msra.mxu0 0.0
      %534 = vmatprep.subr.mxu0 0.0
      %535 = vmatpush2.xpose.msra.mxu0 0.0
      %536 = vmatprep.subr.mxu0 0.0
      %537 = vmatpush2.xpose.msra.mxu0 0.0
      %538 = vmatprep.subr.mxu0 0.0
      %539 = vmatpush2.xpose.msra.mxu0 0.0
      %540 = vmatprep.subr.mxu0 0.0
      %541 = vmatpush2.xpose.msra.mxu0 0.0
      %542 = vmatprep.subr.mxu0 0.0
      %543 = vmatpush2.xpose.msra.mxu0 0.0
      %544 = vmatprep.subr.mxu0 0.0
      %545 = vmatpush2.xpose.msra.mxu0 0.0
      %546 = vmatprep.subr.mxu0 0.0
      %547 = vmatpush2.xpose.msra.mxu0 0.0
      %548 = vmatprep.subr.mxu0 0.0
      %549 = vmatpush2.xpose.msra.mxu0 0.0
      %550 = vmatprep.subr.mxu0 0.0
      %551 = vmatpush2.xpose.msra.mxu0 0.0
      %552 = vmatprep.subr.mxu0 0.0
      %553 = vmatpush2.xpose.msra.mxu0 0.0
      %554 = vmatprep.subr.mxu0 0.0
      %555 = vmatpush2.xpose.msra.mxu0 0.0
      %556 = vmatprep.subr.mxu0 0.0
      %557 = vmatpush2.xpose.msra.mxu0 0.0
      %558 = vmatprep.subr.mxu0 0.0
      %559 = vmatpush2.xpose.msra.mxu0 0.0
      %560 = vmatprep.subr.mxu0 0.0
      %561 = vmatpush2.xpose.msra.mxu0 0.0
      %562 = vmatprep.mubr.f32.mxu0 0.0
      %563 = vmatmul.mubr.f32.gmra.mxu0 %v489
      %v564 = vpop.f32.mrf.mxu0
      %v565 = vadd.f32 0.0, %v564
      %v566 = vpop.f32.mrf.mxu0
      %567 = vmatprep.mubr.f32.mxu0 0.0
      %568 = vmatmul.mubr.f32.gmra.mxu0 %v492
      %v569 = vpop.f32.mrf.mxu0
      %v570 = vadd.f32 0.0, %v569
      %v571 = vpop.f32.mrf.mxu0
      %572 = vdwg.mxu0
      %575 = vrot.lane.b32.xlu0 %v397, 116
      %v576 = vpop.permute.xlu0 %575
      %577 = vrot.lane.b32.xlu0 %v402, 116
      %v578 = vpop.permute.xlu0 %577
      %v580 = vsel %vm487, %v467, 0
      %v583 = vsel %vm487, %v468, 0
      %v585 = vsel %vm487, %v576, 0
      %v587 = vsel %vm487, %v578, 0
      %589 = vmatprep.subr.mxu0 0.0
      %590 = vmatpush1.xpose.msra.mxu0 0.0
      %591 = vmatprep.subr.mxu0 0.0
      %592 = vmatpush1.xpose.msra.mxu0 0.0
      %593 = vmatprep.subr.mxu0 0.0
      %594 = vmatpush1.xpose.msra.mxu0 0.0
      %595 = vmatprep.subr.mxu0 0.0
      %596 = vmatpush1.xpose.msra.mxu0 0.0
      %597 = vmatprep.subr.mxu0 0.0
      %598 = vmatpush1.xpose.msra.mxu0 0.0
      %599 = vmatprep.subr.mxu0 0.0
      %600 = vmatpush1.xpose.msra.mxu0 0.0
      %601 = vmatprep.subr.mxu0 0.0
      %602 = vmatpush1.xpose.msra.mxu0 0.0
      %603 = vmatprep.subr.mxu0 0.0
      %604 = vmatpush1.xpose.msra.mxu0 0.0
      %605 = vmatprep.subr.mxu0 0.0
      %606 = vmatpush1.xpose.msra.mxu0 0.0
      %607 = vmatprep.subr.mxu0 0.0
      %608 = vmatpush1.xpose.msra.mxu0 0.0
      %609 = vmatprep.subr.mxu0 0.0
      %610 = vmatpush1.xpose.msra.mxu0 0.0
      %611 = vmatprep.subr.mxu0 0.0
      %612 = vmatpush1.xpose.msra.mxu0 0.0
      %613 = vmatprep.subr.mxu0 0.0
      %614 = vmatpush1.xpose.msra.mxu0 0.0
      %615 = vmatprep.subr.mxu0 0.0
      %616 = vmatpush1.xpose.msra.mxu0 0.0
      %617 = vmatprep.subr.mxu0 0.0
      %618 = vmatpush1.xpose.msra.mxu0 %v587
      %619 = vmatprep.subr.mxu0 0.0
      %620 = vmatpush1.xpose.msra.mxu0 %v585
      %621 = vmatprep.subr.mxu0 0.0
      %622 = vmatpush2.xpose.msra.mxu0 0.0
      %623 = vmatprep.subr.mxu0 0.0
      %624 = vmatpush2.xpose.msra.mxu0 0.0
      %625 = vmatprep.subr.mxu0 0.0
      %626 = vmatpush2.xpose.msra.mxu0 0.0
      %627 = vmatprep.subr.mxu0 0.0
      %628 = vmatpush2.xpose.msra.mxu0 0.0
      %629 = vmatprep.subr.mxu0 0.0
      %630 = vmatpush2.xpose.msra.mxu0 0.0
      %631 = vmatprep.subr.mxu0 0.0
      %632 = vmatpush2.xpose.msra.mxu0 0.0
      %633 = vmatprep.subr.mxu0 0.0
      %634 = vmatpush2.xpose.msra.mxu0 0.0
      %635 = vmatprep.subr.mxu0 0.0
      %636 = vmatpush2.xpose.msra.mxu0 0.0
      %637 = vmatprep.subr.mxu0 0.0
      %638 = vmatpush2.xpose.msra.mxu0 0.0
      %639 = vmatprep.subr.mxu0 0.0
      %640 = vmatpush2.xpose.msra.mxu0 0.0
      %641 = vmatprep.subr.mxu0 0.0
      %642 = vmatpush2.xpose.msra.mxu0 0.0
      %643 = vmatprep.subr.mxu0 0.0
      %644 = vmatpush2.xpose.msra.mxu0 0.0
      %645 = vmatprep.subr.mxu0 0.0
      %646 = vmatpush2.xpose.msra.mxu0 0.0
      %647 = vmatprep.subr.mxu0 0.0
      %648 = vmatpush2.xpose.msra.mxu0 0.0
      %649 = vmatprep.subr.mxu0 0.0
      %650 = vmatpush2.xpose.msra.mxu0 0.0
      %651 = vmatprep.subr.mxu0 0.0
      %652 = vmatpush2.xpose.msra.mxu0 0.0
      %653 = vmatprep.mubr.f32.mxu0 0.0
      %654 = vmatmul.mubr.f32.gmra.mxu0 %v580
      %v655 = vpop.f32.mrf.mxu0
      %v656 = vadd.f32 0.0, %v655
      %v657 = vpop.f32.mrf.mxu0
      %658 = vmatprep.mubr.f32.mxu0 0.0
      %659 = vmatmul.mubr.f32.gmra.mxu0 %v583
      %v660 = vpop.f32.mrf.mxu0
      %v661 = vadd.f32 0.0, %v660
      %v662 = vpop.f32.mrf.mxu0
      %663 = vdwg.mxu0
      %666 = vrot.lane.b32.xlu0 %v407, 116
      %v667 = vpop.permute.xlu0 %666
      %668 = vrot.lane.b32.xlu0 %v412, 116
      %v669 = vpop.permute.xlu0 %668
      %v671 = vsel %vm487, %v469, 0
      %v674 = vsel %vm487, %v470, 0
      %v676 = vsel %vm487, %v667, 0
      %v678 = vsel %vm487, %v669, 0
      %680 = vmatprep.subr.mxu0 0.0
      %681 = vmatpush1.xpose.msra.mxu0 0.0
      %682 = vmatprep.subr.mxu0 0.0
      %683 = vmatpush1.xpose.msra.mxu0 0.0
      %684 = vmatprep.subr.mxu0 0.0
      %685 = vmatpush1.xpose.msra.mxu0 0.0
      %686 = vmatprep.subr.mxu0 0.0
      %687 = vmatpush1.xpose.msra.mxu0 0.0
      %688 = vmatprep.subr.mxu0 0.0
      %689 = vmatpush1.xpose.msra.mxu0 0.0
      %690 = vmatprep.subr.mxu0 0.0
      %691 = vmatpush1.xpose.msra.mxu0 0.0
      %692 = vmatprep.subr.mxu0 0.0
      %693 = vmatpush1.xpose.msra.mxu0 0.0
      %694 = vmatprep.subr.mxu0 0.0
      %695 = vmatpush1.xpose.msra.mxu0 0.0
      %696 = vmatprep.subr.mxu0 0.0
      %697 = vmatpush1.xpose.msra.mxu0 0.0
      %698 = vmatprep.subr.mxu0 0.0
      %699 = vmatpush1.xpose.msra.mxu0 0.0
      %700 = vmatprep.subr.mxu0 0.0
      %701 = vmatpush1.xpose.msra.mxu0 0.0
      %702 = vmatprep.subr.mxu0 0.0
      %703 = vmatpush1.xpose.msra.mxu0 0.0
      %704 = vmatprep.subr.mxu0 0.0
      %705 = vmatpush1.xpose.msra.mxu0 0.0
      %706 = vmatprep.subr.mxu0 0.0
      %707 = vmatpush1.xpose.msra.mxu0 0.0
      %708 = vmatprep.subr.mxu0 0.0
      %709 = vmatpush1.xpose.msra.mxu0 %v678
      %710 = vmatprep.subr.mxu0 0.0
      %711 = vmatpush1.xpose.msra.mxu0 %v676
      %712 = vmatprep.subr.mxu0 0.0
      %713 = vmatpush2.xpose.msra.mxu0 0.0
      %714 = vmatprep.subr.mxu0 0.0
      %715 = vmatpush2.xpose.msra.mxu0 0.0
      %716 = vmatprep.subr.mxu0 0.0
      %717 = vmatpush2.xpose.msra.mxu0 0.0
      %718 = vmatprep.subr.mxu0 0.0
      %719 = vmatpush2.xpose.msra.mxu0 0.0
      %720 = vmatprep.subr.mxu0 0.0
      %721 = vmatpush2.xpose.msra.mxu0 0.0
      %722 = vmatprep.subr.mxu0 0.0
      %723 = vmatpush2.xpose.msra.mxu0 0.0
      %724 = vmatprep.subr.mxu0 0.0
      %725 = vmatpush2.xpose.msra.mxu0 0.0
      %726 = vmatprep.subr.mxu0 0.0
      %727 = vmatpush2.xpose.msra.mxu0 0.0
      %728 = vmatprep.subr.mxu0 0.0
      %729 = vmatpush2.xpose.msra.mxu0 0.0
      %730 = vmatprep.subr.mxu0 0.0
      %731 = vmatpush2.xpose.msra.mxu0 0.0
      %732 = vmatprep.subr.mxu0 0.0
      %733 = vmatpush2.xpose.msra.mxu0 0.0
      %734 = vmatprep.subr.mxu0 0.0
      %735 = vmatpush2.xpose.msra.mxu0 0.0
      %736 = vmatprep.subr.mxu0 0.0
      %737 = vmatpush2.xpose.msra.mxu0 0.0
      %738 = vmatprep.subr.mxu0 0.0
      %739 = vmatpush2.xpose.msra.mxu0 0.0
      %740 = vmatprep.subr.mxu0 0.0
      %741 = vmatpush2.xpose.msra.mxu0 0.0
      %742 = vmatprep.subr.mxu0 0.0
      %743 = vmatpush2.xpose.msra.mxu0 0.0
      %744 = vmatprep.mubr.f32.mxu0 0.0
      %745 = vmatmul.mubr.f32.gmra.mxu0 %v671
      %v746 = vpop.f32.mrf.mxu0
      %v747 = vadd.f32 0.0, %v746
      %v748 = vpop.f32.mrf.mxu0
      %749 = vmatprep.mubr.f32.mxu0 0.0
      %750 = vmatmul.mubr.f32.gmra.mxu0 %v674
      %v751 = vpop.f32.mrf.mxu0
      %v752 = vadd.f32 0.0, %v751
      %v753 = vpop.f32.mrf.mxu0
      %754 = vdwg.mxu0
      %757 = vrot.lane.b32.xlu0 %v417, 116
      %v758 = vpop.permute.xlu0 %757
      %759 = vrot.lane.b32.xlu0 %v422, 116
      %v760 = vpop.permute.xlu0 %759
      %v762 = vsel %vm487, %v471, 0
      %v765 = vsel %vm487, %v472, 0
      %v767 = vsel %vm487, %v758, 0
      %v769 = vsel %vm487, %v760, 0
      %771 = vmatprep.subr.mxu0 0.0
      %772 = vmatpush1.xpose.msra.mxu0 0.0
      %773 = vmatprep.subr.mxu0 0.0
      %774 = vmatpush1.xpose.msra.mxu0 0.0
      %775 = vmatprep.subr.mxu0 0.0
      %776 = vmatpush1.xpose.msra.mxu0 0.0
      %777 = vmatprep.subr.mxu0 0.0
      %778 = vmatpush1.xpose.msra.mxu0 0.0
      %779 = vmatprep.subr.mxu0 0.0
      %780 = vmatpush1.xpose.msra.mxu0 0.0
      %781 = vmatprep.subr.mxu0 0.0
      %782 = vmatpush1.xpose.msra.mxu0 0.0
      %783 = vmatprep.subr.mxu0 0.0
      %784 = vmatpush1.xpose.msra.mxu0 0.0
      %785 = vmatprep.subr.mxu0 0.0
      %786 = vmatpush1.xpose.msra.mxu0 0.0
      %787 = vmatprep.subr.mxu0 0.0
      %788 = vmatpush1.xpose.msra.mxu0 0.0
      %789 = vmatprep.subr.mxu0 0.0
      %790 = vmatpush1.xpose.msra.mxu0 0.0
      %791 = vmatprep.subr.mxu0 0.0
      %792 = vmatpush1.xpose.msra.mxu0 0.0
      %793 = vmatprep.subr.mxu0 0.0
      %794 = vmatpush1.xpose.msra.mxu0 0.0
      %795 = vmatprep.subr.mxu0 0.0
      %796 = vmatpush1.xpose.msra.mxu0 0.0
      %797 = vmatprep.subr.mxu0 0.0
      %798 = vmatpush1.xpose.msra.mxu0 0.0
      %799 = vmatprep.subr.mxu0 0.0
      %800 = vmatpush1.xpose.msra.mxu0 %v769
      %801 = vmatprep.subr.mxu0 0.0
      %802 = vmatpush1.xpose.msra.mxu0 %v767
      %803 = vmatprep.subr.mxu0 0.0
      %804 = vmatpush2.xpose.msra.mxu0 0.0
      %805 = vmatprep.subr.mxu0 0.0
      %806 = vmatpush2.xpose.msra.mxu0 0.0
      %807 = vmatprep.subr.mxu0 0.0
      %808 = vmatpush2.xpose.msra.mxu0 0.0
      %809 = vmatprep.subr.mxu0 0.0
      %810 = vmatpush2.xpose.msra.mxu0 0.0
      %811 = vmatprep.subr.mxu0 0.0
      %812 = vmatpush2.xpose.msra.mxu0 0.0
      %813 = vmatprep.subr.mxu0 0.0
      %814 = vmatpush2.xpose.msra.mxu0 0.0
      %815 = vmatprep.subr.mxu0 0.0
      %816 = vmatpush2.xpose.msra.mxu0 0.0
      %817 = vmatprep.subr.mxu0 0.0
      %818 = vmatpush2.xpose.msra.mxu0 0.0
      %819 = vmatprep.subr.mxu0 0.0
      %820 = vmatpush2.xpose.msra.mxu0 0.0
      %821 = vmatprep.subr.mxu0 0.0
      %822 = vmatpush2.xpose.msra.mxu0 0.0
      %823 = vmatprep.subr.mxu0 0.0
      %824 = vmatpush2.xpose.msra.mxu0 0.0
      %825 = vmatprep.subr.mxu0 0.0
      %826 = vmatpush2.xpose.msra.mxu0 0.0
      %827 = vmatprep.subr.mxu0 0.0
      %828 = vmatpush2.xpose.msra.mxu0 0.0
      %829 = vmatprep.subr.mxu0 0.0
      %830 = vmatpush2.xpose.msra.mxu0 0.0
      %831 = vmatprep.subr.mxu0 0.0
      %832 = vmatpush2.xpose.msra.mxu0 0.0
      %833 = vmatprep.subr.mxu0 0.0
      %834 = vmatpush2.xpose.msra.mxu0 0.0
      %835 = vmatprep.mubr.f32.mxu0 0.0
      %836 = vmatmul.mubr.f32.gmra.mxu0 %v762
      %v837 = vpop.f32.mrf.mxu0
      %v838 = vadd.f32 0.0, %v837
      %v839 = vpop.f32.mrf.mxu0
      %840 = vmatprep.mubr.f32.mxu0 0.0
      %841 = vmatmul.mubr.f32.gmra.mxu0 %v765
      %v842 = vpop.f32.mrf.mxu0
      %v843 = vadd.f32 0.0, %v842
      %v844 = vpop.f32.mrf.mxu0
      %845 = vdwg.mxu0
      %848 = vrot.lane.b32.xlu0 %v427, 116
      %v849 = vpop.permute.xlu0 %848
      %850 = vrot.lane.b32.xlu0 %v432, 116
      %v851 = vpop.permute.xlu0 %850
      %v853 = vsel %vm487, %v473, 0
      %v856 = vsel %vm487, %v474, 0
      %v858 = vsel %vm487, %v849, 0
      %v860 = vsel %vm487, %v851, 0
      %862 = vmatprep.subr.mxu0 0.0
      %863 = vmatpush1.xpose.msra.mxu0 0.0
      %864 = vmatprep.subr.mxu0 0.0
      %865 = vmatpush1.xpose.msra.mxu0 0.0
      %866 = vmatprep.subr.mxu0 0.0
      %867 = vmatpush1.xpose.msra.mxu0 0.0
      %868 = vmatprep.subr.mxu0 0.0
      %869 = vmatpush1.xpose.msra.mxu0 0.0
      %870 = vmatprep.subr.mxu0 0.0
      %871 = vmatpush1.xpose.msra.mxu0 0.0
      %872 = vmatprep.subr.mxu0 0.0
      %873 = vmatpush1.xpose.msra.mxu0 0.0
      %874 = vmatprep.subr.mxu0 0.0
      %875 = vmatpush1.xpose.msra.mxu0 0.0
      %876 = vmatprep.subr.mxu0 0.0
      %877 = vmatpush1.xpose.msra.mxu0 0.0
      %878 = vmatprep.subr.mxu0 0.0
      %879 = vmatpush1.xpose.msra.mxu0 0.0
      %880 = vmatprep.subr.mxu0 0.0
      %881 = vmatpush1.xpose.msra.mxu0 0.0
      %882 = vmatprep.subr.mxu0 0.0
      %883 = vmatpush1.xpose.msra.mxu0 0.0
      %884 = vmatprep.subr.mxu0 0.0
      %885 = vmatpush1.xpose.msra.mxu0 0.0
      %886 = vmatprep.subr.mxu0 0.0
      %887 = vmatpush1.xpose.msra.mxu0 0.0
      %888 = vmatprep.subr.mxu0 0.0
      %889 = vmatpush1.xpose.msra.mxu0 0.0
      %890 = vmatprep.subr.mxu0 0.0
      %891 = vmatpush1.xpose.msra.mxu0 %v860
      %892 = vmatprep.subr.mxu0 0.0
      %893 = vmatpush1.xpose.msra.mxu0 %v858
      %894 = vmatprep.subr.mxu0 0.0
      %895 = vmatpush2.xpose.msra.mxu0 0.0
      %896 = vmatprep.subr.mxu0 0.0
      %897 = vmatpush2.xpose.msra.mxu0 0.0
      %898 = vmatprep.subr.mxu0 0.0
      %899 = vmatpush2.xpose.msra.mxu0 0.0
      %900 = vmatprep.subr.mxu0 0.0
      %901 = vmatpush2.xpose.msra.mxu0 0.0
      %902 = vmatprep.subr.mxu0 0.0
      %903 = vmatpush2.xpose.msra.mxu0 0.0
      %904 = vmatprep.subr.mxu0 0.0
      %905 = vmatpush2.xpose.msra.mxu0 0.0
      %906 = vmatprep.subr.mxu0 0.0
      %907 = vmatpush2.xpose.msra.mxu0 0.0
      %908 = vmatprep.subr.mxu0 0.0
      %909 = vmatpush2.xpose.msra.mxu0 0.0
      %910 = vmatprep.subr.mxu0 0.0
      %911 = vmatpush2.xpose.msra.mxu0 0.0
      %912 = vmatprep.subr.mxu0 0.0
      %913 = vmatpush2.xpose.msra.mxu0 0.0
      %914 = vmatprep.subr.mxu0 0.0
      %915 = vmatpush2.xpose.msra.mxu0 0.0
      %916 = vmatprep.subr.mxu0 0.0
      %917 = vmatpush2.xpose.msra.mxu0 0.0
      %918 = vmatprep.subr.mxu0 0.0
      %919 = vmatpush2.xpose.msra.mxu0 0.0
      %920 = vmatprep.subr.mxu0 0.0
      %921 = vmatpush2.xpose.msra.mxu0 0.0
      %922 = vmatprep.subr.mxu0 0.0
      %923 = vmatpush2.xpose.msra.mxu0 0.0
      %924 = vmatprep.subr.mxu0 0.0
      %925 = vmatpush2.xpose.msra.mxu0 0.0
      %926 = vmatprep.mubr.f32.mxu0 0.0
      %927 = vmatmul.mubr.f32.gmra.mxu0 %v853
      %v928 = vpop.f32.mrf.mxu0
      %v929 = vadd.f32 0.0, %v928
      %v930 = vpop.f32.mrf.mxu0
      %931 = vmatprep.mubr.f32.mxu0 0.0
      %932 = vmatmul.mubr.f32.gmra.mxu0 %v856
      %v933 = vpop.f32.mrf.mxu0
      %v934 = vadd.f32 0.0, %v933
      %v935 = vpop.f32.mrf.mxu0
      %936 = vdwg.mxu0
      %939 = vrot.lane.b32.xlu0 %v437, 116
      %v940 = vpop.permute.xlu0 %939
      %941 = vrot.lane.b32.xlu0 %v442, 116
      %v942 = vpop.permute.xlu0 %941
      %v944 = vsel %vm487, %v475, 0
      %v947 = vsel %vm487, %v476, 0
      %v949 = vsel %vm487, %v940, 0
      %v951 = vsel %vm487, %v942, 0
      %953 = vmatprep.subr.mxu0 0.0
      %954 = vmatpush1.xpose.msra.mxu0 0.0
      %955 = vmatprep.subr.mxu0 0.0
      %956 = vmatpush1.xpose.msra.mxu0 0.0
      %957 = vmatprep.subr.mxu0 0.0
      %958 = vmatpush1.xpose.msra.mxu0 0.0
      %959 = vmatprep.subr.mxu0 0.0
      %960 = vmatpush1.xpose.msra.mxu0 0.0
      %961 = vmatprep.subr.mxu0 0.0
      %962 = vmatpush1.xpose.msra.mxu0 0.0
      %963 = vmatprep.subr.mxu0 0.0
      %964 = vmatpush1.xpose.msra.mxu0 0.0
      %965 = vmatprep.subr.mxu0 0.0
      %966 = vmatpush1.xpose.msra.mxu0 0.0
      %967 = vmatprep.subr.mxu0 0.0
      %968 = vmatpush1.xpose.msra.mxu0 0.0
      %969 = vmatprep.subr.mxu0 0.0
      %970 = vmatpush1.xpose.msra.mxu0 0.0
      %971 = vmatprep.subr.mxu0 0.0
      %972 = vmatpush1.xpose.msra.mxu0 0.0
      %973 = vmatprep.subr.mxu0 0.0
      %974 = vmatpush1.xpose.msra.mxu0 0.0
      %975 = vmatprep.subr.mxu0 0.0
      %976 = vmatpush1.xpose.msra.mxu0 0.0
      %977 = vmatprep.subr.mxu0 0.0
      %978 = vmatpush1.xpose.msra.mxu0 0.0
      %979 = vmatprep.subr.mxu0 0.0
      %980 = vmatpush1.xpose.msra.mxu0 0.0
      %981 = vmatprep.subr.mxu0 0.0
      %982 = vmatpush1.xpose.msra.mxu0 %v951
      %983 = vmatprep.subr.mxu0 0.0
      %984 = vmatpush1.xpose.msra.mxu0 %v949
      %985 = vmatprep.subr.mxu0 0.0
      %986 = vmatpush2.xpose.msra.mxu0 0.0
      %987 = vmatprep.subr.mxu0 0.0
      %988 = vmatpush2.xpose.msra.mxu0 0.0
      %989 = vmatprep.subr.mxu0 0.0
      %990 = vmatpush2.xpose.msra.mxu0 0.0
      %991 = vmatprep.subr.mxu0 0.0
      %992 = vmatpush2.xpose.msra.mxu0 0.0
      %993 = vmatprep.subr.mxu0 0.0
      %994 = vmatpush2.xpose.msra.mxu0 0.0
      %995 = vmatprep.subr.mxu0 0.0
      %996 = vmatpush2.xpose.msra.mxu0 0.0
      %997 = vmatprep.subr.mxu0 0.0
      %998 = vmatpush2.xpose.msra.mxu0 0.0
      %999 = vmatprep.subr.mxu0 0.0
      %1000 = vmatpush2.xpose.msra.mxu0 0.0
      %1001 = vmatprep.subr.mxu0 0.0
      %1002 = vmatpush2.xpose.msra.mxu0 0.0
      %1003 = vmatprep.subr.mxu0 0.0
      %1004 = vmatpush2.xpose.msra.mxu0 0.0
      %1005 = vmatprep.subr.mxu0 0.0
      %1006 = vmatpush2.xpose.msra.mxu0 0.0
      %1007 = vmatprep.subr.mxu0 0.0
      %1008 = vmatpush2.xpose.msra.mxu0 0.0
      %1009 = vmatprep.subr.mxu0 0.0
      %1010 = vmatpush2.xpose.msra.mxu0 0.0
      %1011 = vmatprep.subr.mxu0 0.0
      %1012 = vmatpush2.xpose.msra.mxu0 0.0
      %1013 = vmatprep.subr.mxu0 0.0
      %1014 = vmatpush2.xpose.msra.mxu0 0.0
      %1015 = vmatprep.subr.mxu0 0.0
      %1016 = vmatpush2.xpose.msra.mxu0 0.0
      %1017 = vmatprep.mubr.f32.mxu0 0.0
      %1018 = vmatmul.mubr.f32.gmra.mxu0 %v944
      %v1019 = vpop.f32.mrf.mxu0
      %v1020 = vadd.f32 0.0, %v1019
      %v1021 = vpop.f32.mrf.mxu0
      %1022 = vmatprep.mubr.f32.mxu0 0.0
      %1023 = vmatmul.mubr.f32.gmra.mxu0 %v947
      %v1024 = vpop.f32.mrf.mxu0
      %v1025 = vadd.f32 0.0, %v1024
      %v1026 = vpop.f32.mrf.mxu0
      %1027 = vdwg.mxu0
      %1030 = vrot.lane.b32.xlu0 %v447, 116
      %v1031 = vpop.permute.xlu0 %1030
      %1032 = vrot.lane.b32.xlu0 %v452, 116
      %v1033 = vpop.permute.xlu0 %1032
      %v1035 = vsel %vm487, %v477, 0
      %v1038 = vsel %vm487, %v478, 0
      %v1040 = vsel %vm487, %v1031, 0
      %v1042 = vsel %vm487, %v1033, 0
      %1044 = vmatprep.subr.mxu0 0.0
      %1045 = vmatpush1.xpose.msra.mxu0 0.0
      %1046 = vmatprep.subr.mxu0 0.0
      %1047 = vmatpush1.xpose.msra.mxu0 0.0
      %1048 = vmatprep.subr.mxu0 0.0
      %1049 = vmatpush1.xpose.msra.mxu0 0.0
      %1050 = vmatprep.subr.mxu0 0.0
      %1051 = vmatpush1.xpose.msra.mxu0 0.0
      %1052 = vmatprep.subr.mxu0 0.0
      %1053 = vmatpush1.xpose.msra.mxu0 0.0
      %1054 = vmatprep.subr.mxu0 0.0
      %1055 = vmatpush1.xpose.msra.mxu0 0.0
      %1056 = vmatprep.subr.mxu0 0.0
      %1057 = vmatpush1.xpose.msra.mxu0 0.0
      %1058 = vmatprep.subr.mxu0 0.0
      %1059 = vmatpush1.xpose.msra.mxu0 0.0
      %1060 = vmatprep.subr.mxu0 0.0
      %1061 = vmatpush1.xpose.msra.mxu0 0.0
      %1062 = vmatprep.subr.mxu0 0.0
      %1063 = vmatpush1.xpose.msra.mxu0 0.0
      %1064 = vmatprep.subr.mxu0 0.0
      %1065 = vmatpush1.xpose.msra.mxu0 0.0
      %1066 = vmatprep.subr.mxu0 0.0
      %1067 = vmatpush1.xpose.msra.mxu0 0.0
      %1068 = vmatprep.subr.mxu0 0.0
      %1069 = vmatpush1.xpose.msra.mxu0 0.0
      %1070 = vmatprep.subr.mxu0 0.0
      %1071 = vmatpush1.xpose.msra.mxu0 0.0
      %1072 = vmatprep.subr.mxu0 0.0
      %1073 = vmatpush1.xpose.msra.mxu0 %v1042
      %1074 = vmatprep.subr.mxu0 0.0
      %1075 = vmatpush1.xpose.msra.mxu0 %v1040
      %1076 = vmatprep.subr.mxu0 0.0
      %1077 = vmatpush2.xpose.msra.mxu0 0.0
      %1078 = vmatprep.subr.mxu0 0.0
      %1079 = vmatpush2.xpose.msra.mxu0 0.0
      %1080 = vmatprep.subr.mxu0 0.0
      %1081 = vmatpush2.xpose.msra.mxu0 0.0
      %1082 = vmatprep.subr.mxu0 0.0
      %1083 = vmatpush2.xpose.msra.mxu0 0.0
      %1084 = vmatprep.subr.mxu0 0.0
      %1085 = vmatpush2.xpose.msra.mxu0 0.0
      %1086 = vmatprep.subr.mxu0 0.0
      %1087 = vmatpush2.xpose.msra.mxu0 0.0
      %1088 = vmatprep.subr.mxu0 0.0
      %1089 = vmatpush2.xpose.msra.mxu0 0.0
      %1090 = vmatprep.subr.mxu0 0.0
      %1091 = vmatpush2.xpose.msra.mxu0 0.0
      %1092 = vmatprep.subr.mxu0 0.0
      %1093 = vmatpush2.xpose.msra.mxu0 0.0
      %1094 = vmatprep.subr.mxu0 0.0
      %1095 = vmatpush2.xpose.msra.mxu0 0.0
      %1096 = vmatprep.subr.mxu0 0.0
      %1097 = vmatpush2.xpose.msra.mxu0 0.0
      %1098 = vmatprep.subr.mxu0 0.0
      %1099 = vmatpush2.xpose.msra.mxu0 0.0
      %1100 = vmatprep.subr.mxu0 0.0
      %1101 = vmatpush2.xpose.msra.mxu0 0.0
      %1102 = vmatprep.subr.mxu0 0.0
      %1103 = vmatpush2.xpose.msra.mxu0 0.0
      %1104 = vmatprep.subr.mxu0 0.0
      %1105 = vmatpush2.xpose.msra.mxu0 0.0
      %1106 = vmatprep.subr.mxu0 0.0
      %1107 = vmatpush2.xpose.msra.mxu0 0.0
      %1108 = vmatprep.mubr.f32.mxu0 0.0
      %1109 = vmatmul.mubr.f32.gmra.mxu0 %v1035
      %v1110 = vpop.f32.mrf.mxu0
      %v1111 = vadd.f32 0.0, %v1110
      %v1112 = vpop.f32.mrf.mxu0
      %1113 = vmatprep.mubr.f32.mxu0 0.0
      %1114 = vmatmul.mubr.f32.gmra.mxu0 %v1038
      %v1115 = vpop.f32.mrf.mxu0
      %v1116 = vadd.f32 0.0, %v1115
      %v1117 = vpop.f32.mrf.mxu0
      %1118 = vdwg.mxu0
      %1121 = vrot.lane.b32.xlu0 %v457, 116
      %v1122 = vpop.permute.xlu0 %1121
      %1123 = vrot.lane.b32.xlu0 %v462, 116
      %v1124 = vpop.permute.xlu0 %1123
      %v1126 = vsel %vm487, %v479, 0
      %v1129 = vsel %vm487, %v480, 0
      %v1131 = vsel %vm487, %v1122, 0
      %v1133 = vsel %vm487, %v1124, 0
      %1135 = vmatprep.subr.mxu0 0.0
      %1136 = vmatpush1.xpose.msra.mxu0 0.0
      %1137 = vmatprep.subr.mxu0 0.0
      %1138 = vmatpush1.xpose.msra.mxu0 0.0
      %1139 = vmatprep.subr.mxu0 0.0
      %1140 = vmatpush1.xpose.msra.mxu0 0.0
      %1141 = vmatprep.subr.mxu0 0.0
      %1142 = vmatpush1.xpose.msra.mxu0 0.0
      %1143 = vmatprep.subr.mxu0 0.0
      %1144 = vmatpush1.xpose.msra.mxu0 0.0
      %1145 = vmatprep.subr.mxu0 0.0
      %1146 = vmatpush1.xpose.msra.mxu0 0.0
      %1147 = vmatprep.subr.mxu0 0.0
      %1148 = vmatpush1.xpose.msra.mxu0 0.0
      %1149 = vmatprep.subr.mxu0 0.0
      %1150 = vmatpush1.xpose.msra.mxu0 0.0
      %1151 = vmatprep.subr.mxu0 0.0
      %1152 = vmatpush1.xpose.msra.mxu0 0.0
      %1153 = vmatprep.subr.mxu0 0.0
      %1154 = vmatpush1.xpose.msra.mxu0 0.0
      %1155 = vmatprep.subr.mxu0 0.0
      %1156 = vmatpush1.xpose.msra.mxu0 0.0
      %1157 = vmatprep.subr.mxu0 0.0
      %1158 = vmatpush1.xpose.msra.mxu0 0.0
      %1159 = vmatprep.subr.mxu0 0.0
      %1160 = vmatpush1.xpose.msra.mxu0 0.0
      %1161 = vmatprep.subr.mxu0 0.0
      %1162 = vmatpush1.xpose.msra.mxu0 0.0
      %1163 = vmatprep.subr.mxu0 0.0
      %1164 = vmatpush1.xpose.msra.mxu0 %v1133
      %1165 = vmatprep.subr.mxu0 0.0
      %1166 = vmatpush1.xpose.msra.mxu0 %v1131
      %1167 = vmatprep.subr.mxu0 0.0
      %1168 = vmatpush2.xpose.msra.mxu0 0.0
      %1169 = vmatprep.subr.mxu0 0.0
      %1170 = vmatpush2.xpose.msra.mxu0 0.0
      %1171 = vmatprep.subr.mxu0 0.0
      %1172 = vmatpush2.xpose.msra.mxu0 0.0
      %1173 = vmatprep.subr.mxu0 0.0
      %1174 = vmatpush2.xpose.msra.mxu0 0.0
      %1175 = vmatprep.subr.mxu0 0.0
      %1176 = vmatpush2.xpose.msra.mxu0 0.0
      %1177 = vmatprep.subr.mxu0 0.0
      %1178 = vmatpush2.xpose.msra.mxu0 0.0
      %1179 = vmatprep.subr.mxu0 0.0
      %1180 = vmatpush2.xpose.msra.mxu0 0.0
      %1181 = vmatprep.subr.mxu0 0.0
      %1182 = vmatpush2.xpose.msra.mxu0 0.0
      %1183 = vmatprep.subr.mxu0 0.0
      %1184 = vmatpush2.xpose.msra.mxu0 0.0
      %1185 = vmatprep.subr.mxu0 0.0
      %1186 = vmatpush2.xpose.msra.mxu0 0.0
      %1187 = vmatprep.subr.mxu0 0.0
      %1188 = vmatpush2.xpose.msra.mxu0 0.0
      %1189 = vmatprep.subr.mxu0 0.0
      %1190 = vmatpush2.xpose.msra.mxu0 0.0
      %1191 = vmatprep.subr.mxu0 0.0
      %1192 = vmatpush2.xpose.msra.mxu0 0.0
      %1193 = vmatprep.subr.mxu0 0.0
      %1194 = vmatpush2.xpose.msra.mxu0 0.0
      %1195 = vmatprep.subr.mxu0 0.0
      %1196 = vmatpush2.xpose.msra.mxu0 0.0
      %1197 = vmatprep.subr.mxu0 0.0
      %1198 = vmatpush2.xpose.msra.mxu0 0.0
      %1199 = vmatprep.mubr.f32.mxu0 0.0
      %1200 = vmatmul.mubr.f32.gmra.mxu0 %v1126
      %v1201 = vpop.f32.mrf.mxu0
      %v1202 = vadd.f32 0.0, %v1201
      %v1203 = vpop.f32.mrf.mxu0
      %1204 = vmatprep.mubr.f32.mxu0 0.0
      %1205 = vmatmul.mubr.f32.gmra.mxu0 %v1129
      %v1206 = vpop.f32.mrf.mxu0
      %v1207 = vadd.f32 0.0, %v1206
      %v1208 = vpop.f32.mrf.mxu0
      %1209 = vdwg.mxu0
      %vm1210 = vcmask 130048
      %v1211 = vsel %vm1210, %v565, -inf
      %1212 = vmax.xlane.f32.xlu0 %v1211
      %v1213 = vpop.xlane.xlu0 %1212
      %v1214 = vsel %vm1210, %v570, -inf
      %1215 = vmax.xlane.f32.xlu0 %v1214
      %v1216 = vpop.xlane.xlu0 %1215
      %v1217 = vsel %vm1210, %v656, -inf
      %1218 = vmax.xlane.f32.xlu0 %v1217
      %v1219 = vpop.xlane.xlu0 %1218
      %v1220 = vsel %vm1210, %v661, -inf
      %1221 = vmax.xlane.f32.xlu0 %v1220
      %v1222 = vpop.xlane.xlu0 %1221
      %v1223 = vsel %vm1210, %v747, -inf
      %1224 = vmax.xlane.f32.xlu0 %v1223
      %v1225 = vpop.xlane.xlu0 %1224
      %v1226 = vsel %vm1210, %v752, -inf
      %1227 = vmax.xlane.f32.xlu0 %v1226
      %v1228 = vpop.xlane.xlu0 %1227
      %v1229 = vsel %vm1210, %v838, -inf
      %1230 = vmax.xlane.f32.xlu0 %v1229
      %v1231 = vpop.xlane.xlu0 %1230
      %v1232 = vsel %vm1210, %v843, -inf
      %1233 = vmax.xlane.f32.xlu0 %v1232
      %v1234 = vpop.xlane.xlu0 %1233
      %v1235 = vsel %vm1210, %v929, -inf
      %1236 = vmax.xlane.f32.xlu0 %v1235
      %v1237 = vpop.xlane.xlu0 %1236
      %v1238 = vsel %vm1210, %v934, -inf
      %1239 = vmax.xlane.f32.xlu0 %v1238
      %v1240 = vpop.xlane.xlu0 %1239
      %v1241 = vsel %vm1210, %v1020, -inf
      %1242 = vmax.xlane.f32.xlu0 %v1241
      %v1243 = vpop.xlane.xlu0 %1242
      %v1244 = vsel %vm1210, %v1025, -inf
      %1245 = vmax.xlane.f32.xlu0 %v1244
      %v1246 = vpop.xlane.xlu0 %1245
      %v1247 = vsel %vm1210, %v1111, -inf
      %1248 = vmax.xlane.f32.xlu0 %v1247
      %v1249 = vpop.xlane.xlu0 %1248
      %v1250 = vsel %vm1210, %v1116, -inf
      %1251 = vmax.xlane.f32.xlu0 %v1250
      %v1252 = vpop.xlane.xlu0 %1251
      %v1253 = vsel %vm1210, %v1202, -inf
      %1254 = vmax.xlane.f32.xlu0 %v1253
      %v1255 = vpop.xlane.xlu0 %1254
      %v1256 = vsel %vm1210, %v1207, -inf
      %1257 = vmax.xlane.f32.xlu0 %v1256
      %v1258 = vpop.xlane.xlu0 %1257
      %v1259 = vsub.f32 %v565, %v1213
      %v1260 = vsub.f32 %v570, %v1216
      %v1261 = vsub.f32 %v656, %v1219
      %v1262 = vsub.f32 %v661, %v1222
      %v1263 = vsub.f32 %v747, %v1225
      %v1264 = vsub.f32 %v752, %v1228
      %v1265 = vsub.f32 %v838, %v1231
      %v1266 = vsub.f32 %v843, %v1234
      %v1267 = vsub.f32 %v929, %v1237
      %v1268 = vsub.f32 %v934, %v1240
      %v1269 = vsub.f32 %v1020, %v1243
      %v1270 = vsub.f32 %v1025, %v1246
      %v1271 = vsub.f32 %v1111, %v1249
      %v1272 = vsub.f32 %v1116, %v1252
      %v1273 = vsub.f32 %v1202, %v1255
      %v1274 = vsub.f32 %v1207, %v1258
      %v1275 = vmul.f32 %v1259, 1.442695
      %v1276 = vpow.pop %v1275
      %v1277 = vmul.f32 %v1260, 1.442695
      %v1278 = vpow.pop %v1277
      %v1279 = vmul.f32 %v1261, 1.442695
      %v1280 = vpow.pop %v1279
      %v1281 = vmul.f32 %v1262, 1.442695
      %v1282 = vpow.pop %v1281
      %v1283 = vmul.f32 %v1263, 1.442695
      %v1284 = vpow.pop %v1283
      %v1285 = vmul.f32 %v1264, 1.442695
      %v1286 = vpow.pop %v1285
      %v1287 = vmul.f32 %v1265, 1.442695
      %v1288 = vpow.pop %v1287
      %v1289 = vmul.f32 %v1266, 1.442695
      %v1290 = vpow.pop %v1289
      %v1291 = vmul.f32 %v1267, 1.442695
      %v1292 = vpow.pop %v1291
      %v1293 = vmul.f32 %v1268, 1.442695
      %v1294 = vpow.pop %v1293
      %v1295 = vmul.f32 %v1269, 1.442695
      %v1296 = vpow.pop %v1295
      %v1297 = vmul.f32 %v1270, 1.442695
      %v1298 = vpow.pop %v1297
      %v1299 = vmul.f32 %v1271, 1.442695
      %v1300 = vpow.pop %v1299
      %v1301 = vmul.f32 %v1272, 1.442695
      %v1302 = vpow.pop %v1301
      %v1303 = vmul.f32 %v1273, 1.442695
      %v1304 = vpow.pop %v1303
      %v1305 = vmul.f32 %v1274, 1.442695
      %v1306 = vpow.pop %v1305
      %v1307 = vsel %vm1210, %v1276, 0.0
      %1308 = vadd.xlane.f32.xlu0 %v1307
      %v1309 = vpop.xlane.xlu0 %1308
      %v1310 = vsel %vm1210, %v1278, 0.0
      %1311 = vadd.xlane.f32.xlu0 %v1310
      %v1312 = vpop.xlane.xlu0 %1311
      %v1313 = vsel %vm1210, %v1280, 0.0
      %1314 = vadd.xlane.f32.xlu0 %v1313
      %v1315 = vpop.xlane.xlu0 %1314
      %v1316 = vsel %vm1210, %v1282, 0.0
      %1317 = vadd.xlane.f32.xlu0 %v1316
      %v1318 = vpop.xlane.xlu0 %1317
      %v1319 = vsel %vm1210, %v1284, 0.0
      %1320 = vadd.xlane.f32.xlu0 %v1319
      %v1321 = vpop.xlane.xlu0 %1320
      %v1322 = vsel %vm1210, %v1286, 0.0
      %1323 = vadd.xlane.f32.xlu0 %v1322
      %v1324 = vpop.xlane.xlu0 %1323
      %v1325 = vsel %vm1210, %v1288, 0.0
      %1326 = vadd.xlane.f32.xlu0 %v1325
      %v1327 = vpop.xlane.xlu0 %1326
      %v1328 = vsel %vm1210, %v1290, 0.0
      %1329 = vadd.xlane.f32.xlu0 %v1328
      %v1330 = vpop.xlane.xlu0 %1329
      %v1331 = vsel %vm1210, %v1292, 0.0
      %1332 = vadd.xlane.f32.xlu0 %v1331
      %v1333 = vpop.xlane.xlu0 %1332
      %v1334 = vsel %vm1210, %v1294, 0.0
      %1335 = vadd.xlane.f32.xlu0 %v1334
      %v1336 = vpop.xlane.xlu0 %1335
      %v1337 = vsel %vm1210, %v1296, 0.0
      %1338 = vadd.xlane.f32.xlu0 %v1337
      %v1339 = vpop.xlane.xlu0 %1338
      %v1340 = vsel %vm1210, %v1298, 0.0
      %1341 = vadd.xlane.f32.xlu0 %v1340
      %v1342 = vpop.xlane.xlu0 %1341
      %v1343 = vsel %vm1210, %v1300, 0.0
      %1344 = vadd.xlane.f32.xlu0 %v1343
      %v1345 = vpop.xlane.xlu0 %1344
      %v1346 = vsel %vm1210, %v1302, 0.0
      %1347 = vadd.xlane.f32.xlu0 %v1346
      %v1348 = vpop.xlane.xlu0 %1347
      %v1349 = vsel %vm1210, %v1304, 0.0
      %1350 = vadd.xlane.f32.xlu0 %v1349
      %v1351 = vpop.xlane.xlu0 %1350
      %v1352 = vsel %vm1210, %v1306, 0.0
      %1353 = vadd.xlane.f32.xlu0 %v1352
      %v1354 = vpop.xlane.xlu0 %1353
      %v1355 = vrcp.pop %v1309
      %v1356 = vrcp.pop %v1312
      %v1357 = vrcp.pop %v1315
      %v1358 = vrcp.pop %v1318
      %v1359 = vrcp.pop %v1321
      %v1360 = vrcp.pop %v1324
      %v1361 = vrcp.pop %v1327
      %v1362 = vrcp.pop %v1330
      %v1363 = vrcp.pop %v1333
      %v1364 = vrcp.pop %v1336
      %v1365 = vrcp.pop %v1339
      %v1366 = vrcp.pop %v1342
      %v1367 = vrcp.pop %v1345
      %v1368 = vrcp.pop %v1348
      %v1369 = vrcp.pop %v1351
      %v1370 = vrcp.pop %v1354
      %v1371 = vmul.f32 %v1276, %v1355
      %v1372 = vmul.f32 %v1278, %v1356
      %v1373 = vmul.f32 %v1280, %v1357
      %v1374 = vmul.f32 %v1282, %v1358
      %v1375 = vmul.f32 %v1284, %v1359
      %v1376 = vmul.f32 %v1286, %v1360
      %v1377 = vmul.f32 %v1288, %v1361
      %v1378 = vmul.f32 %v1290, %v1362
      %v1379 = vmul.f32 %v1292, %v1363
      %v1380 = vmul.f32 %v1294, %v1364
      %v1381 = vmul.f32 %v1296, %v1365
      %v1382 = vmul.f32 %v1298, %v1366
      %v1383 = vmul.f32 %v1300, %v1367
      %v1384 = vmul.f32 %v1302, %v1368
      %v1385 = vmul.f32 %v1304, %v1369
      %v1386 = vmul.f32 %v1306, %v1370
      %1387 = vrot.lane.b32.xlu0 %v387, 104
      %v1388 = vpop.permute.xlu0 %1387
      %1389 = vrot.lane.b32.xlu0 %v392, 104
      %v1390 = vpop.permute.xlu0 %1389
      %v1394 = vsel %vm1210, %v1371, 0
      %v1397 = vsel %vm1210, %v1372, 0
      %1399 = vmatprep.subr.mxu0 0.0
      %1400 = vmatpush1.msra.mxu0 0.0
      %1401 = vmatprep.subr.mxu0 0.0
      %1402 = vmatpush1.msra.mxu0 0.0
      %1403 = vmatprep.subr.mxu0 0.0
      %1404 = vmatpush1.msra.mxu0 0.0
      %1405 = vmatprep.subr.mxu0 0.0
      %1406 = vmatpush1.msra.mxu0 0.0
      %1407 = vmatprep.subr.mxu0 0.0
      %1408 = vmatpush1.msra.mxu0 0.0
      %1409 = vmatprep.subr.mxu0 0.0
      %1410 = vmatpush1.msra.mxu0 0.0
      %1411 = vmatprep.subr.mxu0 0.0
      %1412 = vmatpush1.msra.mxu0 0.0
      %1413 = vmatprep.subr.mxu0 0.0
      %1414 = vmatpush1.msra.mxu0 0.0
      %1415 = vmatprep.subr.mxu0 0.0
      %1416 = vmatpush1.msra.mxu0 0.0
      %1417 = vmatprep.subr.mxu0 0.0
      %1418 = vmatpush1.msra.mxu0 0.0
      %1419 = vmatprep.subr.mxu0 0.0
      %1420 = vmatpush1.msra.mxu0 0.0
      %1421 = vmatprep.subr.mxu0 0.0
      %1422 = vmatpush1.msra.mxu0 0.0
      %1423 = vmatprep.subr.mxu0 0.0
      %1424 = vmatpush1.msra.mxu0 0.0
      %1425 = vmatprep.subr.mxu0 0.0
      %1426 = vmatpush1.msra.mxu0 0.0
      %1427 = vmatprep.subr.mxu0 0.0
      %1428 = vmatpush1.msra.mxu0 %v1390
      %1429 = vmatprep.subr.mxu0 0.0
      %1430 = vmatpush1.msra.mxu0 %v1388
      %1431 = vmatprep.subr.mxu0 0.0
      %1432 = vmatpush2.msra.mxu0 0.0
      %1433 = vmatprep.subr.mxu0 0.0
      %1434 = vmatpush2.msra.mxu0 0.0
      %1435 = vmatprep.subr.mxu0 0.0
      %1436 = vmatpush2.msra.mxu0 0.0
      %1437 = vmatprep.subr.mxu0 0.0
      %1438 = vmatpush2.msra.mxu0 0.0
      %1439 = vmatprep.subr.mxu0 0.0
      %1440 = vmatpush2.msra.mxu0 0.0
      %1441 = vmatprep.subr.mxu0 0.0
      %1442 = vmatpush2.msra.mxu0 0.0
      %1443 = vmatprep.subr.mxu0 0.0
      %1444 = vmatpush2.msra.mxu0 0.0
      %1445 = vmatprep.subr.mxu0 0.0
      %1446 = vmatpush2.msra.mxu0 0.0
      %1447 = vmatprep.subr.mxu0 0.0
      %1448 = vmatpush2.msra.mxu0 0.0
      %1449 = vmatprep.subr.mxu0 0.0
      %1450 = vmatpush2.msra.mxu0 0.0
      %1451 = vmatprep.subr.mxu0 0.0
      %1452 = vmatpush2.msra.mxu0 0.0
      %1453 = vmatprep.subr.mxu0 0.0
      %1454 = vmatpush2.msra.mxu0 0.0
      %1455 = vmatprep.subr.mxu0 0.0
      %1456 = vmatpush2.msra.mxu0 0.0
      %1457 = vmatprep.subr.mxu0 0.0
      %1458 = vmatpush2.msra.mxu0 0.0
      %1459 = vmatprep.subr.mxu0 0.0
      %1460 = vmatpush2.msra.mxu0 0.0
      %1461 = vmatprep.subr.mxu0 0.0
      %1462 = vmatpush2.msra.mxu0 0.0
      %1463 = vmatprep.mubr.f32.mxu0 0.0
      %1464 = vmatmul.mubr.f32.gmra.mxu0 %v1394
      %v1465 = vpop.f32.mrf.mxu0
      %v1466 = vadd.f32 0.0, %v1465
      %v1467 = vpop.f32.mrf.mxu0
      %1468 = vmatprep.mubr.f32.mxu0 0.0
      %1469 = vmatmul.mubr.f32.gmra.mxu0 %v1397
      %v1470 = vpop.f32.mrf.mxu0
      %v1471 = vadd.f32 0.0, %v1470
      %v1472 = vpop.f32.mrf.mxu0
      %1473 = vdwg.mxu0
      %1474 = vrot.lane.b32.xlu0 %v397, 104
      %v1475 = vpop.permute.xlu0 %1474
      %1476 = vrot.lane.b32.xlu0 %v402, 104
      %v1477 = vpop.permute.xlu0 %1476
      %v1481 = vsel %vm1210, %v1373, 0
      %v1484 = vsel %vm1210, %v1374, 0
      %1486 = vmatprep.subr.mxu0 0.0
      %1487 = vmatpush1.msra.mxu0 0.0
      %1488 = vmatprep.subr.mxu0 0.0
      %1489 = vmatpush1.msra.mxu0 0.0
      %1490 = vmatprep.subr.mxu0 0.0
      %1491 = vmatpush1.msra.mxu0 0.0
      %1492 = vmatprep.subr.mxu0 0.0
      %1493 = vmatpush1.msra.mxu0 0.0
      %1494 = vmatprep.subr.mxu0 0.0
      %1495 = vmatpush1.msra.mxu0 0.0
      %1496 = vmatprep.subr.mxu0 0.0
      %1497 = vmatpush1.msra.mxu0 0.0
      %1498 = vmatprep.subr.mxu0 0.0
      %1499 = vmatpush1.msra.mxu0 0.0
      %1500 = vmatprep.subr.mxu0 0.0
      %1501 = vmatpush1.msra.mxu0 0.0
      %1502 = vmatprep.subr.mxu0 0.0
      %1503 = vmatpush1.msra.mxu0 0.0
      %1504 = vmatprep.subr.mxu0 0.0
      %1505 = vmatpush1.msra.mxu0 0.0
      %1506 = vmatprep.subr.mxu0 0.0
      %1507 = vmatpush1.msra.mxu0 0.0
      %1508 = vmatprep.subr.mxu0 0.0
      %1509 = vmatpush1.msra.mxu0 0.0
      %1510 = vmatprep.subr.mxu0 0.0
      %1511 = vmatpush1.msra.mxu0 0.0
      %1512 = vmatprep.subr.mxu0 0.0
      %1513 = vmatpush1.msra.mxu0 0.0
      %1514 = vmatprep.subr.mxu0 0.0
      %1515 = vmatpush1.msra.mxu0 %v1477
      %1516 = vmatprep.subr.mxu0 0.0
      %1517 = vmatpush1.msra.mxu0 %v1475
      %1518 = vmatprep.subr.mxu0 0.0
      %1519 = vmatpush2.msra.mxu0 0.0
      %1520 = vmatprep.subr.mxu0 0.0
      %1521 = vmatpush2.msra.mxu0 0.0
      %1522 = vmatprep.subr.mxu0 0.0
      %1523 = vmatpush2.msra.mxu0 0.0
      %1524 = vmatprep.subr.mxu0 0.0
      %1525 = vmatpush2.msra.mxu0 0.0
      %1526 = vmatprep.subr.mxu0 0.0
      %1527 = vmatpush2.msra.mxu0 0.0
      %1528 = vmatprep.subr.mxu0 0.0
      %1529 = vmatpush2.msra.mxu0 0.0
      %1530 = vmatprep.subr.mxu0 0.0
      %1531 = vmatpush2.msra.mxu0 0.0
      %1532 = vmatprep.subr.mxu0 0.0
      %1533 = vmatpush2.msra.mxu0 0.0
      %1534 = vmatprep.subr.mxu0 0.0
      %1535 = vmatpush2.msra.mxu0 0.0
      %1536 = vmatprep.subr.mxu0 0.0
      %1537 = vmatpush2.msra.mxu0 0.0
      %1538 = vmatprep.subr.mxu0 0.0
      %1539 = vmatpush2.msra.mxu0 0.0
      %1540 = vmatprep.subr.mxu0 0.0
      %1541 = vmatpush2.msra.mxu0 0.0
      %1542 = vmatprep.subr.mxu0 0.0
      %1543 = vmatpush2.msra.mxu0 0.0
      %1544 = vmatprep.subr.mxu0 0.0
      %1545 = vmatpush2.msra.mxu0 0.0
      %1546 = vmatprep.subr.mxu0 0.0
      %1547 = vmatpush2.msra.mxu0 0.0
      %1548 = vmatprep.subr.mxu0 0.0
      %1549 = vmatpush2.msra.mxu0 0.0
      %1550 = vmatprep.mubr.f32.mxu0 0.0
      %1551 = vmatmul.mubr.f32.gmra.mxu0 %v1481
      %v1552 = vpop.f32.mrf.mxu0
      %v1553 = vadd.f32 0.0, %v1552
      %v1554 = vpop.f32.mrf.mxu0
      %1555 = vmatprep.mubr.f32.mxu0 0.0
      %1556 = vmatmul.mubr.f32.gmra.mxu0 %v1484
      %v1557 = vpop.f32.mrf.mxu0
      %v1558 = vadd.f32 0.0, %v1557
      %v1559 = vpop.f32.mrf.mxu0
      %1560 = vdwg.mxu0
      %1561 = vrot.lane.b32.xlu0 %v407, 104
      %v1562 = vpop.permute.xlu0 %1561
      %1563 = vrot.lane.b32.xlu0 %v412, 104
      %v1564 = vpop.permute.xlu0 %1563
      %v1568 = vsel %vm1210, %v1375, 0
      %v1571 = vsel %vm1210, %v1376, 0
      %1573 = vmatprep.subr.mxu0 0.0
      %1574 = vmatpush1.msra.mxu0 0.0
      %1575 = vmatprep.subr.mxu0 0.0
      %1576 = vmatpush1.msra.mxu0 0.0
      %1577 = vmatprep.subr.mxu0 0.0
      %1578 = vmatpush1.msra.mxu0 0.0
      %1579 = vmatprep.subr.mxu0 0.0
      %1580 = vmatpush1.msra.mxu0 0.0
      %1581 = vmatprep.subr.mxu0 0.0
      %1582 = vmatpush1.msra.mxu0 0.0
      %1583 = vmatprep.subr.mxu0 0.0
      %1584 = vmatpush1.msra.mxu0 0.0
      %1585 = vmatprep.subr.mxu0 0.0
      %1586 = vmatpush1.msra.mxu0 0.0
      %1587 = vmatprep.subr.mxu0 0.0
      %1588 = vmatpush1.msra.mxu0 0.0
      %1589 = vmatprep.subr.mxu0 0.0
      %1590 = vmatpush1.msra.mxu0 0.0
      %1591 = vmatprep.subr.mxu0 0.0
      %1592 = vmatpush1.msra.mxu0 0.0
      %1593 = vmatprep.subr.mxu0 0.0
      %1594 = vmatpush1.msra.mxu0 0.0
      %1595 = vmatprep.subr.mxu0 0.0
      %1596 = vmatpush1.msra.mxu0 0.0
      %1597 = vmatprep.subr.mxu0 0.0
      %1598 = vmatpush1.msra.mxu0 0.0
      %1599 = vmatprep.subr.mxu0 0.0
      %1600 = vmatpush1.msra.mxu0 0.0
      %1601 = vmatprep.subr.mxu0 0.0
      %1602 = vmatpush1.msra.mxu0 %v1564
      %1603 = vmatprep.subr.mxu0 0.0
      %1604 = vmatpush1.msra.mxu0 %v1562
      %1605 = vmatprep.subr.mxu0 0.0
      %1606 = vmatpush2.msra.mxu0 0.0
      %1607 = vmatprep.subr.mxu0 0.0
      %1608 = vmatpush2.msra.mxu0 0.0
      %1609 = vmatprep.subr.mxu0 0.0
      %1610 = vmatpush2.msra.mxu0 0.0
      %1611 = vmatprep.subr.mxu0 0.0
      %1612 = vmatpush2.msra.mxu0 0.0
      %1613 = vmatprep.subr.mxu0 0.0
      %1614 = vmatpush2.msra.mxu0 0.0
      %1615 = vmatprep.subr.mxu0 0.0
      %1616 = vmatpush2.msra.mxu0 0.0
      %1617 = vmatprep.subr.mxu0 0.0
      %1618 = vmatpush2.msra.mxu0 0.0
      %1619 = vmatprep.subr.mxu0 0.0
      %1620 = vmatpush2.msra.mxu0 0.0
      %1621 = vmatprep.subr.mxu0 0.0
      %1622 = vmatpush2.msra.mxu0 0.0
      %1623 = vmatprep.subr.mxu0 0.0
      %1624 = vmatpush2.msra.mxu0 0.0
      %1625 = vmatprep.subr.mxu0 0.0
      %1626 = vmatpush2.msra.mxu0 0.0
      %1627 = vmatprep.subr.mxu0 0.0
      %1628 = vmatpush2.msra.mxu0 0.0
      %1629 = vmatprep.subr.mxu0 0.0
      %1630 = vmatpush2.msra.mxu0 0.0
      %1631 = vmatprep.subr.mxu0 0.0
      %1632 = vmatpush2.msra.mxu0 0.0
      %1633 = vmatprep.subr.mxu0 0.0
      %1634 = vmatpush2.msra.mxu0 0.0
      %1635 = vmatprep.subr.mxu0 0.0
      %1636 = vmatpush2.msra.mxu0 0.0
      %1637 = vmatprep.mubr.f32.mxu0 0.0
      %1638 = vmatmul.mubr.f32.gmra.mxu0 %v1568
      %v1639 = vpop.f32.mrf.mxu0
      %v1640 = vadd.f32 0.0, %v1639
      %v1641 = vpop.f32.mrf.mxu0
      %1642 = vmatprep.mubr.f32.mxu0 0.0
      %1643 = vmatmul.mubr.f32.gmra.mxu0 %v1571
      %v1644 = vpop.f32.mrf.mxu0
      %v1645 = vadd.f32 0.0, %v1644
      %v1646 = vpop.f32.mrf.mxu0
      %1647 = vdwg.mxu0
      %1648 = vrot.lane.b32.xlu0 %v417, 104
      %v1649 = vpop.permute.xlu0 %1648
      %1650 = vrot.lane.b32.xlu0 %v422, 104
      %v1651 = vpop.permute.xlu0 %1650
      %v1655 = vsel %vm1210, %v1377, 0
      %v1658 = vsel %vm1210, %v1378, 0
      %1660 = vmatprep.subr.mxu0 0.0
      %1661 = vmatpush1.msra.mxu0 0.0
      %1662 = vmatprep.subr.mxu0 0.0
      %1663 = vmatpush1.msra.mxu0 0.0
      %1664 = vmatprep.subr.mxu0 0.0
      %1665 = vmatpush1.msra.mxu0 0.0
      %1666 = vmatprep.subr.mxu0 0.0
      %1667 = vmatpush1.msra.mxu0 0.0
      %1668 = vmatprep.subr.mxu0 0.0
      %1669 = vmatpush1.msra.mxu0 0.0
      %1670 = vmatprep.subr.mxu0 0.0
      %1671 = vmatpush1.msra.mxu0 0.0
      %1672 = vmatprep.subr.mxu0 0.0
      %1673 = vmatpush1.msra.mxu0 0.0
      %1674 = vmatprep.subr.mxu0 0.0
      %1675 = vmatpush1.msra.mxu0 0.0
      %1676 = vmatprep.subr.mxu0 0.0
      %1677 = vmatpush1.msra.mxu0 0.0
      %1678 = vmatprep.subr.mxu0 0.0
      %1679 = vmatpush1.msra.mxu0 0.0
      %1680 = vmatprep.subr.mxu0 0.0
      %1681 = vmatpush1.msra.mxu0 0.0
      %1682 = vmatprep.subr.mxu0 0.0
      %1683 = vmatpush1.msra.mxu0 0.0
      %1684 = vmatprep.subr.mxu0 0.0
      %1685 = vmatpush1.msra.mxu0 0.0
      %1686 = vmatprep.subr.mxu0 0.0
      %1687 = vmatpush1.msra.mxu0 0.0
      %1688 = vmatprep.subr.mxu0 0.0
      %1689 = vmatpush1.msra.mxu0 %v1651
      %1690 = vmatprep.subr.mxu0 0.0
      %1691 = vmatpush1.msra.mxu0 %v1649
      %1692 = vmatprep.subr.mxu0 0.0
      %1693 = vmatpush2.msra.mxu0 0.0
      %1694 = vmatprep.subr.mxu0 0.0
      %1695 = vmatpush2.msra.mxu0 0.0
      %1696 = vmatprep.subr.mxu0 0.0
      %1697 = vmatpush2.msra.mxu0 0.0
      %1698 = vmatprep.subr.mxu0 0.0
      %1699 = vmatpush2.msra.mxu0 0.0
      %1700 = vmatprep.subr.mxu0 0.0
      %1701 = vmatpush2.msra.mxu0 0.0
      %1702 = vmatprep.subr.mxu0 0.0
      %1703 = vmatpush2.msra.mxu0 0.0
      %1704 = vmatprep.subr.mxu0 0.0
      %1705 = vmatpush2.msra.mxu0 0.0
      %1706 = vmatprep.subr.mxu0 0.0
      %1707 = vmatpush2.msra.mxu0 0.0
      %1708 = vmatprep.subr.mxu0 0.0
      %1709 = vmatpush2.msra.mxu0 0.0
      %1710 = vmatprep.subr.mxu0 0.0
      %1711 = vmatpush2.msra.mxu0 0.0
      %1712 = vmatprep.subr.mxu0 0.0
      %1713 = vmatpush2.msra.mxu0 0.0
      %1714 = vmatprep.subr.mxu0 0.0
      %1715 = vmatpush2.msra.mxu0 0.0
      %1716 = vmatprep.subr.mxu0 0.0
      %1717 = vmatpush2.msra.mxu0 0.0
      %1718 = vmatprep.subr.mxu0 0.0
      %1719 = vmatpush2.msra.mxu0 0.0
      %1720 = vmatprep.subr.mxu0 0.0
      %1721 = vmatpush2.msra.mxu0 0.0
      %1722 = vmatprep.subr.mxu0 0.0
      %1723 = vmatpush2.msra.mxu0 0.0
      %1724 = vmatprep.mubr.f32.mxu0 0.0
      %1725 = vmatmul.mubr.f32.gmra.mxu0 %v1655
      %v1726 = vpop.f32.mrf.mxu0
      %v1727 = vadd.f32 0.0, %v1726
      %v1728 = vpop.f32.mrf.mxu0
      %1729 = vmatprep.mubr.f32.mxu0 0.0
      %1730 = vmatmul.mubr.f32.gmra.mxu0 %v1658
      %v1731 = vpop.f32.mrf.mxu0
      %v1732 = vadd.f32 0.0, %v1731
      %v1733 = vpop.f32.mrf.mxu0
      %1734 = vdwg.mxu0
      %1735 = vrot.lane.b32.xlu0 %v427, 104
      %v1736 = vpop.permute.xlu0 %1735
      %1737 = vrot.lane.b32.xlu0 %v432, 104
      %v1738 = vpop.permute.xlu0 %1737
      %v1742 = vsel %vm1210, %v1379, 0
      %v1745 = vsel %vm1210, %v1380, 0
      %1747 = vmatprep.subr.mxu0 0.0
      %1748 = vmatpush1.msra.mxu0 0.0
      %1749 = vmatprep.subr.mxu0 0.0
      %1750 = vmatpush1.msra.mxu0 0.0
      %1751 = vmatprep.subr.mxu0 0.0
      %1752 = vmatpush1.msra.mxu0 0.0
      %1753 = vmatprep.subr.mxu0 0.0
      %1754 = vmatpush1.msra.mxu0 0.0
      %1755 = vmatprep.subr.mxu0 0.0
      %1756 = vmatpush1.msra.mxu0 0.0
      %1757 = vmatprep.subr.mxu0 0.0
      %1758 = vmatpush1.msra.mxu0 0.0
      %1759 = vmatprep.subr.mxu0 0.0
      %1760 = vmatpush1.msra.mxu0 0.0
      %1761 = vmatprep.subr.mxu0 0.0
      %1762 = vmatpush1.msra.mxu0 0.0
      %1763 = vmatprep.subr.mxu0 0.0
      %1764 = vmatpush1.msra.mxu0 0.0
      %1765 = vmatprep.subr.mxu0 0.0
      %1766 = vmatpush1.msra.mxu0 0.0
      %1767 = vmatprep.subr.mxu0 0.0
      %1768 = vmatpush1.msra.mxu0 0.0
      %1769 = vmatprep.subr.mxu0 0.0
      %1770 = vmatpush1.msra.mxu0 0.0
      %1771 = vmatprep.subr.mxu0 0.0
      %1772 = vmatpush1.msra.mxu0 0.0
      %1773 = vmatprep.subr.mxu0 0.0
      %1774 = vmatpush1.msra.mxu0 0.0
      %1775 = vmatprep.subr.mxu0 0.0
      %1776 = vmatpush1.msra.mxu0 %v1738
      %1777 = vmatprep.subr.mxu0 0.0
      %1778 = vmatpush1.msra.mxu0 %v1736
      %1779 = vmatprep.subr.mxu0 0.0
      %1780 = vmatpush2.msra.mxu0 0.0
      %1781 = vmatprep.subr.mxu0 0.0
      %1782 = vmatpush2.msra.mxu0 0.0
      %1783 = vmatprep.subr.mxu0 0.0
      %1784 = vmatpush2.msra.mxu0 0.0
      %1785 = vmatprep.subr.mxu0 0.0
      %1786 = vmatpush2.msra.mxu0 0.0
      %1787 = vmatprep.subr.mxu0 0.0
      %1788 = vmatpush2.msra.mxu0 0.0
      %1789 = vmatprep.subr.mxu0 0.0
      %1790 = vmatpush2.msra.mxu0 0.0
      %1791 = vmatprep.subr.mxu0 0.0
      %1792 = vmatpush2.msra.mxu0 0.0
      %1793 = vmatprep.subr.mxu0 0.0
      %1794 = vmatpush2.msra.mxu0 0.0
      %1795 = vmatprep.subr.mxu0 0.0
      %1796 = vmatpush2.msra.mxu0 0.0
      %1797 = vmatprep.subr.mxu0 0.0
      %1798 = vmatpush2.msra.mxu0 0.0
      %1799 = vmatprep.subr.mxu0 0.0
      %1800 = vmatpush2.msra.mxu0 0.0
      %1801 = vmatprep.subr.mxu0 0.0
      %1802 = vmatpush2.msra.mxu0 0.0
      %1803 = vmatprep.subr.mxu0 0.0
      %1804 = vmatpush2.msra.mxu0 0.0
      %1805 = vmatprep.subr.mxu0 0.0
      %1806 = vmatpush2.msra.mxu0 0.0
      %1807 = vmatprep.subr.mxu0 0.0
      %1808 = vmatpush2.msra.mxu0 0.0
      %1809 = vmatprep.subr.mxu0 0.0
      %1810 = vmatpush2.msra.mxu0 0.0
      %1811 = vmatprep.mubr.f32.mxu0 0.0
      %1812 = vmatmul.mubr.f32.gmra.mxu0 %v1742
      %v1813 = vpop.f32.mrf.mxu0
      %v1814 = vadd.f32 0.0, %v1813
      %v1815 = vpop.f32.mrf.mxu0
      %1816 = vmatprep.mubr.f32.mxu0 0.0
      %1817 = vmatmul.mubr.f32.gmra.mxu0 %v1745
      %v1818 = vpop.f32.mrf.mxu0
      %v1819 = vadd.f32 0.0, %v1818
      %v1820 = vpop.f32.mrf.mxu0
      %1821 = vdwg.mxu0
      %1822 = vrot.lane.b32.xlu0 %v437, 104
      %v1823 = vpop.permute.xlu0 %1822
      %1824 = vrot.lane.b32.xlu0 %v442, 104
      %v1825 = vpop.permute.xlu0 %1824
      %v1829 = vsel %vm1210, %v1381, 0
      %v1832 = vsel %vm1210, %v1382, 0
      %1834 = vmatprep.subr.mxu0 0.0
      %1835 = vmatpush1.msra.mxu0 0.0
      %1836 = vmatprep.subr.mxu0 0.0
      %1837 = vmatpush1.msra.mxu0 0.0
      %1838 = vmatprep.subr.mxu0 0.0
      %1839 = vmatpush1.msra.mxu0 0.0
      %1840 = vmatprep.subr.mxu0 0.0
      %1841 = vmatpush1.msra.mxu0 0.0
      %1842 = vmatprep.subr.mxu0 0.0
      %1843 = vmatpush1.msra.mxu0 0.0
      %1844 = vmatprep.subr.mxu0 0.0
      %1845 = vmatpush1.msra.mxu0 0.0
      %1846 = vmatprep.subr.mxu0 0.0
      %1847 = vmatpush1.msra.mxu0 0.0
      %1848 = vmatprep.subr.mxu0 0.0
      %1849 = vmatpush1.msra.mxu0 0.0
      %1850 = vmatprep.subr.mxu0 0.0
      %1851 = vmatpush1.msra.mxu0 0.0
      %1852 = vmatprep.subr.mxu0 0.0
      %1853 = vmatpush1.msra.mxu0 0.0
      %1854 = vmatprep.subr.mxu0 0.0
      %1855 = vmatpush1.msra.mxu0 0.0
      %1856 = vmatprep.subr.mxu0 0.0
      %1857 = vmatpush1.msra.mxu0 0.0
      %1858 = vmatprep.subr.mxu0 0.0
      %1859 = vmatpush1.msra.mxu0 0.0
      %1860 = vmatprep.subr.mxu0 0.0
      %1861 = vmatpush1.msra.mxu0 0.0
      %1862 = vmatprep.subr.mxu0 0.0
      %1863 = vmatpush1.msra.mxu0 %v1825
      %1864 = vmatprep.subr.mxu0 0.0
      %1865 = vmatpush1.msra.mxu0 %v1823
      %1866 = vmatprep.subr.mxu0 0.0
      %1867 = vmatpush2.msra.mxu0 0.0
      %1868 = vmatprep.subr.mxu0 0.0
      %1869 = vmatpush2.msra.mxu0 0.0
      %1870 = vmatprep.subr.mxu0 0.0
      %1871 = vmatpush2.msra.mxu0 0.0
      %1872 = vmatprep.subr.mxu0 0.0
      %1873 = vmatpush2.msra.mxu0 0.0
      %1874 = vmatprep.subr.mxu0 0.0
      %1875 = vmatpush2.msra.mxu0 0.0
      %1876 = vmatprep.subr.mxu0 0.0
      %1877 = vmatpush2.msra.mxu0 0.0
      %1878 = vmatprep.subr.mxu0 0.0
      %1879 = vmatpush2.msra.mxu0 0.0
      %1880 = vmatprep.subr.mxu0 0.0
      %1881 = vmatpush2.msra.mxu0 0.0
      %1882 = vmatprep.subr.mxu0 0.0
      %1883 = vmatpush2.msra.mxu0 0.0
      %1884 = vmatprep.subr.mxu0 0.0
      %1885 = vmatpush2.msra.mxu0 0.0
      %1886 = vmatprep.subr.mxu0 0.0
      %1887 = vmatpush2.msra.mxu0 0.0
      %1888 = vmatprep.subr.mxu0 0.0
      %1889 = vmatpush2.msra.mxu0 0.0
      %1890 = vmatprep.subr.mxu0 0.0
      %1891 = vmatpush2.msra.mxu0 0.0
      %1892 = vmatprep.subr.mxu0 0.0
      %1893 = vmatpush2.msra.mxu0 0.0
      %1894 = vmatprep.subr.mxu0 0.0
      %1895 = vmatpush2.msra.mxu0 0.0
      %1896 = vmatprep.subr.mxu0 0.0
      %1897 = vmatpush2.msra.mxu0 0.0
      %1898 = vmatprep.mubr.f32.mxu0 0.0
      %1899 = vmatmul.mubr.f32.gmra.mxu0 %v1829
      %v1900 = vpop.f32.mrf.mxu0
      %v1901 = vadd.f32 0.0, %v1900
      %v1902 = vpop.f32.mrf.mxu0
      %1903 = vmatprep.mubr.f32.mxu0 0.0
      %1904 = vmatmul.mubr.f32.gmra.mxu0 %v1832
      %v1905 = vpop.f32.mrf.mxu0
      %v1906 = vadd.f32 0.0, %v1905
      %v1907 = vpop.f32.mrf.mxu0
      %1908 = vdwg.mxu0
      %1909 = vrot.lane.b32.xlu0 %v447, 104
      %v1910 = vpop.permute.xlu0 %1909
      %1911 = vrot.lane.b32.xlu0 %v452, 104
      %v1912 = vpop.permute.xlu0 %1911
      %v1916 = vsel %vm1210, %v1383, 0
      %v1919 = vsel %vm1210, %v1384, 0
      %1921 = vmatprep.subr.mxu0 0.0
      %1922 = vmatpush1.msra.mxu0 0.0
      %1923 = vmatprep.subr.mxu0 0.0
      %1924 = vmatpush1.msra.mxu0 0.0
      %1925 = vmatprep.subr.mxu0 0.0
      %1926 = vmatpush1.msra.mxu0 0.0
      %1927 = vmatprep.subr.mxu0 0.0
      %1928 = vmatpush1.msra.mxu0 0.0
      %1929 = vmatprep.subr.mxu0 0.0
      %1930 = vmatpush1.msra.mxu0 0.0
      %1931 = vmatprep.subr.mxu0 0.0
      %1932 = vmatpush1.msra.mxu0 0.0
      %1933 = vmatprep.subr.mxu0 0.0
      %1934 = vmatpush1.msra.mxu0 0.0
      %1935 = vmatprep.subr.mxu0 0.0
      %1936 = vmatpush1.msra.mxu0 0.0
      %1937 = vmatprep.subr.mxu0 0.0
      %1938 = vmatpush1.msra.mxu0 0.0
      %1939 = vmatprep.subr.mxu0 0.0
      %1940 = vmatpush1.msra.mxu0 0.0
      %1941 = vmatprep.subr.mxu0 0.0
      %1942 = vmatpush1.msra.mxu0 0.0
      %1943 = vmatprep.subr.mxu0 0.0
      %1944 = vmatpush1.msra.mxu0 0.0
      %1945 = vmatprep.subr.mxu0 0.0
      %1946 = vmatpush1.msra.mxu0 0.0
      %1947 = vmatprep.subr.mxu0 0.0
      %1948 = vmatpush1.msra.mxu0 0.0
      %1949 = vmatprep.subr.mxu0 0.0
      %1950 = vmatpush1.msra.mxu0 %v1912
      %1951 = vmatprep.subr.mxu0 0.0
      %1952 = vmatpush1.msra.mxu0 %v1910
      %1953 = vmatprep.subr.mxu0 0.0
      %1954 = vmatpush2.msra.mxu0 0.0
      %1955 = vmatprep.subr.mxu0 0.0
      %1956 = vmatpush2.msra.mxu0 0.0
      %1957 = vmatprep.subr.mxu0 0.0
      %1958 = vmatpush2.msra.mxu0 0.0
      %1959 = vmatprep.subr.mxu0 0.0
      %1960 = vmatpush2.msra.mxu0 0.0
      %1961 = vmatprep.subr.mxu0 0.0
      %1962 = vmatpush2.msra.mxu0 0.0
      %1963 = vmatprep.subr.mxu0 0.0
      %1964 = vmatpush2.msra.mxu0 0.0
      %1965 = vmatprep.subr.mxu0 0.0
      %1966 = vmatpush2.msra.mxu0 0.0
      %1967 = vmatprep.subr.mxu0 0.0
      %1968 = vmatpush2.msra.mxu0 0.0
      %1969 = vmatprep.subr.mxu0 0.0
      %1970 = vmatpush2.msra.mxu0 0.0
      %1971 = vmatprep.subr.mxu0 0.0
      %1972 = vmatpush2.msra.mxu0 0.0
      %1973 = vmatprep.subr.mxu0 0.0
      %1974 = vmatpush2.msra.mxu0 0.0
      %1975 = vmatprep.subr.mxu0 0.0
      %1976 = vmatpush2.msra.mxu0 0.0
      %1977 = vmatprep.subr.mxu0 0.0
      %1978 = vmatpush2.msra.mxu0 0.0
      %1979 = vmatprep.subr.mxu0 0.0
      %1980 = vmatpush2.msra.mxu0 0.0
      %1981 = vmatprep.subr.mxu0 0.0
      %1982 = vmatpush2.msra.mxu0 0.0
      %1983 = vmatprep.subr.mxu0 0.0
      %1984 = vmatpush2.msra.mxu0 0.0
      %1985 = vmatprep.mubr.f32.mxu0 0.0
      %1986 = vmatmul.mubr.f32.gmra.mxu0 %v1916
      %v1987 = vpop.f32.mrf.mxu0
      %v1988 = vadd.f32 0.0, %v1987
      %v1989 = vpop.f32.mrf.mxu0
      %1990 = vmatprep.mubr.f32.mxu0 0.0
      %1991 = vmatmul.mubr.f32.gmra.mxu0 %v1919
      %v1992 = vpop.f32.mrf.mxu0
      %v1993 = vadd.f32 0.0, %v1992
      %v1994 = vpop.f32.mrf.mxu0
      %1995 = vdwg.mxu0
      %1996 = vrot.lane.b32.xlu0 %v457, 104
      %v1997 = vpop.permute.xlu0 %1996
      %1998 = vrot.lane.b32.xlu0 %v462, 104
      %v1999 = vpop.permute.xlu0 %1998
      %v2003 = vsel %vm1210, %v1385, 0
      %v2006 = vsel %vm1210, %v1386, 0
      %2008 = vmatprep.subr.mxu0 0.0
      %2009 = vmatpush1.msra.mxu0 0.0
      %2010 = vmatprep.subr.mxu0 0.0
      %2011 = vmatpush1.msra.mxu0 0.0
      %2012 = vmatprep.subr.mxu0 0.0
      %2013 = vmatpush1.msra.mxu0 0.0
      %2014 = vmatprep.subr.mxu0 0.0
      %2015 = vmatpush1.msra.mxu0 0.0
      %2016 = vmatprep.subr.mxu0 0.0
      %2017 = vmatpush1.msra.mxu0 0.0
      %2018 = vmatprep.subr.mxu0 0.0
      %2019 = vmatpush1.msra.mxu0 0.0
      %2020 = vmatprep.subr.mxu0 0.0
      %2021 = vmatpush1.msra.mxu0 0.0
      %2022 = vmatprep.subr.mxu0 0.0
      %2023 = vmatpush1.msra.mxu0 0.0
      %2024 = vmatprep.subr.mxu0 0.0
      %2025 = vmatpush1.msra.mxu0 0.0
      %2026 = vmatprep.subr.mxu0 0.0
      %2027 = vmatpush1.msra.mxu0 0.0
      %2028 = vmatprep.subr.mxu0 0.0
      %2029 = vmatpush1.msra.mxu0 0.0
      %2030 = vmatprep.subr.mxu0 0.0
      %2031 = vmatpush1.msra.mxu0 0.0
      %2032 = vmatprep.subr.mxu0 0.0
      %2033 = vmatpush1.msra.mxu0 0.0
      %2034 = vmatprep.subr.mxu0 0.0
      %2035 = vmatpush1.msra.mxu0 0.0
      %2036 = vmatprep.subr.mxu0 0.0
      %2037 = vmatpush1.msra.mxu0 %v1999
      %2038 = vmatprep.subr.mxu0 0.0
      %2039 = vmatpush1.msra.mxu0 %v1997
      %2040 = vmatprep.subr.mxu0 0.0
      %2041 = vmatpush2.msra.mxu0 0.0
      %2042 = vmatprep.subr.mxu0 0.0
      %2043 = vmatpush2.msra.mxu0 0.0
      %2044 = vmatprep.subr.mxu0 0.0
      %2045 = vmatpush2.msra.mxu0 0.0
      %2046 = vmatprep.subr.mxu0 0.0
      %2047 = vmatpush2.msra.mxu0 0.0
      %2048 = vmatprep.subr.mxu0 0.0
      %2049 = vmatpush2.msra.mxu0 0.0
      %2050 = vmatprep.subr.mxu0 0.0
      %2051 = vmatpush2.msra.mxu0 0.0
      %2052 = vmatprep.subr.mxu0 0.0
      %2053 = vmatpush2.msra.mxu0 0.0
      %2054 = vmatprep.subr.mxu0 0.0
      %2055 = vmatpush2.msra.mxu0 0.0
      %2056 = vmatprep.subr.mxu0 0.0
      %2057 = vmatpush2.msra.mxu0 0.0
      %2058 = vmatprep.subr.mxu0 0.0
      %2059 = vmatpush2.msra.mxu0 0.0
      %2060 = vmatprep.subr.mxu0 0.0
      %2061 = vmatpush2.msra.mxu0 0.0
      %2062 = vmatprep.subr.mxu0 0.0
      %2063 = vmatpush2.msra.mxu0 0.0
      %2064 = vmatprep.subr.mxu0 0.0
      %2065 = vmatpush2.msra.mxu0 0.0
      %2066 = vmatprep.subr.mxu0 0.0
      %2067 = vmatpush2.msra.mxu0 0.0
      %2068 = vmatprep.subr.mxu0 0.0
      %2069 = vmatpush2.msra.mxu0 0.0
      %2070 = vmatprep.subr.mxu0 0.0
      %2071 = vmatpush2.msra.mxu0 0.0
      %2072 = vmatprep.mubr.f32.mxu0 0.0
      %2073 = vmatmul.mubr.f32.gmra.mxu0 %v2003
      %v2074 = vpop.f32.mrf.mxu0
      %v2075 = vadd.f32 0.0, %v2074
      %v2076 = vpop.f32.mrf.mxu0
      %2077 = vmatprep.mubr.f32.mxu0 0.0
      %2078 = vmatmul.mubr.f32.gmra.mxu0 %v2006
      %v2079 = vpop.f32.mrf.mxu0
      %v2080 = vadd.f32 0.0, %v2079
      %v2081 = vpop.f32.mrf.mxu0
      %2082 = vdwg.mxu0
      %v2083 = vld [vmem:[%s3] sm:$0xf]
      %2084 = vrot.lane.b32.xlu0 %v465, 124
      %v2085 = vpop.permute.xlu0 %2084
      %2086 = vrot.lane.b32.xlu0 %v466, 124
      %v2087 = vpop.permute.xlu0 %2086
      %2088 = vrot.lane.b32.xlu0 %v387, 112
      %v2089 = vpop.permute.xlu0 %2088
      %2090 = vrot.lane.b32.xlu0 %v392, 112
      %v2091 = vpop.permute.xlu0 %2090
      %v2092 = vsel %vm487, %v2085, 0
      %v2094 = vsel %vm487, %v2087, 0
      %v2096 = vsel %vm487, %v2089, 0
      %v2098 = vsel %vm487, %v2091, 0
      %2100 = vmatprep.subr.mxu0 0.0
      %2101 = vmatpush1.xpose.msra.mxu0 0.0
      %2102 = vmatprep.subr.mxu0 0.0
      %2103 = vmatpush1.xpose.msra.mxu0 0.0
      %2104 = vmatprep.subr.mxu0 0.0
      %2105 = vmatpush1.xpose.msra.mxu0 0.0
      %2106 = vmatprep.subr.mxu0 0.0
      %2107 = vmatpush1.xpose.msra.mxu0 0.0
      %2108 = vmatprep.subr.mxu0 0.0
      %2109 = vmatpush1.xpose.msra.mxu0 0.0
      %2110 = vmatprep.subr.mxu0 0.0
      %2111 = vmatpush1.xpose.msra.mxu0 0.0
      %2112 = vmatprep.subr.mxu0 0.0
      %2113 = vmatpush1.xpose.msra.mxu0 0.0
      %2114 = vmatprep.subr.mxu0 0.0
      %2115 = vmatpush1.xpose.msra.mxu0 0.0
      %2116 = vmatprep.subr.mxu0 0.0
      %2117 = vmatpush1.xpose.msra.mxu0 0.0
      %2118 = vmatprep.subr.mxu0 0.0
      %2119 = vmatpush1.xpose.msra.mxu0 0.0
      %2120 = vmatprep.subr.mxu0 0.0
      %2121 = vmatpush1.xpose.msra.mxu0 0.0
      %2122 = vmatprep.subr.mxu0 0.0
      %2123 = vmatpush1.xpose.msra.mxu0 0.0
      %2124 = vmatprep.subr.mxu0 0.0
      %2125 = vmatpush1.xpose.msra.mxu0 0.0
      %2126 = vmatprep.subr.mxu0 0.0
      %2127 = vmatpush1.xpose.msra.mxu0 0.0
      %2128 = vmatprep.subr.mxu0 0.0
      %2129 = vmatpush1.xpose.msra.mxu0 %v2098
      %2130 = vmatprep.subr.mxu0 0.0
      %2131 = vmatpush1.xpose.msra.mxu0 %v2096
      %2132 = vmatprep.subr.mxu0 0.0
      %2133 = vmatpush2.xpose.msra.mxu0 0.0
      %2134 = vmatprep.subr.mxu0 0.0
      %2135 = vmatpush2.xpose.msra.mxu0 0.0
      %2136 = vmatprep.subr.mxu0 0.0
      %2137 = vmatpush2.xpose.msra.mxu0 0.0
      %2138 = vmatprep.subr.mxu0 0.0
      %2139 = vmatpush2.xpose.msra.mxu0 0.0
      %2140 = vmatprep.subr.mxu0 0.0
      %2141 = vmatpush2.xpose.msra.mxu0 0.0
      %2142 = vmatprep.subr.mxu0 0.0
      %2143 = vmatpush2.xpose.msra.mxu0 0.0
      %2144 = vmatprep.subr.mxu0 0.0
      %2145 = vmatpush2.xpose.msra.mxu0 0.0
      %2146 = vmatprep.subr.mxu0 0.0
      %2147 = vmatpush2.xpose.msra.mxu0 0.0
      %2148 = vmatprep.subr.mxu0 0.0
      %2149 = vmatpush2.xpose.msra.mxu0 0.0
      %2150 = vmatprep.subr.mxu0 0.0
      %2151 = vmatpush2.xpose.msra.mxu0 0.0
      %2152 = vmatprep.subr.mxu0 0.0
      %2153 = vmatpush2.xpose.msra.mxu0 0.0
      %2154 = vmatprep.subr.mxu0 0.0
      %2155 = vmatpush2.xpose.msra.mxu0 0.0
      %2156 = vmatprep.subr.mxu0 0.0
      %2157 = vmatpush2.xpose.msra.mxu0 0.0
      %2158 = vmatprep.subr.mxu0 0.0
      %2159 = vmatpush2.xpose.msra.mxu0 0.0
      %2160 = vmatprep.subr.mxu0 0.0
      %2161 = vmatpush2.xpose.msra.mxu0 0.0
      %2162 = vmatprep.subr.mxu0 0.0
      %2163 = vmatpush2.xpose.msra.mxu0 0.0
      %2164 = vmatprep.mubr.f32.mxu0 0.0
      %2165 = vmatmul.mubr.f32.gmra.mxu0 %v2092
      %v2166 = vpop.f32.mrf.mxu0
      %v2167 = vadd.f32 0.0, %v2166
      %v2168 = vpop.f32.mrf.mxu0
      %2169 = vmatprep.mubr.f32.mxu0 0.0
      %2170 = vmatmul.mubr.f32.gmra.mxu0 %v2094
      %v2171 = vpop.f32.mrf.mxu0
      %v2172 = vadd.f32 0.0, %v2171
      %v2173 = vpop.f32.mrf.mxu0
      %2174 = vdwg.mxu0
      %2175 = vrot.lane.b32.xlu0 %v467, 124
      %v2176 = vpop.permute.xlu0 %2175
      %2177 = vrot.lane.b32.xlu0 %v468, 124
      %v2178 = vpop.permute.xlu0 %2177
      %2179 = vrot.lane.b32.xlu0 %v397, 112
      %v2180 = vpop.permute.xlu0 %2179
      %2181 = vrot.lane.b32.xlu0 %v402, 112
      %v2182 = vpop.permute.xlu0 %2181
      %v2183 = vsel %vm487, %v2176, 0
      %v2185 = vsel %vm487, %v2178, 0
      %v2187 = vsel %vm487, %v2180, 0
      %v2189 = vsel %vm487, %v2182, 0
      %2191 = vmatprep.subr.mxu0 0.0
      %2192 = vmatpush1.xpose.msra.mxu0 0.0
      %2193 = vmatprep.subr.mxu0 0.0
      %2194 = vmatpush1.xpose.msra.mxu0 0.0
      %2195 = vmatprep.subr.mxu0 0.0
      %2196 = vmatpush1.xpose.msra.mxu0 0.0
      %2197 = vmatprep.subr.mxu0 0.0
      %2198 = vmatpush1.xpose.msra.mxu0 0.0
      %2199 = vmatprep.subr.mxu0 0.0
      %2200 = vmatpush1.xpose.msra.mxu0 0.0
      %2201 = vmatprep.subr.mxu0 0.0
      %2202 = vmatpush1.xpose.msra.mxu0 0.0
      %2203 = vmatprep.subr.mxu0 0.0
      %2204 = vmatpush1.xpose.msra.mxu0 0.0
      %2205 = vmatprep.subr.mxu0 0.0
      %2206 = vmatpush1.xpose.msra.mxu0 0.0
      %2207 = vmatprep.subr.mxu0 0.0
      %2208 = vmatpush1.xpose.msra.mxu0 0.0
      %2209 = vmatprep.subr.mxu0 0.0
      %2210 = vmatpush1.xpose.msra.mxu0 0.0
      %2211 = vmatprep.subr.mxu0 0.0
      %2212 = vmatpush1.xpose.msra.mxu0 0.0
      %2213 = vmatprep.subr.mxu0 0.0
      %2214 = vmatpush1.xpose.msra.mxu0 0.0
      %2215 = vmatprep.subr.mxu0 0.0
      %2216 = vmatpush1.xpose.msra.mxu0 0.0
      %2217 = vmatprep.subr.mxu0 0.0
      %2218 = vmatpush1.xpose.msra.mxu0 0.0
      %2219 = vmatprep.subr.mxu0 0.0
      %2220 = vmatpush1.xpose.msra.mxu0 %v2189
      %2221 = vmatprep.subr.mxu0 0.0
      %2222 = vmatpush1.xpose.msra.mxu0 %v2187
      %2223 = vmatprep.subr.mxu0 0.0
      %2224 = vmatpush2.xpose.msra.mxu0 0.0
      %2225 = vmatprep.subr.mxu0 0.0
      %2226 = vmatpush2.xpose.msra.mxu0 0.0
      %2227 = vmatprep.subr.mxu0 0.0
      %2228 = vmatpush2.xpose.msra.mxu0 0.0
      %2229 = vmatprep.subr.mxu0 0.0
      %2230 = vmatpush2.xpose.msra.mxu0 0.0
      %2231 = vmatprep.subr.mxu0 0.0
      %2232 = vmatpush2.xpose.msra.mxu0 0.0
      %2233 = vmatprep.subr.mxu0 0.0
      %2234 = vmatpush2.xpose.msra.mxu0 0.0
      %2235 = vmatprep.subr.mxu0 0.0
      %2236 = vmatpush2.xpose.msra.mxu0 0.0
      %2237 = vmatprep.subr.mxu0 0.0
      %2238 = vmatpush2.xpose.msra.mxu0 0.0
      %2239 = vmatprep.subr.mxu0 0.0
      %2240 = vmatpush2.xpose.msra.mxu0 0.0
      %2241 = vmatprep.subr.mxu0 0.0
      %2242 = vmatpush2.xpose.msra.mxu0 0.0
      %2243 = vmatprep.subr.mxu0 0.0
      %2244 = vmatpush2.xpose.msra.mxu0 0.0
      %2245 = vmatprep.subr.mxu0 0.0
      %2246 = vmatpush2.xpose.msra.mxu0 0.0
      %2247 = vmatprep.subr.mxu0 0.0
      %2248 = vmatpush2.xpose.msra.mxu0 0.0
      %2249 = vmatprep.subr.mxu0 0.0
      %2250 = vmatpush2.xpose.msra.mxu0 0.0
      %2251 = vmatprep.subr.mxu0 0.0
      %2252 = vmatpush2.xpose.msra.mxu0 0.0
      %2253 = vmatprep.subr.mxu0 0.0
      %2254 = vmatpush2.xpose.msra.mxu0 0.0
      %2255 = vmatprep.mubr.f32.mxu0 0.0
      %2256 = vmatmul.mubr.f32.gmra.mxu0 %v2183
      %v2257 = vpop.f32.mrf.mxu0
      %v2258 = vadd.f32 0.0, %v2257
      %v2259 = vpop.f32.mrf.mxu0
      %2260 = vmatprep.mubr.f32.mxu0 0.0
      %2261 = vmatmul.mubr.f32.gmra.mxu0 %v2185
      %v2262 = vpop.f32.mrf.mxu0
      %v2263 = vadd.f32 0.0, %v2262
      %v2264 = vpop.f32.mrf.mxu0
      %2265 = vdwg.mxu0
      %2266 = vrot.lane.b32.xlu0 %v469, 124
      %v2267 = vpop.permute.xlu0 %2266
      %2268 = vrot.lane.b32.xlu0 %v470, 124
      %v2269 = vpop.permute.xlu0 %2268
      %2270 = vrot.lane.b32.xlu0 %v407, 112
      %v2271 = vpop.permute.xlu0 %2270
      %2272 = vrot.lane.b32.xlu0 %v412, 112
      %v2273 = vpop.permute.xlu0 %2272
      %v2274 = vsel %vm487, %v2267, 0
      %v2276 = vsel %vm487, %v2269, 0
      %v2278 = vsel %vm487, %v2271, 0
      %v2280 = vsel %vm487, %v2273, 0
      %2282 = vmatprep.subr.mxu0 0.0
      %2283 = vmatpush1.xpose.msra.mxu0 0.0
      %2284 = vmatprep.subr.mxu0 0.0
      %2285 = vmatpush1.xpose.msra.mxu0 0.0
      %2286 = vmatprep.subr.mxu0 0.0
      %2287 = vmatpush1.xpose.msra.mxu0 0.0
      %2288 = vmatprep.subr.mxu0 0.0
      %2289 = vmatpush1.xpose.msra.mxu0 0.0
      %2290 = vmatprep.subr.mxu0 0.0
      %2291 = vmatpush1.xpose.msra.mxu0 0.0
      %2292 = vmatprep.subr.mxu0 0.0
      %2293 = vmatpush1.xpose.msra.mxu0 0.0
      %2294 = vmatprep.subr.mxu0 0.0
      %2295 = vmatpush1.xpose.msra.mxu0 0.0
      %2296 = vmatprep.subr.mxu0 0.0
      %2297 = vmatpush1.xpose.msra.mxu0 0.0
      %2298 = vmatprep.subr.mxu0 0.0
      %2299 = vmatpush1.xpose.msra.mxu0 0.0
      %2300 = vmatprep.subr.mxu0 0.0
      %2301 = vmatpush1.xpose.msra.mxu0 0.0
      %2302 = vmatprep.subr.mxu0 0.0
      %2303 = vmatpush1.xpose.msra.mxu0 0.0
      %2304 = vmatprep.subr.mxu0 0.0
      %2305 = vmatpush1.xpose.msra.mxu0 0.0
      %2306 = vmatprep.subr.mxu0 0.0
      %2307 = vmatpush1.xpose.msra.mxu0 0.0
      %2308 = vmatprep.subr.mxu0 0.0
      %2309 = vmatpush1.xpose.msra.mxu0 0.0
      %2310 = vmatprep.subr.mxu0 0.0
      %2311 = vmatpush1.xpose.msra.mxu0 %v2280
      %2312 = vmatprep.subr.mxu0 0.0
      %2313 = vmatpush1.xpose.msra.mxu0 %v2278
      %2314 = vmatprep.subr.mxu0 0.0
      %2315 = vmatpush2.xpose.msra.mxu0 0.0
      %2316 = vmatprep.subr.mxu0 0.0
      %2317 = vmatpush2.xpose.msra.mxu0 0.0
      %2318 = vmatprep.subr.mxu0 0.0
      %2319 = vmatpush2.xpose.msra.mxu0 0.0
      %2320 = vmatprep.subr.mxu0 0.0
      %2321 = vmatpush2.xpose.msra.mxu0 0.0
      %2322 = vmatprep.subr.mxu0 0.0
      %2323 = vmatpush2.xpose.msra.mxu0 0.0
      %2324 = vmatprep.subr.mxu0 0.0
      %2325 = vmatpush2.xpose.msra.mxu0 0.0
      %2326 = vmatprep.subr.mxu0 0.0
      %2327 = vmatpush2.xpose.msra.mxu0 0.0
      %2328 = vmatprep.subr.mxu0 0.0
      %2329 = vmatpush2.xpose.msra.mxu0 0.0
      %2330 = vmatprep.subr.mxu0 0.0
      %2331 = vmatpush2.xpose.msra.mxu0 0.0
      %2332 = vmatprep.subr.mxu0 0.0
      %2333 = vmatpush2.xpose.msra.mxu0 0.0
      %2334 = vmatprep.subr.mxu0 0.0
      %2335 = vmatpush2.xpose.msra.mxu0 0.0
      %2336 = vmatprep.subr.mxu0 0.0
      %2337 = vmatpush2.xpose.msra.mxu0 0.0
      %2338 = vmatprep.subr.mxu0 0.0
      %2339 = vmatpush2.xpose.msra.mxu0 0.0
      %2340 = vmatprep.subr.mxu0 0.0
      %2341 = vmatpush2.xpose.msra.mxu0 0.0
      %2342 = vmatprep.subr.mxu0 0.0
      %2343 = vmatpush2.xpose.msra.mxu0 0.0
      %2344 = vmatprep.subr.mxu0 0.0
      %2345 = vmatpush2.xpose.msra.mxu0 0.0
      %2346 = vmatprep.mubr.f32.mxu0 0.0
      %2347 = vmatmul.mubr.f32.gmra.mxu0 %v2274
      %v2348 = vpop.f32.mrf.mxu0
      %v2349 = vadd.f32 0.0, %v2348
      %v2350 = vpop.f32.mrf.mxu0
      %2351 = vmatprep.mubr.f32.mxu0 0.0
      %2352 = vmatmul.mubr.f32.gmra.mxu0 %v2276
      %v2353 = vpop.f32.mrf.mxu0
      %v2354 = vadd.f32 0.0, %v2353
      %v2355 = vpop.f32.mrf.mxu0
      %2356 = vdwg.mxu0
      %2357 = vrot.lane.b32.xlu0 %v471, 124
      %v2358 = vpop.permute.xlu0 %2357
      %2359 = vrot.lane.b32.xlu0 %v472, 124
      %v2360 = vpop.permute.xlu0 %2359
      %2361 = vrot.lane.b32.xlu0 %v417, 112
      %v2362 = vpop.permute.xlu0 %2361
      %2363 = vrot.lane.b32.xlu0 %v422, 112
      %v2364 = vpop.permute.xlu0 %2363
      %v2365 = vsel %vm487, %v2358, 0
      %v2367 = vsel %vm487, %v2360, 0
      %v2369 = vsel %vm487, %v2362, 0
      %v2371 = vsel %vm487, %v2364, 0
      %2373 = vmatprep.subr.mxu0 0.0
      %2374 = vmatpush1.xpose.msra.mxu0 0.0
      %2375 = vmatprep.subr.mxu0 0.0
      %2376 = vmatpush1.xpose.msra.mxu0 0.0
      %2377 = vmatprep.subr.mxu0 0.0
      %2378 = vmatpush1.xpose.msra.mxu0 0.0
      %2379 = vmatprep.subr.mxu0 0.0
      %2380 = vmatpush1.xpose.msra.mxu0 0.0
      %2381 = vmatprep.subr.mxu0 0.0
      %2382 = vmatpush1.xpose.msra.mxu0 0.0
      %2383 = vmatprep.subr.mxu0 0.0
      %2384 = vmatpush1.xpose.msra.mxu0 0.0
      %2385 = vmatprep.subr.mxu0 0.0
      %2386 = vmatpush1.xpose.msra.mxu0 0.0
      %2387 = vmatprep.subr.mxu0 0.0
      %2388 = vmatpush1.xpose.msra.mxu0 0.0
      %2389 = vmatprep.subr.mxu0 0.0
      %2390 = vmatpush1.xpose.msra.mxu0 0.0
      %2391 = vmatprep.subr.mxu0 0.0
      %2392 = vmatpush1.xpose.msra.mxu0 0.0
      %2393 = vmatprep.subr.mxu0 0.0
      %2394 = vmatpush1.xpose.msra.mxu0 0.0
      %2395 = vmatprep.subr.mxu0 0.0
      %2396 = vmatpush1.xpose.msra.mxu0 0.0
      %2397 = vmatprep.subr.mxu0 0.0
      %2398 = vmatpush1.xpose.msra.mxu0 0.0
      %2399 = vmatprep.subr.mxu0 0.0
      %2400 = vmatpush1.xpose.msra.mxu0 0.0
      %2401 = vmatprep.subr.mxu0 0.0
      %2402 = vmatpush1.xpose.msra.mxu0 %v2371
      %2403 = vmatprep.subr.mxu0 0.0
      %2404 = vmatpush1.xpose.msra.mxu0 %v2369
      %2405 = vmatprep.subr.mxu0 0.0
      %2406 = vmatpush2.xpose.msra.mxu0 0.0
      %2407 = vmatprep.subr.mxu0 0.0
      %2408 = vmatpush2.xpose.msra.mxu0 0.0
      %2409 = vmatprep.subr.mxu0 0.0
      %2410 = vmatpush2.xpose.msra.mxu0 0.0
      %2411 = vmatprep.subr.mxu0 0.0
      %2412 = vmatpush2.xpose.msra.mxu0 0.0
      %2413 = vmatprep.subr.mxu0 0.0
      %2414 = vmatpush2.xpose.msra.mxu0 0.0
      %2415 = vmatprep.subr.mxu0 0.0
      %2416 = vmatpush2.xpose.msra.mxu0 0.0
      %2417 = vmatprep.subr.mxu0 0.0
      %2418 = vmatpush2.xpose.msra.mxu0 0.0
      %2419 = vmatprep.subr.mxu0 0.0
      %2420 = vmatpush2.xpose.msra.mxu0 0.0
      %2421 = vmatprep.subr.mxu0 0.0
      %2422 = vmatpush2.xpose.msra.mxu0 0.0
      %2423 = vmatprep.subr.mxu0 0.0
      %2424 = vmatpush2.xpose.msra.mxu0 0.0
      %2425 = vmatprep.subr.mxu0 0.0
      %2426 = vmatpush2.xpose.msra.mxu0 0.0
      %2427 = vmatprep.subr.mxu0 0.0
      %2428 = vmatpush2.xpose.msra.mxu0 0.0
      %2429 = vmatprep.subr.mxu0 0.0
      %2430 = vmatpush2.xpose.msra.mxu0 0.0
      %2431 = vmatprep.subr.mxu0 0.0
      %2432 = vmatpush2.xpose.msra.mxu0 0.0
      %2433 = vmatprep.subr.mxu0 0.0
      %2434 = vmatpush2.xpose.msra.mxu0 0.0
      %2435 = vmatprep.subr.mxu0 0.0
      %2436 = vmatpush2.xpose.msra.mxu0 0.0
      %2437 = vmatprep.mubr.f32.mxu0 0.0
      %2438 = vmatmul.mubr.f32.gmra.mxu0 %v2365
      %v2439 = vpop.f32.mrf.mxu0
      %v2440 = vadd.f32 0.0, %v2439
      %v2441 = vpop.f32.mrf.mxu0
      %2442 = vmatprep.mubr.f32.mxu0 0.0
      %2443 = vmatmul.mubr.f32.gmra.mxu0 %v2367
      %v2444 = vpop.f32.mrf.mxu0
      %v2445 = vadd.f32 0.0, %v2444
      %v2446 = vpop.f32.mrf.mxu0
      %2447 = vdwg.mxu0
      %2448 = vrot.lane.b32.xlu0 %v473, 124
      %v2449 = vpop.permute.xlu0 %2448
      %2450 = vrot.lane.b32.xlu0 %v474, 124
      %v2451 = vpop.permute.xlu0 %2450
      %2452 = vrot.lane.b32.xlu0 %v427, 112
      %v2453 = vpop.permute.xlu0 %2452
      %2454 = vrot.lane.b32.xlu0 %v432, 112
      %v2455 = vpop.permute.xlu0 %2454
      %v2456 = vsel %vm487, %v2449, 0
      %v2458 = vsel %vm487, %v2451, 0
      %v2460 = vsel %vm487, %v2453, 0
      %v2462 = vsel %vm487, %v2455, 0
      %2464 = vmatprep.subr.mxu0 0.0
      %2465 = vmatpush1.xpose.msra.mxu0 0.0
      %2466 = vmatprep.subr.mxu0 0.0
      %2467 = vmatpush1.xpose.msra.mxu0 0.0
      %2468 = vmatprep.subr.mxu0 0.0
      %2469 = vmatpush1.xpose.msra.mxu0 0.0
      %2470 = vmatprep.subr.mxu0 0.0
      %2471 = vmatpush1.xpose.msra.mxu0 0.0
      %2472 = vmatprep.subr.mxu0 0.0
      %2473 = vmatpush1.xpose.msra.mxu0 0.0
      %2474 = vmatprep.subr.mxu0 0.0
      %2475 = vmatpush1.xpose.msra.mxu0 0.0
      %2476 = vmatprep.subr.mxu0 0.0
      %2477 = vmatpush1.xpose.msra.mxu0 0.0
      %2478 = vmatprep.subr.mxu0 0.0
      %2479 = vmatpush1.xpose.msra.mxu0 0.0
      %2480 = vmatprep.subr.mxu0 0.0
      %2481 = vmatpush1.xpose.msra.mxu0 0.0
      %2482 = vmatprep.subr.mxu0 0.0
      %2483 = vmatpush1.xpose.msra.mxu0 0.0
      %2484 = vmatprep.subr.mxu0 0.0
      %2485 = vmatpush1.xpose.msra.mxu0 0.0
      %2486 = vmatprep.subr.mxu0 0.0
      %2487 = vmatpush1.xpose.msra.mxu0 0.0
      %2488 = vmatprep.subr.mxu0 0.0
      %2489 = vmatpush1.xpose.msra.mxu0 0.0
      %2490 = vmatprep.subr.mxu0 0.0
      %2491 = vmatpush1.xpose.msra.mxu0 0.0
      %2492 = vmatprep.subr.mxu0 0.0
      %2493 = vmatpush1.xpose.msra.mxu0 %v2462
      %2494 = vmatprep.subr.mxu0 0.0
      %2495 = vmatpush1.xpose.msra.mxu0 %v2460
      %2496 = vmatprep.subr.mxu0 0.0
      %2497 = vmatpush2.xpose.msra.mxu0 0.0
      %2498 = vmatprep.subr.mxu0 0.0
      %2499 = vmatpush2.xpose.msra.mxu0 0.0
      %2500 = vmatprep.subr.mxu0 0.0
      %2501 = vmatpush2.xpose.msra.mxu0 0.0
      %2502 = vmatprep.subr.mxu0 0.0
      %2503 = vmatpush2.xpose.msra.mxu0 0.0
      %2504 = vmatprep.subr.mxu0 0.0
      %2505 = vmatpush2.xpose.msra.mxu0 0.0
      %2506 = vmatprep.subr.mxu0 0.0
      %2507 = vmatpush2.xpose.msra.mxu0 0.0
      %2508 = vmatprep.subr.mxu0 0.0
      %2509 = vmatpush2.xpose.msra.mxu0 0.0
      %2510 = vmatprep.subr.mxu0 0.0
      %2511 = vmatpush2.xpose.msra.mxu0 0.0
      %2512 = vmatprep.subr.mxu0 0.0
      %2513 = vmatpush2.xpose.msra.mxu0 0.0
      %2514 = vmatprep.subr.mxu0 0.0
      %2515 = vmatpush2.xpose.msra.mxu0 0.0
      %2516 = vmatprep.subr.mxu0 0.0
      %2517 = vmatpush2.xpose.msra.mxu0 0.0
      %2518 = vmatprep.subr.mxu0 0.0
      %2519 = vmatpush2.xpose.msra.mxu0 0.0
      %2520 = vmatprep.subr.mxu0 0.0
      %2521 = vmatpush2.xpose.msra.mxu0 0.0
      %2522 = vmatprep.subr.mxu0 0.0
      %2523 = vmatpush2.xpose.msra.mxu0 0.0
      %2524 = vmatprep.subr.mxu0 0.0
      %2525 = vmatpush2.xpose.msra.mxu0 0.0
      %2526 = vmatprep.subr.mxu0 0.0
      %2527 = vmatpush2.xpose.msra.mxu0 0.0
      %2528 = vmatprep.mubr.f32.mxu0 0.0
      %2529 = vmatmul.mubr.f32.gmra.mxu0 %v2456
      %v2530 = vpop.f32.mrf.mxu0
      %v2531 = vadd.f32 0.0, %v2530
      %v2532 = vpop.f32.mrf.mxu0
      %2533 = vmatprep.mubr.f32.mxu0 0.0
      %2534 = vmatmul.mubr.f32.gmra.mxu0 %v2458
      %v2535 = vpop.f32.mrf.mxu0
      %v2536 = vadd.f32 0.0, %v2535
      %v2537 = vpop.f32.mrf.mxu0
      %2538 = vdwg.mxu0
      %2539 = vrot.lane.b32.xlu0 %v475, 124
      %v2540 = vpop.permute.xlu0 %2539
      %2541 = vrot.lane.b32.xlu0 %v476, 124
      %v2542 = vpop.permute.xlu0 %2541
      %2543 = vrot.lane.b32.xlu0 %v437, 112
      %v2544 = vpop.permute.xlu0 %2543
      %2545 = vrot.lane.b32.xlu0 %v442, 112
      %v2546 = vpop.permute.xlu0 %2545
      %v2547 = vsel %vm487, %v2540, 0
      %v2549 = vsel %vm487, %v2542, 0
      %v2551 = vsel %vm487, %v2544, 0
      %v2553 = vsel %vm487, %v2546, 0
      %2555 = vmatprep.subr.mxu0 0.0
      %2556 = vmatpush1.xpose.msra.mxu0 0.0
      %2557 = vmatprep.subr.mxu0 0.0
      %2558 = vmatpush1.xpose.msra.mxu0 0.0
      %2559 = vmatprep.subr.mxu0 0.0
      %2560 = vmatpush1.xpose.msra.mxu0 0.0
      %2561 = vmatprep.subr.mxu0 0.0
      %2562 = vmatpush1.xpose.msra.mxu0 0.0
      %2563 = vmatprep.subr.mxu0 0.0
      %2564 = vmatpush1.xpose.msra.mxu0 0.0
      %2565 = vmatprep.subr.mxu0 0.0
      %2566 = vmatpush1.xpose.msra.mxu0 0.0
      %2567 = vmatprep.subr.mxu0 0.0
      %2568 = vmatpush1.xpose.msra.mxu0 0.0
      %2569 = vmatprep.subr.mxu0 0.0
      %2570 = vmatpush1.xpose.msra.mxu0 0.0
      %2571 = vmatprep.subr.mxu0 0.0
      %2572 = vmatpush1.xpose.msra.mxu0 0.0
      %2573 = vmatprep.subr.mxu0 0.0
      %2574 = vmatpush1.xpose.msra.mxu0 0.0
      %2575 = vmatprep.subr.mxu0 0.0
      %2576 = vmatpush1.xpose.msra.mxu0 0.0
      %2577 = vmatprep.subr.mxu0 0.0
      %2578 = vmatpush1.xpose.msra.mxu0 0.0
      %2579 = vmatprep.subr.mxu0 0.0
      %2580 = vmatpush1.xpose.msra.mxu0 0.0
      %2581 = vmatprep.subr.mxu0 0.0
      %2582 = vmatpush1.xpose.msra.mxu0 0.0
      %2583 = vmatprep.subr.mxu0 0.0
      %2584 = vmatpush1.xpose.msra.mxu0 %v2553
      %2585 = vmatprep.subr.mxu0 0.0
      %2586 = vmatpush1.xpose.msra.mxu0 %v2551
      %2587 = vmatprep.subr.mxu0 0.0
      %2588 = vmatpush2.xpose.msra.mxu0 0.0
      %2589 = vmatprep.subr.mxu0 0.0
      %2590 = vmatpush2.xpose.msra.mxu0 0.0
      %2591 = vmatprep.subr.mxu0 0.0
      %2592 = vmatpush2.xpose.msra.mxu0 0.0
      %2593 = vmatprep.subr.mxu0 0.0
      %2594 = vmatpush2.xpose.msra.mxu0 0.0
      %2595 = vmatprep.subr.mxu0 0.0
      %2596 = vmatpush2.xpose.msra.mxu0 0.0
      %2597 = vmatprep.subr.mxu0 0.0
      %2598 = vmatpush2.xpose.msra.mxu0 0.0
      %2599 = vmatprep.subr.mxu0 0.0
      %2600 = vmatpush2.xpose.msra.mxu0 0.0
      %2601 = vmatprep.subr.mxu0 0.0
      %2602 = vmatpush2.xpose.msra.mxu0 0.0
      %2603 = vmatprep.subr.mxu0 0.0
      %2604 = vmatpush2.xpose.msra.mxu0 0.0
      %2605 = vmatprep.subr.mxu0 0.0
      %2606 = vmatpush2.xpose.msra.mxu0 0.0
      %2607 = vmatprep.subr.mxu0 0.0
      %2608 = vmatpush2.xpose.msra.mxu0 0.0
      %2609 = vmatprep.subr.mxu0 0.0
      %2610 = vmatpush2.xpose.msra.mxu0 0.0
      %2611 = vmatprep.subr.mxu0 0.0
      %2612 = vmatpush2.xpose.msra.mxu0 0.0
      %2613 = vmatprep.subr.mxu0 0.0
      %2614 = vmatpush2.xpose.msra.mxu0 0.0
      %2615 = vmatprep.subr.mxu0 0.0
      %2616 = vmatpush2.xpose.msra.mxu0 0.0
      %2617 = vmatprep.subr.mxu0 0.0
      %2618 = vmatpush2.xpose.msra.mxu0 0.0
      %2619 = vmatprep.mubr.f32.mxu0 0.0
      %2620 = vmatmul.mubr.f32.gmra.mxu0 %v2547
      %v2621 = vpop.f32.mrf.mxu0
      %v2622 = vadd.f32 0.0, %v2621
      %v2623 = vpop.f32.mrf.mxu0
      %2624 = vmatprep.mubr.f32.mxu0 0.0
      %2625 = vmatmul.mubr.f32.gmra.mxu0 %v2549
      %v2626 = vpop.f32.mrf.mxu0
      %v2627 = vadd.f32 0.0, %v2626
      %v2628 = vpop.f32.mrf.mxu0
      %2629 = vdwg.mxu0
      %2630 = vrot.lane.b32.xlu0 %v477, 124
      %v2631 = vpop.permute.xlu0 %2630
      %2632 = vrot.lane.b32.xlu0 %v478, 124
      %v2633 = vpop.permute.xlu0 %2632
      %2634 = vrot.lane.b32.xlu0 %v447, 112
      %v2635 = vpop.permute.xlu0 %2634
      %2636 = vrot.lane.b32.xlu0 %v452, 112
      %v2637 = vpop.permute.xlu0 %2636
      %v2638 = vsel %vm487, %v2631, 0
      %v2640 = vsel %vm487, %v2633, 0
      %v2642 = vsel %vm487, %v2635, 0
      %v2644 = vsel %vm487, %v2637, 0
      %2646 = vmatprep.subr.mxu0 0.0
      %2647 = vmatpush1.xpose.msra.mxu0 0.0
      %2648 = vmatprep.subr.mxu0 0.0
      %2649 = vmatpush1.xpose.msra.mxu0 0.0
      %2650 = vmatprep.subr.mxu0 0.0
      %2651 = vmatpush1.xpose.msra.mxu0 0.0
      %2652 = vmatprep.subr.mxu0 0.0
      %2653 = vmatpush1.xpose.msra.mxu0 0.0
      %2654 = vmatprep.subr.mxu0 0.0
      %2655 = vmatpush1.xpose.msra.mxu0 0.0
      %2656 = vmatprep.subr.mxu0 0.0
      %2657 = vmatpush1.xpose.msra.mxu0 0.0
      %2658 = vmatprep.subr.mxu0 0.0
      %2659 = vmatpush1.xpose.msra.mxu0 0.0
      %2660 = vmatprep.subr.mxu0 0.0
      %2661 = vmatpush1.xpose.msra.mxu0 0.0
      %2662 = vmatprep.subr.mxu0 0.0
      %2663 = vmatpush1.xpose.msra.mxu0 0.0
      %2664 = vmatprep.subr.mxu0 0.0
      %2665 = vmatpush1.xpose.msra.mxu0 0.0
      %2666 = vmatprep.subr.mxu0 0.0
      %2667 = vmatpush1.xpose.msra.mxu0 0.0
      %2668 = vmatprep.subr.mxu0 0.0
      %2669 = vmatpush1.xpose.msra.mxu0 0.0
      %2670 = vmatprep.subr.mxu0 0.0
      %2671 = vmatpush1.xpose.msra.mxu0 0.0
      %2672 = vmatprep.subr.mxu0 0.0
      %2673 = vmatpush1.xpose.msra.mxu0 0.0
      %2674 = vmatprep.subr.mxu0 0.0
      %2675 = vmatpush1.xpose.msra.mxu0 %v2644
      %2676 = vmatprep.subr.mxu0 0.0
      %2677 = vmatpush1.xpose.msra.mxu0 %v2642
      %2678 = vmatprep.subr.mxu0 0.0
      %2679 = vmatpush2.xpose.msra.mxu0 0.0
      %2680 = vmatprep.subr.mxu0 0.0
      %2681 = vmatpush2.xpose.msra.mxu0 0.0
      %2682 = vmatprep.subr.mxu0 0.0
      %2683 = vmatpush2.xpose.msra.mxu0 0.0
      %2684 = vmatprep.subr.mxu0 0.0
      %2685 = vmatpush2.xpose.msra.mxu0 0.0
      %2686 = vmatprep.subr.mxu0 0.0
      %2687 = vmatpush2.xpose.msra.mxu0 0.0
      %2688 = vmatprep.subr.mxu0 0.0
      %2689 = vmatpush2.xpose.msra.mxu0 0.0
      %2690 = vmatprep.subr.mxu0 0.0
      %2691 = vmatpush2.xpose.msra.mxu0 0.0
      %2692 = vmatprep.subr.mxu0 0.0
      %2693 = vmatpush2.xpose.msra.mxu0 0.0
      %2694 = vmatprep.subr.mxu0 0.0
      %2695 = vmatpush2.xpose.msra.mxu0 0.0
      %2696 = vmatprep.subr.mxu0 0.0
      %2697 = vmatpush2.xpose.msra.mxu0 0.0
      %2698 = vmatprep.subr.mxu0 0.0
      %2699 = vmatpush2.xpose.msra.mxu0 0.0
      %2700 = vmatprep.subr.mxu0 0.0
      %2701 = vmatpush2.xpose.msra.mxu0 0.0
      %2702 = vmatprep.subr.mxu0 0.0
      %2703 = vmatpush2.xpose.msra.mxu0 0.0
      %2704 = vmatprep.subr.mxu0 0.0
      %2705 = vmatpush2.xpose.msra.mxu0 0.0
      %2706 = vmatprep.subr.mxu0 0.0
      %2707 = vmatpush2.xpose.msra.mxu0 0.0
      %2708 = vmatprep.subr.mxu0 0.0
      %2709 = vmatpush2.xpose.msra.mxu0 0.0
      %2710 = vmatprep.mubr.f32.mxu0 0.0
      %2711 = vmatmul.mubr.f32.gmra.mxu0 %v2638
      %v2712 = vpop.f32.mrf.mxu0
      %v2713 = vadd.f32 0.0, %v2712
      %v2714 = vpop.f32.mrf.mxu0
      %2715 = vmatprep.mubr.f32.mxu0 0.0
      %2716 = vmatmul.mubr.f32.gmra.mxu0 %v2640
      %v2717 = vpop.f32.mrf.mxu0
      %v2718 = vadd.f32 0.0, %v2717
      %v2719 = vpop.f32.mrf.mxu0
      %2720 = vdwg.mxu0
      %2721 = vrot.lane.b32.xlu0 %v479, 124
      %v2722 = vpop.permute.xlu0 %2721
      %2723 = vrot.lane.b32.xlu0 %v480, 124
      %v2724 = vpop.permute.xlu0 %2723
      %2725 = vrot.lane.b32.xlu0 %v457, 112
      %v2726 = vpop.permute.xlu0 %2725
      %2727 = vrot.lane.b32.xlu0 %v462, 112
      %v2728 = vpop.permute.xlu0 %2727
      %v2729 = vsel %vm487, %v2722, 0
      %v2731 = vsel %vm487, %v2724, 0
      %v2733 = vsel %vm487, %v2726, 0
      %v2735 = vsel %vm487, %v2728, 0
      %2737 = vmatprep.subr.mxu0 0.0
      %2738 = vmatpush1.xpose.msra.mxu0 0.0
      %2739 = vmatprep.subr.mxu0 0.0
      %2740 = vmatpush1.xpose.msra.mxu0 0.0
      %2741 = vmatprep.subr.mxu0 0.0
      %2742 = vmatpush1.xpose.msra.mxu0 0.0
      %2743 = vmatprep.subr.mxu0 0.0
      %2744 = vmatpush1.xpose.msra.mxu0 0.0
      %2745 = vmatprep.subr.mxu0 0.0
      %2746 = vmatpush1.xpose.msra.mxu0 0.0
      %2747 = vmatprep.subr.mxu0 0.0
      %2748 = vmatpush1.xpose.msra.mxu0 0.0
      %2749 = vmatprep.subr.mxu0 0.0
      %2750 = vmatpush1.xpose.msra.mxu0 0.0
      %2751 = vmatprep.subr.mxu0 0.0
      %2752 = vmatpush1.xpose.msra.mxu0 0.0
      %2753 = vmatprep.subr.mxu0 0.0
      %2754 = vmatpush1.xpose.msra.mxu0 0.0
      %2755 = vmatprep.subr.mxu0 0.0
      %2756 = vmatpush1.xpose.msra.mxu0 0.0
      %2757 = vmatprep.subr.mxu0 0.0
      %2758 = vmatpush1.xpose.msra.mxu0 0.0
      %2759 = vmatprep.subr.mxu0 0.0
      %2760 = vmatpush1.xpose.msra.mxu0 0.0
      %2761 = vmatprep.subr.mxu0 0.0
      %2762 = vmatpush1.xpose.msra.mxu0 0.0
      %2763 = vmatprep.subr.mxu0 0.0
      %2764 = vmatpush1.xpose.msra.mxu0 0.0
      %2765 = vmatprep.subr.mxu0 0.0
      %2766 = vmatpush1.xpose.msra.mxu0 %v2735
      %2767 = vmatprep.subr.mxu0 0.0
      %2768 = vmatpush1.xpose.msra.mxu0 %v2733
      %2769 = vmatprep.subr.mxu0 0.0
      %2770 = vmatpush2.xpose.msra.mxu0 0.0
      %2771 = vmatprep.subr.mxu0 0.0
      %2772 = vmatpush2.xpose.msra.mxu0 0.0
      %2773 = vmatprep.subr.mxu0 0.0
      %2774 = vmatpush2.xpose.msra.mxu0 0.0
      %2775 = vmatprep.subr.mxu0 0.0
      %2776 = vmatpush2.xpose.msra.mxu0 0.0
      %2777 = vmatprep.subr.mxu0 0.0
      %2778 = vmatpush2.xpose.msra.mxu0 0.0
      %2779 = vmatprep.subr.mxu0 0.0
      %2780 = vmatpush2.xpose.msra.mxu0 0.0
      %2781 = vmatprep.subr.mxu0 0.0
      %2782 = vmatpush2.xpose.msra.mxu0 0.0
      %2783 = vmatprep.subr.mxu0 0.0
      %2784 = vmatpush2.xpose.msra.mxu0 0.0
      %2785 = vmatprep.subr.mxu0 0.0
      %2786 = vmatpush2.xpose.msra.mxu0 0.0
      %2787 = vmatprep.subr.mxu0 0.0
      %2788 = vmatpush2.xpose.msra.mxu0 0.0
      %2789 = vmatprep.subr.mxu0 0.0
      %2790 = vmatpush2.xpose.msra.mxu0 0.0
      %2791 = vmatprep.subr.mxu0 0.0
      %2792 = vmatpush2.xpose.msra.mxu0 0.0
      %2793 = vmatprep.subr.mxu0 0.0
      %2794 = vmatpush2.xpose.msra.mxu0 0.0
      %2795 = vmatprep.subr.mxu0 0.0
      %2796 = vmatpush2.xpose.msra.mxu0 0.0
      %2797 = vmatprep.subr.mxu0 0.0
      %2798 = vmatpush2.xpose.msra.mxu0 0.0
      %2799 = vmatprep.subr.mxu0 0.0
      %2800 = vmatpush2.xpose.msra.mxu0 0.0
      %2801 = vmatprep.mubr.f32.mxu0 0.0
      %2802 = vmatmul.mubr.f32.gmra.mxu0 %v2729
      %v2803 = vpop.f32.mrf.mxu0
      %v2804 = vadd.f32 0.0, %v2803
      %v2805 = vpop.f32.mrf.mxu0
      %2806 = vmatprep.mubr.f32.mxu0 0.0
      %2807 = vmatmul.mubr.f32.gmra.mxu0 %v2731
      %v2808 = vpop.f32.mrf.mxu0
      %v2809 = vadd.f32 0.0, %v2808
      %v2810 = vpop.f32.mrf.mxu0
      %2811 = vdwg.mxu0
      %v2812 = vsel %vm1210, %v2167, -inf
      %2813 = vmax.xlane.f32.xlu0 %v2812
      %v2814 = vpop.xlane.xlu0 %2813
      %v2815 = vsel %vm1210, %v2172, -inf
      %2816 = vmax.xlane.f32.xlu0 %v2815
      %v2817 = vpop.xlane.xlu0 %2816
      %v2818 = vsel %vm1210, %v2258, -inf
      %2819 = vmax.xlane.f32.xlu0 %v2818
      %v2820 = vpop.xlane.xlu0 %2819
      %v2821 = vsel %vm1210, %v2263, -inf
      %2822 = vmax.xlane.f32.xlu0 %v2821
      %v2823 = vpop.xlane.xlu0 %2822
      %v2824 = vsel %vm1210, %v2349, -inf
      %2825 = vmax.xlane.f32.xlu0 %v2824
      %v2826 = vpop.xlane.xlu0 %2825
      %v2827 = vsel %vm1210, %v2354, -inf
      %2828 = vmax.xlane.f32.xlu0 %v2827
      %v2829 = vpop.xlane.xlu0 %2828
      %v2830 = vsel %vm1210, %v2440, -inf
      %2831 = vmax.xlane.f32.xlu0 %v2830
      %v2832 = vpop.xlane.xlu0 %2831
      %v2833 = vsel %vm1210, %v2445, -inf
      %2834 = vmax.xlane.f32.xlu0 %v2833
      %v2835 = vpop.xlane.xlu0 %2834
      %v2836 = vsel %vm1210, %v2531, -inf
      %2837 = vmax.xlane.f32.xlu0 %v2836
      %v2838 = vpop.xlane.xlu0 %2837
      %v2839 = vsel %vm1210, %v2536, -inf
      %2840 = vmax.xlane.f32.xlu0 %v2839
      %v2841 = vpop.xlane.xlu0 %2840
      %v2842 = vsel %vm1210, %v2622, -inf
      %2843 = vmax.xlane.f32.xlu0 %v2842
      %v2844 = vpop.xlane.xlu0 %2843
      %v2845 = vsel %vm1210, %v2627, -inf
      %2846 = vmax.xlane.f32.xlu0 %v2845
      %v2847 = vpop.xlane.xlu0 %2846
      %v2848 = vsel %vm1210, %v2713, -inf
      %2849 = vmax.xlane.f32.xlu0 %v2848
      %v2850 = vpop.xlane.xlu0 %2849
      %v2851 = vsel %vm1210, %v2718, -inf
      %2852 = vmax.xlane.f32.xlu0 %v2851
      %v2853 = vpop.xlane.xlu0 %2852
      %v2854 = vsel %vm1210, %v2804, -inf
      %2855 = vmax.xlane.f32.xlu0 %v2854
      %v2856 = vpop.xlane.xlu0 %2855
      %v2857 = vsel %vm1210, %v2809, -inf
      %2858 = vmax.xlane.f32.xlu0 %v2857
      %v2859 = vpop.xlane.xlu0 %2858
      %v2860 = vsub.f32 %v2167, %v2814
      %v2861 = vsub.f32 %v2172, %v2817
      %v2862 = vsub.f32 %v2258, %v2820
      %v2863 = vsub.f32 %v2263, %v2823
      %v2864 = vsub.f32 %v2349, %v2826
      %v2865 = vsub.f32 %v2354, %v2829
      %v2866 = vsub.f32 %v2440, %v2832
      %v2867 = vsub.f32 %v2445, %v2835
      %v2868 = vsub.f32 %v2531, %v2838
      %v2869 = vsub.f32 %v2536, %v2841
      %v2870 = vsub.f32 %v2622, %v2844
      %v2871 = vsub.f32 %v2627, %v2847
      %v2872 = vsub.f32 %v2713, %v2850
      %v2873 = vsub.f32 %v2718, %v2853
      %v2874 = vsub.f32 %v2804, %v2856
      %v2875 = vsub.f32 %v2809, %v2859
      %v2876 = vmul.f32 %v2860, 1.442695
      %v2877 = vpow.pop %v2876
      %v2878 = vmul.f32 %v2861, 1.442695
      %v2879 = vpow.pop %v2878
      %v2880 = vmul.f32 %v2862, 1.442695
      %v2881 = vpow.pop %v2880
      %v2882 = vmul.f32 %v2863, 1.442695
      %v2883 = vpow.pop %v2882
      %v2884 = vmul.f32 %v2864, 1.442695
      %v2885 = vpow.pop %v2884
      %v2886 = vmul.f32 %v2865, 1.442695
      %v2887 = vpow.pop %v2886
      %v2888 = vmul.f32 %v2866, 1.442695
      %v2889 = vpow.pop %v2888
      %v2890 = vmul.f32 %v2867, 1.442695
      %v2891 = vpow.pop %v2890
      %v2892 = vmul.f32 %v2868, 1.442695
      %v2893 = vpow.pop %v2892
      %v2894 = vmul.f32 %v2869, 1.442695
      %v2895 = vpow.pop %v2894
      %v2896 = vmul.f32 %v2870, 1.442695
      %v2897 = vpow.pop %v2896
      %v2898 = vmul.f32 %v2871, 1.442695
      %v2899 = vpow.pop %v2898
      %v2900 = vmul.f32 %v2872, 1.442695
      %v2901 = vpow.pop %v2900
      %v2902 = vmul.f32 %v2873, 1.442695
      %v2903 = vpow.pop %v2902
      %v2904 = vmul.f32 %v2874, 1.442695
      %v2905 = vpow.pop %v2904
      %v2906 = vmul.f32 %v2875, 1.442695
      %v2907 = vpow.pop %v2906
      %v2908 = vsel %vm1210, %v2877, 0.0
      %2909 = vadd.xlane.f32.xlu0 %v2908
      %v2910 = vpop.xlane.xlu0 %2909
      %v2911 = vsel %vm1210, %v2879, 0.0
      %2912 = vadd.xlane.f32.xlu0 %v2911
      %v2913 = vpop.xlane.xlu0 %2912
      %v2914 = vsel %vm1210, %v2881, 0.0
      %2915 = vadd.xlane.f32.xlu0 %v2914
      %v2916 = vpop.xlane.xlu0 %2915
      %v2917 = vsel %vm1210, %v2883, 0.0
      %2918 = vadd.xlane.f32.xlu0 %v2917
      %v2919 = vpop.xlane.xlu0 %2918
      %v2920 = vsel %vm1210, %v2885, 0.0
      %2921 = vadd.xlane.f32.xlu0 %v2920
      %v2922 = vpop.xlane.xlu0 %2921
      %v2923 = vsel %vm1210, %v2887, 0.0
      %2924 = vadd.xlane.f32.xlu0 %v2923
      %v2925 = vpop.xlane.xlu0 %2924
      %v2926 = vsel %vm1210, %v2889, 0.0
      %2927 = vadd.xlane.f32.xlu0 %v2926
      %v2928 = vpop.xlane.xlu0 %2927
      %v2929 = vsel %vm1210, %v2891, 0.0
      %2930 = vadd.xlane.f32.xlu0 %v2929
      %v2931 = vpop.xlane.xlu0 %2930
      %v2932 = vsel %vm1210, %v2893, 0.0
      %2933 = vadd.xlane.f32.xlu0 %v2932
      %v2934 = vpop.xlane.xlu0 %2933
      %v2935 = vsel %vm1210, %v2895, 0.0
      %2936 = vadd.xlane.f32.xlu0 %v2935
      %v2937 = vpop.xlane.xlu0 %2936
      %v2938 = vsel %vm1210, %v2897, 0.0
      %2939 = vadd.xlane.f32.xlu0 %v2938
      %v2940 = vpop.xlane.xlu0 %2939
      %v2941 = vsel %vm1210, %v2899, 0.0
      %2942 = vadd.xlane.f32.xlu0 %v2941
      %v2943 = vpop.xlane.xlu0 %2942
      %v2944 = vsel %vm1210, %v2901, 0.0
      %2945 = vadd.xlane.f32.xlu0 %v2944
      %v2946 = vpop.xlane.xlu0 %2945
      %v2947 = vsel %vm1210, %v2903, 0.0
      %2948 = vadd.xlane.f32.xlu0 %v2947
      %v2949 = vpop.xlane.xlu0 %2948
      %v2950 = vsel %vm1210, %v2905, 0.0
      %2951 = vadd.xlane.f32.xlu0 %v2950
      %v2952 = vpop.xlane.xlu0 %2951
      %v2953 = vsel %vm1210, %v2907, 0.0
      %2954 = vadd.xlane.f32.xlu0 %v2953
      %v2955 = vpop.xlane.xlu0 %2954
      %v2956 = vrcp.pop %v2910
      %v2957 = vrcp.pop %v2913
      %v2958 = vrcp.pop %v2916
      %v2959 = vrcp.pop %v2919
      %v2960 = vrcp.pop %v2922
      %v2961 = vrcp.pop %v2925
      %v2962 = vrcp.pop %v2928
      %v2963 = vrcp.pop %v2931
      %v2964 = vrcp.pop %v2934
      %v2965 = vrcp.pop %v2937
      %v2966 = vrcp.pop %v2940
      %v2967 = vrcp.pop %v2943
      %v2968 = vrcp.pop %v2946
      %v2969 = vrcp.pop %v2949
      %v2970 = vrcp.pop %v2952
      %v2971 = vrcp.pop %v2955
      %v2972 = vmul.f32 %v2877, %v2956
      %v2973 = vmul.f32 %v2879, %v2957
      %v2974 = vmul.f32 %v2881, %v2958
      %v2975 = vmul.f32 %v2883, %v2959
      %v2976 = vmul.f32 %v2885, %v2960
      %v2977 = vmul.f32 %v2887, %v2961
      %v2978 = vmul.f32 %v2889, %v2962
      %v2979 = vmul.f32 %v2891, %v2963
      %v2980 = vmul.f32 %v2893, %v2964
      %v2981 = vmul.f32 %v2895, %v2965
      %v2982 = vmul.f32 %v2897, %v2966
      %v2983 = vmul.f32 %v2899, %v2967
      %v2984 = vmul.f32 %v2901, %v2968
      %v2985 = vmul.f32 %v2903, %v2969
      %v2986 = vmul.f32 %v2905, %v2970
      %v2987 = vmul.f32 %v2907, %v2971
      %2988 = vrot.lane.b32.xlu0 %v387, 100
      %v2989 = vpop.permute.xlu0 %2988
      %2990 = vrot.lane.b32.xlu0 %v392, 100
      %v2991 = vpop.permute.xlu0 %2990
      %v2995 = vsel %vm1210, %v2972, 0
      %v2998 = vsel %vm1210, %v2973, 0
      %3000 = vmatprep.subr.mxu0 0.0
      %3001 = vmatpush1.msra.mxu0 0.0
      %3002 = vmatprep.subr.mxu0 0.0
      %3003 = vmatpush1.msra.mxu0 0.0
      %3004 = vmatprep.subr.mxu0 0.0
      %3005 = vmatpush1.msra.mxu0 0.0
      %3006 = vmatprep.subr.mxu0 0.0
      %3007 = vmatpush1.msra.mxu0 0.0
      %3008 = vmatprep.subr.mxu0 0.0
      %3009 = vmatpush1.msra.mxu0 0.0
      %3010 = vmatprep.subr.mxu0 0.0
      %3011 = vmatpush1.msra.mxu0 0.0
      %3012 = vmatprep.subr.mxu0 0.0
      %3013 = vmatpush1.msra.mxu0 0.0
      %3014 = vmatprep.subr.mxu0 0.0
      %3015 = vmatpush1.msra.mxu0 0.0
      %3016 = vmatprep.subr.mxu0 0.0
      %3017 = vmatpush1.msra.mxu0 0.0
      %3018 = vmatprep.subr.mxu0 0.0
      %3019 = vmatpush1.msra.mxu0 0.0
      %3020 = vmatprep.subr.mxu0 0.0
      %3021 = vmatpush1.msra.mxu0 0.0
      %3022 = vmatprep.subr.mxu0 0.0
      %3023 = vmatpush1.msra.mxu0 0.0
      %3024 = vmatprep.subr.mxu0 0.0
      %3025 = vmatpush1.msra.mxu0 0.0
      %3026 = vmatprep.subr.mxu0 0.0
      %3027 = vmatpush1.msra.mxu0 0.0
      %3028 = vmatprep.subr.mxu0 0.0
      %3029 = vmatpush1.msra.mxu0 %v2991
      %3030 = vmatprep.subr.mxu0 0.0
      %3031 = vmatpush1.msra.mxu0 %v2989
      %3032 = vmatprep.subr.mxu0 0.0
      %3033 = vmatpush2.msra.mxu0 0.0
      %3034 = vmatprep.subr.mxu0 0.0
      %3035 = vmatpush2.msra.mxu0 0.0
      %3036 = vmatprep.subr.mxu0 0.0
      %3037 = vmatpush2.msra.mxu0 0.0
      %3038 = vmatprep.subr.mxu0 0.0
      %3039 = vmatpush2.msra.mxu0 0.0
      %3040 = vmatprep.subr.mxu0 0.0
      %3041 = vmatpush2.msra.mxu0 0.0
      %3042 = vmatprep.subr.mxu0 0.0
      %3043 = vmatpush2.msra.mxu0 0.0
      %3044 = vmatprep.subr.mxu0 0.0
      %3045 = vmatpush2.msra.mxu0 0.0
      %3046 = vmatprep.subr.mxu0 0.0
      %3047 = vmatpush2.msra.mxu0 0.0
      %3048 = vmatprep.subr.mxu0 0.0
      %3049 = vmatpush2.msra.mxu0 0.0
      %3050 = vmatprep.subr.mxu0 0.0
      %3051 = vmatpush2.msra.mxu0 0.0
      %3052 = vmatprep.subr.mxu0 0.0
      %3053 = vmatpush2.msra.mxu0 0.0
      %3054 = vmatprep.subr.mxu0 0.0
      %3055 = vmatpush2.msra.mxu0 0.0
      %3056 = vmatprep.subr.mxu0 0.0
      %3057 = vmatpush2.msra.mxu0 0.0
      %3058 = vmatprep.subr.mxu0 0.0
      %3059 = vmatpush2.msra.mxu0 0.0
      %3060 = vmatprep.subr.mxu0 0.0
      %3061 = vmatpush2.msra.mxu0 0.0
      %3062 = vmatprep.subr.mxu0 0.0
      %3063 = vmatpush2.msra.mxu0 0.0
      %3064 = vmatprep.mubr.f32.mxu0 0.0
      %3065 = vmatmul.mubr.f32.gmra.mxu0 %v2995
      %v3066 = vpop.f32.mrf.mxu0
      %v3067 = vadd.f32 0.0, %v3066
      %v3068 = vpop.f32.mrf.mxu0
      %3069 = vmatprep.mubr.f32.mxu0 0.0
      %3070 = vmatmul.mubr.f32.gmra.mxu0 %v2998
      %v3071 = vpop.f32.mrf.mxu0
      %v3072 = vadd.f32 0.0, %v3071
      %v3073 = vpop.f32.mrf.mxu0
      %3074 = vdwg.mxu0
      %3075 = vrot.lane.b32.xlu0 %v397, 100
      %v3076 = vpop.permute.xlu0 %3075
      %3077 = vrot.lane.b32.xlu0 %v402, 100
      %v3078 = vpop.permute.xlu0 %3077
      %v3082 = vsel %vm1210, %v2974, 0
      %v3085 = vsel %vm1210, %v2975, 0
      %3087 = vmatprep.subr.mxu0 0.0
      %3088 = vmatpush1.msra.mxu0 0.0
      %3089 = vmatprep.subr.mxu0 0.0
      %3090 = vmatpush1.msra.mxu0 0.0
      %3091 = vmatprep.subr.mxu0 0.0
      %3092 = vmatpush1.msra.mxu0 0.0
      %3093 = vmatprep.subr.mxu0 0.0
      %3094 = vmatpush1.msra.mxu0 0.0
      %3095 = vmatprep.subr.mxu0 0.0
      %3096 = vmatpush1.msra.mxu0 0.0
      %3097 = vmatprep.subr.mxu0 0.0
      %3098 = vmatpush1.msra.mxu0 0.0
      %3099 = vmatprep.subr.mxu0 0.0
      %3100 = vmatpush1.msra.mxu0 0.0
      %3101 = vmatprep.subr.mxu0 0.0
      %3102 = vmatpush1.msra.mxu0 0.0
      %3103 = vmatprep.subr.mxu0 0.0
      %3104 = vmatpush1.msra.mxu0 0.0
      %3105 = vmatprep.subr.mxu0 0.0
      %3106 = vmatpush1.msra.mxu0 0.0
      %3107 = vmatprep.subr.mxu0 0.0
      %3108 = vmatpush1.msra.mxu0 0.0
      %3109 = vmatprep.subr.mxu0 0.0
      %3110 = vmatpush1.msra.mxu0 0.0
      %3111 = vmatprep.subr.mxu0 0.0
      %3112 = vmatpush1.msra.mxu0 0.0
      %3113 = vmatprep.subr.mxu0 0.0
      %3114 = vmatpush1.msra.mxu0 0.0
      %3115 = vmatprep.subr.mxu0 0.0
      %3116 = vmatpush1.msra.mxu0 %v3078
      %3117 = vmatprep.subr.mxu0 0.0
      %3118 = vmatpush1.msra.mxu0 %v3076
      %3119 = vmatprep.subr.mxu0 0.0
      %3120 = vmatpush2.msra.mxu0 0.0
      %3121 = vmatprep.subr.mxu0 0.0
      %3122 = vmatpush2.msra.mxu0 0.0
      %3123 = vmatprep.subr.mxu0 0.0
      %3124 = vmatpush2.msra.mxu0 0.0
      %3125 = vmatprep.subr.mxu0 0.0
      %3126 = vmatpush2.msra.mxu0 0.0
      %3127 = vmatprep.subr.mxu0 0.0
      %3128 = vmatpush2.msra.mxu0 0.0
      %3129 = vmatprep.subr.mxu0 0.0
      %3130 = vmatpush2.msra.mxu0 0.0
      %3131 = vmatprep.subr.mxu0 0.0
      %3132 = vmatpush2.msra.mxu0 0.0
      %3133 = vmatprep.subr.mxu0 0.0
      %3134 = vmatpush2.msra.mxu0 0.0
      %3135 = vmatprep.subr.mxu0 0.0
      %3136 = vmatpush2.msra.mxu0 0.0
      %3137 = vmatprep.subr.mxu0 0.0
      %3138 = vmatpush2.msra.mxu0 0.0
      %3139 = vmatprep.subr.mxu0 0.0
      %3140 = vmatpush2.msra.mxu0 0.0
      %3141 = vmatprep.subr.mxu0 0.0
      %3142 = vmatpush2.msra.mxu0 0.0
      %3143 = vmatprep.subr.mxu0 0.0
      %3144 = vmatpush2.msra.mxu0 0.0
      %3145 = vmatprep.subr.mxu0 0.0
      %3146 = vmatpush2.msra.mxu0 0.0
      %3147 = vmatprep.subr.mxu0 0.0
      %3148 = vmatpush2.msra.mxu0 0.0
      %3149 = vmatprep.subr.mxu0 0.0
      %3150 = vmatpush2.msra.mxu0 0.0
      %3151 = vmatprep.mubr.f32.mxu0 0.0
      %3152 = vmatmul.mubr.f32.gmra.mxu0 %v3082
      %v3153 = vpop.f32.mrf.mxu0
      %v3154 = vadd.f32 0.0, %v3153
      %v3155 = vpop.f32.mrf.mxu0
      %3156 = vmatprep.mubr.f32.mxu0 0.0
      %3157 = vmatmul.mubr.f32.gmra.mxu0 %v3085
      %v3158 = vpop.f32.mrf.mxu0
      %v3159 = vadd.f32 0.0, %v3158
      %v3160 = vpop.f32.mrf.mxu0
      %3161 = vdwg.mxu0
      %3162 = vrot.lane.b32.xlu0 %v407, 100
      %v3163 = vpop.permute.xlu0 %3162
      %3164 = vrot.lane.b32.xlu0 %v412, 100
      %v3165 = vpop.permute.xlu0 %3164
      %v3169 = vsel %vm1210, %v2976, 0
      %v3172 = vsel %vm1210, %v2977, 0
      %3174 = vmatprep.subr.mxu0 0.0
      %3175 = vmatpush1.msra.mxu0 0.0
      %3176 = vmatprep.subr.mxu0 0.0
      %3177 = vmatpush1.msra.mxu0 0.0
      %3178 = vmatprep.subr.mxu0 0.0
      %3179 = vmatpush1.msra.mxu0 0.0
      %3180 = vmatprep.subr.mxu0 0.0
      %3181 = vmatpush1.msra.mxu0 0.0
      %3182 = vmatprep.subr.mxu0 0.0
      %3183 = vmatpush1.msra.mxu0 0.0
      %3184 = vmatprep.subr.mxu0 0.0
      %3185 = vmatpush1.msra.mxu0 0.0
      %3186 = vmatprep.subr.mxu0 0.0
      %3187 = vmatpush1.msra.mxu0 0.0
      %3188 = vmatprep.subr.mxu0 0.0
      %3189 = vmatpush1.msra.mxu0 0.0
      %3190 = vmatprep.subr.mxu0 0.0
      %3191 = vmatpush1.msra.mxu0 0.0
      %3192 = vmatprep.subr.mxu0 0.0
      %3193 = vmatpush1.msra.mxu0 0.0
      %3194 = vmatprep.subr.mxu0 0.0
      %3195 = vmatpush1.msra.mxu0 0.0
      %3196 = vmatprep.subr.mxu0 0.0
      %3197 = vmatpush1.msra.mxu0 0.0
      %3198 = vmatprep.subr.mxu0 0.0
      %3199 = vmatpush1.msra.mxu0 0.0
      %3200 = vmatprep.subr.mxu0 0.0
      %3201 = vmatpush1.msra.mxu0 0.0
      %3202 = vmatprep.subr.mxu0 0.0
      %3203 = vmatpush1.msra.mxu0 %v3165
      %3204 = vmatprep.subr.mxu0 0.0
      %3205 = vmatpush1.msra.mxu0 %v3163
      %3206 = vmatprep.subr.mxu0 0.0
      %3207 = vmatpush2.msra.mxu0 0.0
      %3208 = vmatprep.subr.mxu0 0.0
      %3209 = vmatpush2.msra.mxu0 0.0
      %3210 = vmatprep.subr.mxu0 0.0
      %3211 = vmatpush2.msra.mxu0 0.0
      %3212 = vmatprep.subr.mxu0 0.0
      %3213 = vmatpush2.msra.mxu0 0.0
      %3214 = vmatprep.subr.mxu0 0.0
      %3215 = vmatpush2.msra.mxu0 0.0
      %3216 = vmatprep.subr.mxu0 0.0
      %3217 = vmatpush2.msra.mxu0 0.0
      %3218 = vmatprep.subr.mxu0 0.0
      %3219 = vmatpush2.msra.mxu0 0.0
      %3220 = vmatprep.subr.mxu0 0.0
      %3221 = vmatpush2.msra.mxu0 0.0
      %3222 = vmatprep.subr.mxu0 0.0
      %3223 = vmatpush2.msra.mxu0 0.0
      %3224 = vmatprep.subr.mxu0 0.0
      %3225 = vmatpush2.msra.mxu0 0.0
      %3226 = vmatprep.subr.mxu0 0.0
      %3227 = vmatpush2.msra.mxu0 0.0
      %3228 = vmatprep.subr.mxu0 0.0
      %3229 = vmatpush2.msra.mxu0 0.0
      %3230 = vmatprep.subr.mxu0 0.0
      %3231 = vmatpush2.msra.mxu0 0.0
      %3232 = vmatprep.subr.mxu0 0.0
      %3233 = vmatpush2.msra.mxu0 0.0
      %3234 = vmatprep.subr.mxu0 0.0
      %3235 = vmatpush2.msra.mxu0 0.0
      %3236 = vmatprep.subr.mxu0 0.0
      %3237 = vmatpush2.msra.mxu0 0.0
      %3238 = vmatprep.mubr.f32.mxu0 0.0
      %3239 = vmatmul.mubr.f32.gmra.mxu0 %v3169
      %v3240 = vpop.f32.mrf.mxu0
      %v3241 = vadd.f32 0.0, %v3240
      %v3242 = vpop.f32.mrf.mxu0
      %3243 = vmatprep.mubr.f32.mxu0 0.0
      %3244 = vmatmul.mubr.f32.gmra.mxu0 %v3172
      %v3245 = vpop.f32.mrf.mxu0
      %v3246 = vadd.f32 0.0, %v3245
      %v3247 = vpop.f32.mrf.mxu0
      %3248 = vdwg.mxu0
      %3249 = vrot.lane.b32.xlu0 %v417, 100
      %v3250 = vpop.permute.xlu0 %3249
      %3251 = vrot.lane.b32.xlu0 %v422, 100
      %v3252 = vpop.permute.xlu0 %3251
      %v3256 = vsel %vm1210, %v2978, 0
      %v3259 = vsel %vm1210, %v2979, 0
      %3261 = vmatprep.subr.mxu0 0.0
      %3262 = vmatpush1.msra.mxu0 0.0
      %3263 = vmatprep.subr.mxu0 0.0
      %3264 = vmatpush1.msra.mxu0 0.0
      %3265 = vmatprep.subr.mxu0 0.0
      %3266 = vmatpush1.msra.mxu0 0.0
      %3267 = vmatprep.subr.mxu0 0.0
      %3268 = vmatpush1.msra.mxu0 0.0
      %3269 = vmatprep.subr.mxu0 0.0
      %3270 = vmatpush1.msra.mxu0 0.0
      %3271 = vmatprep.subr.mxu0 0.0
      %3272 = vmatpush1.msra.mxu0 0.0
      %3273 = vmatprep.subr.mxu0 0.0
      %3274 = vmatpush1.msra.mxu0 0.0
      %3275 = vmatprep.subr.mxu0 0.0
      %3276 = vmatpush1.msra.mxu0 0.0
      %3277 = vmatprep.subr.mxu0 0.0
      %3278 = vmatpush1.msra.mxu0 0.0
      %3279 = vmatprep.subr.mxu0 0.0
      %3280 = vmatpush1.msra.mxu0 0.0
      %3281 = vmatprep.subr.mxu0 0.0
      %3282 = vmatpush1.msra.mxu0 0.0
      %3283 = vmatprep.subr.mxu0 0.0
      %3284 = vmatpush1.msra.mxu0 0.0
      %3285 = vmatprep.subr.mxu0 0.0
      %3286 = vmatpush1.msra.mxu0 0.0
      %3287 = vmatprep.subr.mxu0 0.0
      %3288 = vmatpush1.msra.mxu0 0.0
      %3289 = vmatprep.subr.mxu0 0.0
      %3290 = vmatpush1.msra.mxu0 %v3252
      %3291 = vmatprep.subr.mxu0 0.0
      %3292 = vmatpush1.msra.mxu0 %v3250
      %3293 = vmatprep.subr.mxu0 0.0
      %3294 = vmatpush2.msra.mxu0 0.0
      %3295 = vmatprep.subr.mxu0 0.0
      %3296 = vmatpush2.msra.mxu0 0.0
      %3297 = vmatprep.subr.mxu0 0.0
      %3298 = vmatpush2.msra.mxu0 0.0
      %3299 = vmatprep.subr.mxu0 0.0
      %3300 = vmatpush2.msra.mxu0 0.0
      %3301 = vmatprep.subr.mxu0 0.0
      %3302 = vmatpush2.msra.mxu0 0.0
      %3303 = vmatprep.subr.mxu0 0.0
      %3304 = vmatpush2.msra.mxu0 0.0
      %3305 = vmatprep.subr.mxu0 0.0
      %3306 = vmatpush2.msra.mxu0 0.0
      %3307 = vmatprep.subr.mxu0 0.0
      %3308 = vmatpush2.msra.mxu0 0.0
      %3309 = vmatprep.subr.mxu0 0.0
      %3310 = vmatpush2.msra.mxu0 0.0
      %3311 = vmatprep.subr.mxu0 0.0
      %3312 = vmatpush2.msra.mxu0 0.0
      %3313 = vmatprep.subr.mxu0 0.0
      %3314 = vmatpush2.msra.mxu0 0.0
      %3315 = vmatprep.subr.mxu0 0.0
      %3316 = vmatpush2.msra.mxu0 0.0
      %3317 = vmatprep.subr.mxu0 0.0
      %3318 = vmatpush2.msra.mxu0 0.0
      %3319 = vmatprep.subr.mxu0 0.0
      %3320 = vmatpush2.msra.mxu0 0.0
      %3321 = vmatprep.subr.mxu0 0.0
      %3322 = vmatpush2.msra.mxu0 0.0
      %3323 = vmatprep.subr.mxu0 0.0
      %3324 = vmatpush2.msra.mxu0 0.0
      %3325 = vmatprep.mubr.f32.mxu0 0.0
      %3326 = vmatmul.mubr.f32.gmra.mxu0 %v3256
      %v3327 = vpop.f32.mrf.mxu0
      %v3328 = vadd.f32 0.0, %v3327
      %v3329 = vpop.f32.mrf.mxu0
      %3330 = vmatprep.mubr.f32.mxu0 0.0
      %3331 = vmatmul.mubr.f32.gmra.mxu0 %v3259
      %v3332 = vpop.f32.mrf.mxu0
      %v3333 = vadd.f32 0.0, %v3332
      %v3334 = vpop.f32.mrf.mxu0
      %3335 = vdwg.mxu0
      %3336 = vrot.lane.b32.xlu0 %v427, 100
      %v3337 = vpop.permute.xlu0 %3336
      %3338 = vrot.lane.b32.xlu0 %v432, 100
      %v3339 = vpop.permute.xlu0 %3338
      %v3343 = vsel %vm1210, %v2980, 0
      %v3346 = vsel %vm1210, %v2981, 0
      %3348 = vmatprep.subr.mxu0 0.0
      %3349 = vmatpush1.msra.mxu0 0.0
      %3350 = vmatprep.subr.mxu0 0.0
      %3351 = vmatpush1.msra.mxu0 0.0
      %3352 = vmatprep.subr.mxu0 0.0
      %3353 = vmatpush1.msra.mxu0 0.0
      %3354 = vmatprep.subr.mxu0 0.0
      %3355 = vmatpush1.msra.mxu0 0.0
      %3356 = vmatprep.subr.mxu0 0.0
      %3357 = vmatpush1.msra.mxu0 0.0
      %3358 = vmatprep.subr.mxu0 0.0
      %3359 = vmatpush1.msra.mxu0 0.0
      %3360 = vmatprep.subr.mxu0 0.0
      %3361 = vmatpush1.msra.mxu0 0.0
      %3362 = vmatprep.subr.mxu0 0.0
      %3363 = vmatpush1.msra.mxu0 0.0
      %3364 = vmatprep.subr.mxu0 0.0
      %3365 = vmatpush1.msra.mxu0 0.0
      %3366 = vmatprep.subr.mxu0 0.0
      %3367 = vmatpush1.msra.mxu0 0.0
      %3368 = vmatprep.subr.mxu0 0.0
      %3369 = vmatpush1.msra.mxu0 0.0
      %3370 = vmatprep.subr.mxu0 0.0
      %3371 = vmatpush1.msra.mxu0 0.0
      %3372 = vmatprep.subr.mxu0 0.0
      %3373 = vmatpush1.msra.mxu0 0.0
      %3374 = vmatprep.subr.mxu0 0.0
      %3375 = vmatpush1.msra.mxu0 0.0
      %3376 = vmatprep.subr.mxu0 0.0
      %3377 = vmatpush1.msra.mxu0 %v3339
      %3378 = vmatprep.subr.mxu0 0.0
      %3379 = vmatpush1.msra.mxu0 %v3337
      %3380 = vmatprep.subr.mxu0 0.0
      %3381 = vmatpush2.msra.mxu0 0.0
      %3382 = vmatprep.subr.mxu0 0.0
      %3383 = vmatpush2.msra.mxu0 0.0
      %3384 = vmatprep.subr.mxu0 0.0
      %3385 = vmatpush2.msra.mxu0 0.0
      %3386 = vmatprep.subr.mxu0 0.0
      %3387 = vmatpush2.msra.mxu0 0.0
      %3388 = vmatprep.subr.mxu0 0.0
      %3389 = vmatpush2.msra.mxu0 0.0
      %3390 = vmatprep.subr.mxu0 0.0
      %3391 = vmatpush2.msra.mxu0 0.0
      %3392 = vmatprep.subr.mxu0 0.0
      %3393 = vmatpush2.msra.mxu0 0.0
      %3394 = vmatprep.subr.mxu0 0.0
      %3395 = vmatpush2.msra.mxu0 0.0
      %3396 = vmatprep.subr.mxu0 0.0
      %3397 = vmatpush2.msra.mxu0 0.0
      %3398 = vmatprep.subr.mxu0 0.0
      %3399 = vmatpush2.msra.mxu0 0.0
      %3400 = vmatprep.subr.mxu0 0.0
      %3401 = vmatpush2.msra.mxu0 0.0
      %3402 = vmatprep.subr.mxu0 0.0
      %3403 = vmatpush2.msra.mxu0 0.0
      %3404 = vmatprep.subr.mxu0 0.0
      %3405 = vmatpush2.msra.mxu0 0.0
      %3406 = vmatprep.subr.mxu0 0.0
      %3407 = vmatpush2.msra.mxu0 0.0
      %3408 = vmatprep.subr.mxu0 0.0
      %3409 = vmatpush2.msra.mxu0 0.0
      %3410 = vmatprep.subr.mxu0 0.0
      %3411 = vmatpush2.msra.mxu0 0.0
      %3412 = vmatprep.mubr.f32.mxu0 0.0
      %3413 = vmatmul.mubr.f32.gmra.mxu0 %v3343
      %v3414 = vpop.f32.mrf.mxu0
      %v3415 = vadd.f32 0.0, %v3414
      %v3416 = vpop.f32.mrf.mxu0
      %3417 = vmatprep.mubr.f32.mxu0 0.0
      %3418 = vmatmul.mubr.f32.gmra.mxu0 %v3346
      %v3419 = vpop.f32.mrf.mxu0
      %v3420 = vadd.f32 0.0, %v3419
      %v3421 = vpop.f32.mrf.mxu0
      %3422 = vdwg.mxu0
      %3423 = vrot.lane.b32.xlu0 %v437, 100
      %v3424 = vpop.permute.xlu0 %3423
      %3425 = vrot.lane.b32.xlu0 %v442, 100
      %v3426 = vpop.permute.xlu0 %3425
      %v3430 = vsel %vm1210, %v2982, 0
      %v3433 = vsel %vm1210, %v2983, 0
      %3435 = vmatprep.subr.mxu0 0.0
      %3436 = vmatpush1.msra.mxu0 0.0
      %3437 = vmatprep.subr.mxu0 0.0
      %3438 = vmatpush1.msra.mxu0 0.0
      %3439 = vmatprep.subr.mxu0 0.0
      %3440 = vmatpush1.msra.mxu0 0.0
      %3441 = vmatprep.subr.mxu0 0.0
      %3442 = vmatpush1.msra.mxu0 0.0
      %3443 = vmatprep.subr.mxu0 0.0
      %3444 = vmatpush1.msra.mxu0 0.0
      %3445 = vmatprep.subr.mxu0 0.0
      %3446 = vmatpush1.msra.mxu0 0.0
      %3447 = vmatprep.subr.mxu0 0.0
      %3448 = vmatpush1.msra.mxu0 0.0
      %3449 = vmatprep.subr.mxu0 0.0
      %3450 = vmatpush1.msra.mxu0 0.0
      %3451 = vmatprep.subr.mxu0 0.0
      %3452 = vmatpush1.msra.mxu0 0.0
      %3453 = vmatprep.subr.mxu0 0.0
      %3454 = vmatpush1.msra.mxu0 0.0
      %3455 = vmatprep.subr.mxu0 0.0
      %3456 = vmatpush1.msra.mxu0 0.0
      %3457 = vmatprep.subr.mxu0 0.0
      %3458 = vmatpush1.msra.mxu0 0.0
      %3459 = vmatprep.subr.mxu0 0.0
      %3460 = vmatpush1.msra.mxu0 0.0
      %3461 = vmatprep.subr.mxu0 0.0
      %3462 = vmatpush1.msra.mxu0 0.0
      %3463 = vmatprep.subr.mxu0 0.0
      %3464 = vmatpush1.msra.mxu0 %v3426
      %3465 = vmatprep.subr.mxu0 0.0
      %3466 = vmatpush1.msra.mxu0 %v3424
      %3467 = vmatprep.subr.mxu0 0.0
      %3468 = vmatpush2.msra.mxu0 0.0
      %3469 = vmatprep.subr.mxu0 0.0
      %3470 = vmatpush2.msra.mxu0 0.0
      %3471 = vmatprep.subr.mxu0 0.0
      %3472 = vmatpush2.msra.mxu0 0.0
      %3473 = vmatprep.subr.mxu0 0.0
      %3474 = vmatpush2.msra.mxu0 0.0
      %3475 = vmatprep.subr.mxu0 0.0
      %3476 = vmatpush2.msra.mxu0 0.0
      %3477 = vmatprep.subr.mxu0 0.0
      %3478 = vmatpush2.msra.mxu0 0.0
      %3479 = vmatprep.subr.mxu0 0.0
      %3480 = vmatpush2.msra.mxu0 0.0
      %3481 = vmatprep.subr.mxu0 0.0
      %3482 = vmatpush2.msra.mxu0 0.0
      %3483 = vmatprep.subr.mxu0 0.0
      %3484 = vmatpush2.msra.mxu0 0.0
      %3485 = vmatprep.subr.mxu0 0.0
      %3486 = vmatpush2.msra.mxu0 0.0
      %3487 = vmatprep.subr.mxu0 0.0
      %3488 = vmatpush2.msra.mxu0 0.0
      %3489 = vmatprep.subr.mxu0 0.0
      %3490 = vmatpush2.msra.mxu0 0.0
      %3491 = vmatprep.subr.mxu0 0.0
      %3492 = vmatpush2.msra.mxu0 0.0
      %3493 = vmatprep.subr.mxu0 0.0
      %3494 = vmatpush2.msra.mxu0 0.0
      %3495 = vmatprep.subr.mxu0 0.0
      %3496 = vmatpush2.msra.mxu0 0.0
      %3497 = vmatprep.subr.mxu0 0.0
      %3498 = vmatpush2.msra.mxu0 0.0
      %3499 = vmatprep.mubr.f32.mxu0 0.0
      %3500 = vmatmul.mubr.f32.gmra.mxu0 %v3430
      %v3501 = vpop.f32.mrf.mxu0
      %v3502 = vadd.f32 0.0, %v3501
      %v3503 = vpop.f32.mrf.mxu0
      %3504 = vmatprep.mubr.f32.mxu0 0.0
      %3505 = vmatmul.mubr.f32.gmra.mxu0 %v3433
      %v3506 = vpop.f32.mrf.mxu0
      %v3507 = vadd.f32 0.0, %v3506
      %v3508 = vpop.f32.mrf.mxu0
      %3509 = vdwg.mxu0
      %3510 = vrot.lane.b32.xlu0 %v447, 100
      %v3511 = vpop.permute.xlu0 %3510
      %3512 = vrot.lane.b32.xlu0 %v452, 100
      %v3513 = vpop.permute.xlu0 %3512
      %v3517 = vsel %vm1210, %v2984, 0
      %v3520 = vsel %vm1210, %v2985, 0
      %3522 = vmatprep.subr.mxu0 0.0
      %3523 = vmatpush1.msra.mxu0 0.0
      %3524 = vmatprep.subr.mxu0 0.0
      %3525 = vmatpush1.msra.mxu0 0.0
      %3526 = vmatprep.subr.mxu0 0.0
      %3527 = vmatpush1.msra.mxu0 0.0
      %3528 = vmatprep.subr.mxu0 0.0
      %3529 = vmatpush1.msra.mxu0 0.0
      %3530 = vmatprep.subr.mxu0 0.0
      %3531 = vmatpush1.msra.mxu0 0.0
      %3532 = vmatprep.subr.mxu0 0.0
      %3533 = vmatpush1.msra.mxu0 0.0
      %3534 = vmatprep.subr.mxu0 0.0
      %3535 = vmatpush1.msra.mxu0 0.0
      %3536 = vmatprep.subr.mxu0 0.0
      %3537 = vmatpush1.msra.mxu0 0.0
      %3538 = vmatprep.subr.mxu0 0.0
      %3539 = vmatpush1.msra.mxu0 0.0
      %3540 = vmatprep.subr.mxu0 0.0
      %3541 = vmatpush1.msra.mxu0 0.0
      %3542 = vmatprep.subr.mxu0 0.0
      %3543 = vmatpush1.msra.mxu0 0.0
      %3544 = vmatprep.subr.mxu0 0.0
      %3545 = vmatpush1.msra.mxu0 0.0
      %3546 = vmatprep.subr.mxu0 0.0
      %3547 = vmatpush1.msra.mxu0 0.0
      %3548 = vmatprep.subr.mxu0 0.0
      %3549 = vmatpush1.msra.mxu0 0.0
      %3550 = vmatprep.subr.mxu0 0.0
      %3551 = vmatpush1.msra.mxu0 %v3513
      %3552 = vmatprep.subr.mxu0 0.0
      %3553 = vmatpush1.msra.mxu0 %v3511
      %3554 = vmatprep.subr.mxu0 0.0
      %3555 = vmatpush2.msra.mxu0 0.0
      %3556 = vmatprep.subr.mxu0 0.0
      %3557 = vmatpush2.msra.mxu0 0.0
      %3558 = vmatprep.subr.mxu0 0.0
      %3559 = vmatpush2.msra.mxu0 0.0
      %3560 = vmatprep.subr.mxu0 0.0
      %3561 = vmatpush2.msra.mxu0 0.0
      %3562 = vmatprep.subr.mxu0 0.0
      %3563 = vmatpush2.msra.mxu0 0.0
      %3564 = vmatprep.subr.mxu0 0.0
      %3565 = vmatpush2.msra.mxu0 0.0
      %3566 = vmatprep.subr.mxu0 0.0
      %3567 = vmatpush2.msra.mxu0 0.0
      %3568 = vmatprep.subr.mxu0 0.0
      %3569 = vmatpush2.msra.mxu0 0.0
      %3570 = vmatprep.subr.mxu0 0.0
      %3571 = vmatpush2.msra.mxu0 0.0
      %3572 = vmatprep.subr.mxu0 0.0
      %3573 = vmatpush2.msra.mxu0 0.0
      %3574 = vmatprep.subr.mxu0 0.0
      %3575 = vmatpush2.msra.mxu0 0.0
      %3576 = vmatprep.subr.mxu0 0.0
      %3577 = vmatpush2.msra.mxu0 0.0
      %3578 = vmatprep.subr.mxu0 0.0
      %3579 = vmatpush2.msra.mxu0 0.0
      %3580 = vmatprep.subr.mxu0 0.0
      %3581 = vmatpush2.msra.mxu0 0.0
      %3582 = vmatprep.subr.mxu0 0.0
      %3583 = vmatpush2.msra.mxu0 0.0
      %3584 = vmatprep.subr.mxu0 0.0
      %3585 = vmatpush2.msra.mxu0 0.0
      %3586 = vmatprep.mubr.f32.mxu0 0.0
      %3587 = vmatmul.mubr.f32.gmra.mxu0 %v3517
      %v3588 = vpop.f32.mrf.mxu0
      %v3589 = vadd.f32 0.0, %v3588
      %v3590 = vpop.f32.mrf.mxu0
      %3591 = vmatprep.mubr.f32.mxu0 0.0
      %3592 = vmatmul.mubr.f32.gmra.mxu0 %v3520
      %v3593 = vpop.f32.mrf.mxu0
      %v3594 = vadd.f32 0.0, %v3593
      %v3595 = vpop.f32.mrf.mxu0
      %3596 = vdwg.mxu0
      %3597 = vrot.lane.b32.xlu0 %v457, 100
      %v3598 = vpop.permute.xlu0 %3597
      %3599 = vrot.lane.b32.xlu0 %v462, 100
      %v3600 = vpop.permute.xlu0 %3599
      %v3604 = vsel %vm1210, %v2986, 0
      %v3607 = vsel %vm1210, %v2987, 0
      %3609 = vmatprep.subr.mxu0 0.0
      %3610 = vmatpush1.msra.mxu0 0.0
      %3611 = vmatprep.subr.mxu0 0.0
      %3612 = vmatpush1.msra.mxu0 0.0
      %3613 = vmatprep.subr.mxu0 0.0
      %3614 = vmatpush1.msra.mxu0 0.0
      %3615 = vmatprep.subr.mxu0 0.0
      %3616 = vmatpush1.msra.mxu0 0.0
      %3617 = vmatprep.subr.mxu0 0.0
      %3618 = vmatpush1.msra.mxu0 0.0
      %3619 = vmatprep.subr.mxu0 0.0
      %3620 = vmatpush1.msra.mxu0 0.0
      %3621 = vmatprep.subr.mxu0 0.0
      %3622 = vmatpush1.msra.mxu0 0.0
      %3623 = vmatprep.subr.mxu0 0.0
      %3624 = vmatpush1.msra.mxu0 0.0
      %3625 = vmatprep.subr.mxu0 0.0
      %3626 = vmatpush1.msra.mxu0 0.0
      %3627 = vmatprep.subr.mxu0 0.0
      %3628 = vmatpush1.msra.mxu0 0.0
      %3629 = vmatprep.subr.mxu0 0.0
      %3630 = vmatpush1.msra.mxu0 0.0
      %3631 = vmatprep.subr.mxu0 0.0
      %3632 = vmatpush1.msra.mxu0 0.0
      %3633 = vmatprep.subr.mxu0 0.0
      %3634 = vmatpush1.msra.mxu0 0.0
      %3635 = vmatprep.subr.mxu0 0.0
      %3636 = vmatpush1.msra.mxu0 0.0
      %3637 = vmatprep.subr.mxu0 0.0
      %3638 = vmatpush1.msra.mxu0 %v3600
      %3639 = vmatprep.subr.mxu0 0.0
      %3640 = vmatpush1.msra.mxu0 %v3598
      %3641 = vmatprep.subr.mxu0 0.0
      %3642 = vmatpush2.msra.mxu0 0.0
      %3643 = vmatprep.subr.mxu0 0.0
      %3644 = vmatpush2.msra.mxu0 0.0
      %3645 = vmatprep.subr.mxu0 0.0
      %3646 = vmatpush2.msra.mxu0 0.0
      %3647 = vmatprep.subr.mxu0 0.0
      %3648 = vmatpush2.msra.mxu0 0.0
      %3649 = vmatprep.subr.mxu0 0.0
      %3650 = vmatpush2.msra.mxu0 0.0
      %3651 = vmatprep.subr.mxu0 0.0
      %3652 = vmatpush2.msra.mxu0 0.0
      %3653 = vmatprep.subr.mxu0 0.0
      %3654 = vmatpush2.msra.mxu0 0.0
      %3655 = vmatprep.subr.mxu0 0.0
      %3656 = vmatpush2.msra.mxu0 0.0
      %3657 = vmatprep.subr.mxu0 0.0
      %3658 = vmatpush2.msra.mxu0 0.0
      %3659 = vmatprep.subr.mxu0 0.0
      %3660 = vmatpush2.msra.mxu0 0.0
      %3661 = vmatprep.subr.mxu0 0.0
      %3662 = vmatpush2.msra.mxu0 0.0
      %3663 = vmatprep.subr.mxu0 0.0
      %3664 = vmatpush2.msra.mxu0 0.0
      %3665 = vmatprep.subr.mxu0 0.0
      %3666 = vmatpush2.msra.mxu0 0.0
      %3667 = vmatprep.subr.mxu0 0.0
      %3668 = vmatpush2.msra.mxu0 0.0
      %3669 = vmatprep.subr.mxu0 0.0
      %3670 = vmatpush2.msra.mxu0 0.0
      %3671 = vmatprep.subr.mxu0 0.0
      %3672 = vmatpush2.msra.mxu0 0.0
      %3673 = vmatprep.mubr.f32.mxu0 0.0
      %3674 = vmatmul.mubr.f32.gmra.mxu0 %v3604
      %v3675 = vpop.f32.mrf.mxu0
      %v3676 = vadd.f32 0.0, %v3675
      %v3677 = vpop.f32.mrf.mxu0
      %3678 = vmatprep.mubr.f32.mxu0 0.0
      %3679 = vmatmul.mubr.f32.gmra.mxu0 %v3607
      %v3680 = vpop.f32.mrf.mxu0
      %v3681 = vadd.f32 0.0, %v3680
      %v3682 = vpop.f32.mrf.mxu0
      %3683 = vdwg.mxu0
      %v3684 = vld [vmem:[%s3 + $0x4] sm:$0xf]
      %v3686 = vsel %vm487, %v3067, 0
      %v3689 = vsel %vm487, %v3072, 0
      %v3692 = vsel %vm487, %v3154, 0
      %v3695 = vsel %vm487, %v3159, 0
      %v3698 = vsel %vm487, %v3241, 0
      %v3701 = vsel %vm487, %v3246, 0
      %v3704 = vsel %vm487, %v3328, 0
      %v3707 = vsel %vm487, %v3333, 0
      %v3710 = vsel %vm487, %v3415, 0
      %v3713 = vsel %vm487, %v3420, 0
      %v3716 = vsel %vm487, %v3502, 0
      %v3719 = vsel %vm487, %v3507, 0
      %v3722 = vsel %vm487, %v3589, 0
      %v3725 = vsel %vm487, %v3594, 0
      %v3728 = vsel %vm487, %v3676, 0
      %v3731 = vsel %vm487, %v3681, 0
      %v3734 = vsel %vm316, %v3684, 0
      %3736 = vmatprep.subr.mxu0 0.0
      %3737 = vmatpush1.msra.mxu0 0.0
      %3738 = vmatprep.subr.mxu0 0.0
      %3739 = vmatpush1.msra.mxu0 0.0
      %3740 = vmatprep.subr.mxu0 0.0
      %3741 = vmatpush1.msra.mxu0 0.0
      %3742 = vmatprep.subr.mxu0 0.0
      %3743 = vmatpush1.msra.mxu0 0.0
      %3744 = vmatprep.subr.mxu0 0.0
      %3745 = vmatpush1.msra.mxu0 0.0
      %3746 = vmatprep.subr.mxu0 0.0
      %3747 = vmatpush1.msra.mxu0 0.0
      %3748 = vmatprep.subr.mxu0 0.0
      %3749 = vmatpush1.msra.mxu0 0.0
      %3750 = vmatprep.subr.mxu0 0.0
      %3751 = vmatpush1.msra.mxu0 0.0
      %3752 = vmatprep.subr.mxu0 0.0
      %3753 = vmatpush1.msra.mxu0 0.0
      %3754 = vmatprep.subr.mxu0 0.0
      %3755 = vmatpush1.msra.mxu0 0.0
      %3756 = vmatprep.subr.mxu0 0.0
      %3757 = vmatpush1.msra.mxu0 0.0
      %3758 = vmatprep.subr.mxu0 0.0
      %3759 = vmatpush1.msra.mxu0 0.0
      %3760 = vmatprep.subr.mxu0 0.0
      %3761 = vmatpush1.msra.mxu0 0.0
      %3762 = vmatprep.subr.mxu0 0.0
      %3763 = vmatpush1.msra.mxu0 0.0
      %3764 = vmatprep.subr.mxu0 0.0
      %3765 = vmatpush1.msra.mxu0 0.0
      %3766 = vmatprep.subr.mxu0 0.0
      %3767 = vmatpush1.msra.mxu0 %v3734
      %3768 = vmatprep.subr.mxu0 0.0
      %3769 = vmatpush2.msra.mxu0 0.0
      %3770 = vmatprep.subr.mxu0 0.0
      %3771 = vmatpush2.msra.mxu0 0.0
      %3772 = vmatprep.subr.mxu0 0.0
      %3773 = vmatpush2.msra.mxu0 0.0
      %3774 = vmatprep.subr.mxu0 0.0
      %3775 = vmatpush2.msra.mxu0 0.0
      %3776 = vmatprep.subr.mxu0 0.0
      %3777 = vmatpush2.msra.mxu0 0.0
      %3778 = vmatprep.subr.mxu0 0.0
      %3779 = vmatpush2.msra.mxu0 0.0
      %3780 = vmatprep.subr.mxu0 0.0
      %3781 = vmatpush2.msra.mxu0 0.0
      %3782 = vmatprep.subr.mxu0 0.0
      %3783 = vmatpush2.msra.mxu0 0.0
      %3784 = vmatprep.subr.mxu0 0.0
      %3785 = vmatpush2.msra.mxu0 0.0
      %3786 = vmatprep.subr.mxu0 0.0
      %3787 = vmatpush2.msra.mxu0 0.0
      %3788 = vmatprep.subr.mxu0 0.0
      %3789 = vmatpush2.msra.mxu0 0.0
      %3790 = vmatprep.subr.mxu0 0.0
      %3791 = vmatpush2.msra.mxu0 0.0
      %3792 = vmatprep.subr.mxu0 0.0
      %3793 = vmatpush2.msra.mxu0 0.0
      %3794 = vmatprep.subr.mxu0 0.0
      %3795 = vmatpush2.msra.mxu0 0.0
      %3796 = vmatprep.subr.mxu0 0.0
      %3797 = vmatpush2.msra.mxu0 0.0
      %3798 = vmatprep.subr.mxu0 0.0
      %3799 = vmatpush2.msra.mxu0 0.0
      %3800 = vmatprep.mubr.f32.mxu0 0.0
      %3801 = vmatmul.mubr.f32.gmra.mxu0 %v3686
      %v3802 = vpop.f32.mrf.mxu0
      %v3803 = vadd.f32 0.0, %v3802
      %v3804 = vpop.f32.mrf.mxu0
      %3805 = vmatprep.mubr.f32.mxu0 0.0
      %3806 = vmatmul.mubr.f32.gmra.mxu0 %v3689
      %v3807 = vpop.f32.mrf.mxu0
      %v3808 = vadd.f32 0.0, %v3807
      %v3809 = vpop.f32.mrf.mxu0
      %3810 = vmatprep.mubr.f32.mxu0 0.0
      %3811 = vmatmul.mubr.f32.gmra.mxu0 %v3692
      %v3812 = vpop.f32.mrf.mxu0
      %v3813 = vadd.f32 0.0, %v3812
      %v3814 = vpop.f32.mrf.mxu0
      %3815 = vmatprep.mubr.f32.mxu0 0.0
      %3816 = vmatmul.mubr.f32.gmra.mxu0 %v3695
      %v3817 = vpop.f32.mrf.mxu0
      %v3818 = vadd.f32 0.0, %v3817
      %v3819 = vpop.f32.mrf.mxu0
      %3820 = vmatprep.mubr.f32.mxu0 0.0
      %3821 = vmatmul.mubr.f32.gmra.mxu0 %v3698
      %v3822 = vpop.f32.mrf.mxu0
      %v3823 = vadd.f32 0.0, %v3822
      %v3824 = vpop.f32.mrf.mxu0
      %3825 = vmatprep.mubr.f32.mxu0 0.0
      %3826 = vmatmul.mubr.f32.gmra.mxu0 %v3701
      %v3827 = vpop.f32.mrf.mxu0
      %v3828 = vadd.f32 0.0, %v3827
      %v3829 = vpop.f32.mrf.mxu0
      %3830 = vmatprep.mubr.f32.mxu0 0.0
      %3831 = vmatmul.mubr.f32.gmra.mxu0 %v3704
      %v3832 = vpop.f32.mrf.mxu0
      %v3833 = vadd.f32 0.0, %v3832
      %v3834 = vpop.f32.mrf.mxu0
      %3835 = vmatprep.mubr.f32.mxu0 0.0
      %3836 = vmatmul.mubr.f32.gmra.mxu0 %v3707
      %v3837 = vpop.f32.mrf.mxu0
      %v3838 = vadd.f32 0.0, %v3837
      %v3839 = vpop.f32.mrf.mxu0
      %3840 = vmatprep.mubr.f32.mxu0 0.0
      %3841 = vmatmul.mubr.f32.gmra.mxu0 %v3710
      %v3842 = vpop.f32.mrf.mxu0
      %v3843 = vadd.f32 0.0, %v3842
      %v3844 = vpop.f32.mrf.mxu0
      %3845 = vmatprep.mubr.f32.mxu0 0.0
      %3846 = vmatmul.mubr.f32.gmra.mxu0 %v3713
      %v3847 = vpop.f32.mrf.mxu0
      %v3848 = vadd.f32 0.0, %v3847
      %v3849 = vpop.f32.mrf.mxu0
      %3850 = vmatprep.mubr.f32.mxu0 0.0
      %3851 = vmatmul.mubr.f32.gmra.mxu0 %v3716
      %v3852 = vpop.f32.mrf.mxu0
      %v3853 = vadd.f32 0.0, %v3852
      %v3854 = vpop.f32.mrf.mxu0
      %3855 = vmatprep.mubr.f32.mxu0 0.0
      %3856 = vmatmul.mubr.f32.gmra.mxu0 %v3719
      %v3857 = vpop.f32.mrf.mxu0
      %v3858 = vadd.f32 0.0, %v3857
      %v3859 = vpop.f32.mrf.mxu0
      %3860 = vmatprep.mubr.f32.mxu0 0.0
      %3861 = vmatmul.mubr.f32.gmra.mxu0 %v3722
      %v3862 = vpop.f32.mrf.mxu0
      %v3863 = vadd.f32 0.0, %v3862
      %v3864 = vpop.f32.mrf.mxu0
      %3865 = vmatprep.mubr.f32.mxu0 0.0
      %3866 = vmatmul.mubr.f32.gmra.mxu0 %v3725
      %v3867 = vpop.f32.mrf.mxu0
      %v3868 = vadd.f32 0.0, %v3867
      %v3869 = vpop.f32.mrf.mxu0
      %3870 = vmatprep.mubr.f32.mxu0 0.0
      %3871 = vmatmul.mubr.f32.gmra.mxu0 %v3728
      %v3872 = vpop.f32.mrf.mxu0
      %v3873 = vadd.f32 0.0, %v3872
      %v3874 = vpop.f32.mrf.mxu0
      %3875 = vmatprep.mubr.f32.mxu0 0.0
      %3876 = vmatmul.mubr.f32.gmra.mxu0 %v3731
      %v3877 = vpop.f32.mrf.mxu0
      %v3878 = vadd.f32 0.0, %v3877
      %v3879 = vpop.f32.mrf.mxu0
      %3880 = vdwg.mxu0
      %v3882 = vsel %vm487, %v1466, 0
      %v3885 = vsel %vm487, %v1471, 0
      %v3888 = vsel %vm487, %v1553, 0
      %v3891 = vsel %vm487, %v1558, 0
      %v3894 = vsel %vm487, %v1640, 0
      %v3897 = vsel %vm487, %v1645, 0
      %v3900 = vsel %vm487, %v1727, 0
      %v3903 = vsel %vm487, %v1732, 0
      %v3906 = vsel %vm487, %v1814, 0
      %v3909 = vsel %vm487, %v1819, 0
      %v3912 = vsel %vm487, %v1901, 0
      %v3915 = vsel %vm487, %v1906, 0
      %v3918 = vsel %vm487, %v1988, 0
      %v3921 = vsel %vm487, %v1993, 0
      %v3924 = vsel %vm487, %v2075, 0
      %v3927 = vsel %vm487, %v2080, 0
      %v3930 = vsel %vm316, %v2083, 0
      %3932 = vmatprep.subr.mxu0 0.0
      %3933 = vmatpush1.msra.mxu0 0.0
      %3934 = vmatprep.subr.mxu0 0.0
      %3935 = vmatpush1.msra.mxu0 0.0
      %3936 = vmatprep.subr.mxu0 0.0
      %3937 = vmatpush1.msra.mxu0 0.0
      %3938 = vmatprep.subr.mxu0 0.0
      %3939 = vmatpush1.msra.mxu0 0.0
      %3940 = vmatprep.subr.mxu0 0.0
      %3941 = vmatpush1.msra.mxu0 0.0
      %3942 = vmatprep.subr.mxu0 0.0
      %3943 = vmatpush1.msra.mxu0 0.0
      %3944 = vmatprep.subr.mxu0 0.0
      %3945 = vmatpush1.msra.mxu0 0.0
      %3946 = vmatprep.subr.mxu0 0.0
      %3947 = vmatpush1.msra.mxu0 0.0
      %3948 = vmatprep.subr.mxu0 0.0
      %3949 = vmatpush1.msra.mxu0 0.0
      %3950 = vmatprep.subr.mxu0 0.0
      %3951 = vmatpush1.msra.mxu0 0.0
      %3952 = vmatprep.subr.mxu0 0.0
      %3953 = vmatpush1.msra.mxu0 0.0
      %3954 = vmatprep.subr.mxu0 0.0
      %3955 = vmatpush1.msra.mxu0 0.0
      %3956 = vmatprep.subr.mxu0 0.0
      %3957 = vmatpush1.msra.mxu0 0.0
      %3958 = vmatprep.subr.mxu0 0.0
      %3959 = vmatpush1.msra.mxu0 0.0
      %3960 = vmatprep.subr.mxu0 0.0
      %3961 = vmatpush1.msra.mxu0 0.0
      %3962 = vmatprep.subr.mxu0 0.0
      %3963 = vmatpush1.msra.mxu0 %v3930
      %3964 = vmatprep.subr.mxu0 0.0
      %3965 = vmatpush2.msra.mxu0 0.0
      %3966 = vmatprep.subr.mxu0 0.0
      %3967 = vmatpush2.msra.mxu0 0.0
      %3968 = vmatprep.subr.mxu0 0.0
      %3969 = vmatpush2.msra.mxu0 0.0
      %3970 = vmatprep.subr.mxu0 0.0
      %3971 = vmatpush2.msra.mxu0 0.0
      %3972 = vmatprep.subr.mxu0 0.0
      %3973 = vmatpush2.msra.mxu0 0.0
      %3974 = vmatprep.subr.mxu0 0.0
      %3975 = vmatpush2.msra.mxu0 0.0
      %3976 = vmatprep.subr.mxu0 0.0
      %3977 = vmatpush2.msra.mxu0 0.0
      %3978 = vmatprep.subr.mxu0 0.0
      %3979 = vmatpush2.msra.mxu0 0.0
      %3980 = vmatprep.subr.mxu0 0.0
      %3981 = vmatpush2.msra.mxu0 0.0
      %3982 = vmatprep.subr.mxu0 0.0
      %3983 = vmatpush2.msra.mxu0 0.0
      %3984 = vmatprep.subr.mxu0 0.0
      %3985 = vmatpush2.msra.mxu0 0.0
      %3986 = vmatprep.subr.mxu0 0.0
      %3987 = vmatpush2.msra.mxu0 0.0
      %3988 = vmatprep.subr.mxu0 0.0
      %3989 = vmatpush2.msra.mxu0 0.0
      %3990 = vmatprep.subr.mxu0 0.0
      %3991 = vmatpush2.msra.mxu0 0.0
      %3992 = vmatprep.subr.mxu0 0.0
      %3993 = vmatpush2.msra.mxu0 0.0
      %3994 = vmatprep.subr.mxu0 0.0
      %3995 = vmatpush2.msra.mxu0 0.0
      %3996 = vmatprep.mubr.f32.mxu0 0.0
      %3997 = vmatmul.mubr.f32.gmra.mxu0 %v3882
      %v3998 = vpop.f32.mrf.mxu0
      %v3999 = vadd.f32 %v3803, %v3998
      %v4000 = vpop.f32.mrf.mxu0
      %4001 = vmatprep.mubr.f32.mxu0 0.0
      %4002 = vmatmul.mubr.f32.gmra.mxu0 %v3885
      %v4003 = vpop.f32.mrf.mxu0
      %v4004 = vadd.f32 %v3808, %v4003
      %v4005 = vpop.f32.mrf.mxu0
      %4006 = vmatprep.mubr.f32.mxu0 0.0
      %4007 = vmatmul.mubr.f32.gmra.mxu0 %v3888
      %v4008 = vpop.f32.mrf.mxu0
      %v4009 = vadd.f32 %v3813, %v4008
      %v4010 = vpop.f32.mrf.mxu0
      %4011 = vmatprep.mubr.f32.mxu0 0.0
      %4012 = vmatmul.mubr.f32.gmra.mxu0 %v3891
      %v4013 = vpop.f32.mrf.mxu0
      %v4014 = vadd.f32 %v3818, %v4013
      %v4015 = vpop.f32.mrf.mxu0
      %4016 = vmatprep.mubr.f32.mxu0 0.0
      %4017 = vmatmul.mubr.f32.gmra.mxu0 %v3894
      %v4018 = vpop.f32.mrf.mxu0
      %v4019 = vadd.f32 %v3823, %v4018
      %v4020 = vpop.f32.mrf.mxu0
      %4021 = vmatprep.mubr.f32.mxu0 0.0
      %4022 = vmatmul.mubr.f32.gmra.mxu0 %v3897
      %v4023 = vpop.f32.mrf.mxu0
      %v4024 = vadd.f32 %v3828, %v4023
      %v4025 = vpop.f32.mrf.mxu0
      %4026 = vmatprep.mubr.f32.mxu0 0.0
      %4027 = vmatmul.mubr.f32.gmra.mxu0 %v3900
      %v4028 = vpop.f32.mrf.mxu0
      %v4029 = vadd.f32 %v3833, %v4028
      %v4030 = vpop.f32.mrf.mxu0
      %4031 = vmatprep.mubr.f32.mxu0 0.0
      %4032 = vmatmul.mubr.f32.gmra.mxu0 %v3903
      %v4033 = vpop.f32.mrf.mxu0
      %v4034 = vadd.f32 %v3838, %v4033
      %v4035 = vpop.f32.mrf.mxu0
      %4036 = vmatprep.mubr.f32.mxu0 0.0
      %4037 = vmatmul.mubr.f32.gmra.mxu0 %v3906
      %v4038 = vpop.f32.mrf.mxu0
      %v4039 = vadd.f32 %v3843, %v4038
      %v4040 = vpop.f32.mrf.mxu0
      %4041 = vmatprep.mubr.f32.mxu0 0.0
      %4042 = vmatmul.mubr.f32.gmra.mxu0 %v3909
      %v4043 = vpop.f32.mrf.mxu0
      %v4044 = vadd.f32 %v3848, %v4043
      %v4045 = vpop.f32.mrf.mxu0
      %4046 = vmatprep.mubr.f32.mxu0 0.0
      %4047 = vmatmul.mubr.f32.gmra.mxu0 %v3912
      %v4048 = vpop.f32.mrf.mxu0
      %v4049 = vadd.f32 %v3853, %v4048
      %v4050 = vpop.f32.mrf.mxu0
      %4051 = vmatprep.mubr.f32.mxu0 0.0
      %4052 = vmatmul.mubr.f32.gmra.mxu0 %v3915
      %v4053 = vpop.f32.mrf.mxu0
      %v4054 = vadd.f32 %v3858, %v4053
      %v4055 = vpop.f32.mrf.mxu0
      %4056 = vmatprep.mubr.f32.mxu0 0.0
      %4057 = vmatmul.mubr.f32.gmra.mxu0 %v3918
      %v4058 = vpop.f32.mrf.mxu0
      %v4059 = vadd.f32 %v3863, %v4058
      %v4060 = vpop.f32.mrf.mxu0
      %4061 = vmatprep.mubr.f32.mxu0 0.0
      %4062 = vmatmul.mubr.f32.gmra.mxu0 %v3921
      %v4063 = vpop.f32.mrf.mxu0
      %v4064 = vadd.f32 %v3868, %v4063
      %v4065 = vpop.f32.mrf.mxu0
      %4066 = vmatprep.mubr.f32.mxu0 0.0
      %4067 = vmatmul.mubr.f32.gmra.mxu0 %v3924
      %v4068 = vpop.f32.mrf.mxu0
      %v4069 = vadd.f32 %v3873, %v4068
      %v4070 = vpop.f32.mrf.mxu0
      %4071 = vmatprep.mubr.f32.mxu0 0.0
      %4072 = vmatmul.mubr.f32.gmra.mxu0 %v3927
      %v4073 = vpop.f32.mrf.mxu0
      %v4074 = vadd.f32 %v3878, %v4073
      %v4075 = vpop.f32.mrf.mxu0
      %4076 = vdwg.mxu0
      %4077 = vrot.lane.b32.xlu0 %v465, 120
      %v4078 = vpop.permute.xlu0 %4077
      %4079 = vrot.lane.b32.xlu0 %v466, 120
      %v4080 = vpop.permute.xlu0 %4079
      %4081 = vrot.lane.b32.xlu0 %v387, 108
      %v4082 = vpop.permute.xlu0 %4081
      %4083 = vrot.lane.b32.xlu0 %v392, 108
      %v4084 = vpop.permute.xlu0 %4083
      %v4085 = vsel %vm487, %v4078, 0
      %v4087 = vsel %vm487, %v4080, 0
      %v4089 = vsel %vm487, %v4082, 0
      %v4091 = vsel %vm487, %v4084, 0
      %4093 = vmatprep.subr.mxu0 0.0
      %4094 = vmatpush1.xpose.msra.mxu0 0.0
      %4095 = vmatprep.subr.mxu0 0.0
      %4096 = vmatpush1.xpose.msra.mxu0 0.0
      %4097 = vmatprep.subr.mxu0 0.0
      %4098 = vmatpush1.xpose.msra.mxu0 0.0
      %4099 = vmatprep.subr.mxu0 0.0
      %4100 = vmatpush1.xpose.msra.mxu0 0.0
      %4101 = vmatprep.subr.mxu0 0.0
      %4102 = vmatpush1.xpose.msra.mxu0 0.0
      %4103 = vmatprep.subr.mxu0 0.0
      %4104 = vmatpush1.xpose.msra.mxu0 0.0
      %4105 = vmatprep.subr.mxu0 0.0
      %4106 = vmatpush1.xpose.msra.mxu0 0.0
      %4107 = vmatprep.subr.mxu0 0.0
      %4108 = vmatpush1.xpose.msra.mxu0 0.0
      %4109 = vmatprep.subr.mxu0 0.0
      %4110 = vmatpush1.xpose.msra.mxu0 0.0
      %4111 = vmatprep.subr.mxu0 0.0
      %4112 = vmatpush1.xpose.msra.mxu0 0.0
      %4113 = vmatprep.subr.mxu0 0.0
      %4114 = vmatpush1.xpose.msra.mxu0 0.0
      %4115 = vmatprep.subr.mxu0 0.0
      %4116 = vmatpush1.xpose.msra.mxu0 0.0
      %4117 = vmatprep.subr.mxu0 0.0
      %4118 = vmatpush1.xpose.msra.mxu0 0.0
      %4119 = vmatprep.subr.mxu0 0.0
      %4120 = vmatpush1.xpose.msra.mxu0 0.0
      %4121 = vmatprep.subr.mxu0 0.0
      %4122 = vmatpush1.xpose.msra.mxu0 %v4091
      %4123 = vmatprep.subr.mxu0 0.0
      %4124 = vmatpush1.xpose.msra.mxu0 %v4089
      %4125 = vmatprep.subr.mxu0 0.0
      %4126 = vmatpush2.xpose.msra.mxu0 0.0
      %4127 = vmatprep.subr.mxu0 0.0
      %4128 = vmatpush2.xpose.msra.mxu0 0.0
      %4129 = vmatprep.subr.mxu0 0.0
      %4130 = vmatpush2.xpose.msra.mxu0 0.0
      %4131 = vmatprep.subr.mxu0 0.0
      %4132 = vmatpush2.xpose.msra.mxu0 0.0
      %4133 = vmatprep.subr.mxu0 0.0
      %4134 = vmatpush2.xpose.msra.mxu0 0.0
      %4135 = vmatprep.subr.mxu0 0.0
      %4136 = vmatpush2.xpose.msra.mxu0 0.0
      %4137 = vmatprep.subr.mxu0 0.0
      %4138 = vmatpush2.xpose.msra.mxu0 0.0
      %4139 = vmatprep.subr.mxu0 0.0
      %4140 = vmatpush2.xpose.msra.mxu0 0.0
      %4141 = vmatprep.subr.mxu0 0.0
      %4142 = vmatpush2.xpose.msra.mxu0 0.0
      %4143 = vmatprep.subr.mxu0 0.0
      %4144 = vmatpush2.xpose.msra.mxu0 0.0
      %4145 = vmatprep.subr.mxu0 0.0
      %4146 = vmatpush2.xpose.msra.mxu0 0.0
      %4147 = vmatprep.subr.mxu0 0.0
      %4148 = vmatpush2.xpose.msra.mxu0 0.0
      %4149 = vmatprep.subr.mxu0 0.0
      %4150 = vmatpush2.xpose.msra.mxu0 0.0
      %4151 = vmatprep.subr.mxu0 0.0
      %4152 = vmatpush2.xpose.msra.mxu0 0.0
      %4153 = vmatprep.subr.mxu0 0.0
      %4154 = vmatpush2.xpose.msra.mxu0 0.0
      %4155 = vmatprep.subr.mxu0 0.0
      %4156 = vmatpush2.xpose.msra.mxu0 0.0
      %4157 = vmatprep.mubr.f32.mxu0 0.0
      %4158 = vmatmul.mubr.f32.gmra.mxu0 %v4085
      %v4159 = vpop.f32.mrf.mxu0
      %v4160 = vadd.f32 0.0, %v4159
      %v4161 = vpop.f32.mrf.mxu0
      %4162 = vmatprep.mubr.f32.mxu0 0.0
      %4163 = vmatmul.mubr.f32.gmra.mxu0 %v4087
      %v4164 = vpop.f32.mrf.mxu0
      %v4165 = vadd.f32 0.0, %v4164
      %v4166 = vpop.f32.mrf.mxu0
      %4167 = vdwg.mxu0
      %4168 = vrot.lane.b32.xlu0 %v467, 120
      %v4169 = vpop.permute.xlu0 %4168
      %4170 = vrot.lane.b32.xlu0 %v468, 120
      %v4171 = vpop.permute.xlu0 %4170
      %4172 = vrot.lane.b32.xlu0 %v397, 108
      %v4173 = vpop.permute.xlu0 %4172
      %4174 = vrot.lane.b32.xlu0 %v402, 108
      %v4175 = vpop.permute.xlu0 %4174
      %v4176 = vsel %vm487, %v4169, 0
      %v4178 = vsel %vm487, %v4171, 0
      %v4180 = vsel %vm487, %v4173, 0
      %v4182 = vsel %vm487, %v4175, 0
      %4184 = vmatprep.subr.mxu0 0.0
      %4185 = vmatpush1.xpose.msra.mxu0 0.0
      %4186 = vmatprep.subr.mxu0 0.0
      %4187 = vmatpush1.xpose.msra.mxu0 0.0
      %4188 = vmatprep.subr.mxu0 0.0
      %4189 = vmatpush1.xpose.msra.mxu0 0.0
      %4190 = vmatprep.subr.mxu0 0.0
      %4191 = vmatpush1.xpose.msra.mxu0 0.0
      %4192 = vmatprep.subr.mxu0 0.0
      %4193 = vmatpush1.xpose.msra.mxu0 0.0
      %4194 = vmatprep.subr.mxu0 0.0
      %4195 = vmatpush1.xpose.msra.mxu0 0.0
      %4196 = vmatprep.subr.mxu0 0.0
      %4197 = vmatpush1.xpose.msra.mxu0 0.0
      %4198 = vmatprep.subr.mxu0 0.0
      %4199 = vmatpush1.xpose.msra.mxu0 0.0
      %4200 = vmatprep.subr.mxu0 0.0
      %4201 = vmatpush1.xpose.msra.mxu0 0.0
      %4202 = vmatprep.subr.mxu0 0.0
      %4203 = vmatpush1.xpose.msra.mxu0 0.0
      %4204 = vmatprep.subr.mxu0 0.0
      %4205 = vmatpush1.xpose.msra.mxu0 0.0
      %4206 = vmatprep.subr.mxu0 0.0
      %4207 = vmatpush1.xpose.msra.mxu0 0.0
      %4208 = vmatprep.subr.mxu0 0.0
      %4209 = vmatpush1.xpose.msra.mxu0 0.0
      %4210 = vmatprep.subr.mxu0 0.0
      %4211 = vmatpush1.xpose.msra.mxu0 0.0
      %4212 = vmatprep.subr.mxu0 0.0
      %4213 = vmatpush1.xpose.msra.mxu0 %v4182
      %4214 = vmatprep.subr.mxu0 0.0
      %4215 = vmatpush1.xpose.msra.mxu0 %v4180
      %4216 = vmatprep.subr.mxu0 0.0
      %4217 = vmatpush2.xpose.msra.mxu0 0.0
      %4218 = vmatprep.subr.mxu0 0.0
      %4219 = vmatpush2.xpose.msra.mxu0 0.0
      %4220 = vmatprep.subr.mxu0 0.0
      %4221 = vmatpush2.xpose.msra.mxu0 0.0
      %4222 = vmatprep.subr.mxu0 0.0
      %4223 = vmatpush2.xpose.msra.mxu0 0.0
      %4224 = vmatprep.subr.mxu0 0.0
      %4225 = vmatpush2.xpose.msra.mxu0 0.0
      %4226 = vmatprep.subr.mxu0 0.0
      %4227 = vmatpush2.xpose.msra.mxu0 0.0
      %4228 = vmatprep.subr.mxu0 0.0
      %4229 = vmatpush2.xpose.msra.mxu0 0.0
      %4230 = vmatprep.subr.mxu0 0.0
      %4231 = vmatpush2.xpose.msra.mxu0 0.0
      %4232 = vmatprep.subr.mxu0 0.0
      %4233 = vmatpush2.xpose.msra.mxu0 0.0
      %4234 = vmatprep.subr.mxu0 0.0
      %4235 = vmatpush2.xpose.msra.mxu0 0.0
      %4236 = vmatprep.subr.mxu0 0.0
      %4237 = vmatpush2.xpose.msra.mxu0 0.0
      %4238 = vmatprep.subr.mxu0 0.0
      %4239 = vmatpush2.xpose.msra.mxu0 0.0
      %4240 = vmatprep.subr.mxu0 0.0
      %4241 = vmatpush2.xpose.msra.mxu0 0.0
      %4242 = vmatprep.subr.mxu0 0.0
      %4243 = vmatpush2.xpose.msra.mxu0 0.0
      %4244 = vmatprep.subr.mxu0 0.0
      %4245 = vmatpush2.xpose.msra.mxu0 0.0
      %4246 = vmatprep.subr.mxu0 0.0
      %4247 = vmatpush2.xpose.msra.mxu0 0.0
      %4248 = vmatprep.mubr.f32.mxu0 0.0
      %4249 = vmatmul.mubr.f32.gmra.mxu0 %v4176
      %v4250 = vpop.f32.mrf.mxu0
      %v4251 = vadd.f32 0.0, %v4250
      %v4252 = vpop.f32.mrf.mxu0
      %4253 = vmatprep.mubr.f32.mxu0 0.0
      %4254 = vmatmul.mubr.f32.gmra.mxu0 %v4178
      %v4255 = vpop.f32.mrf.mxu0
      %v4256 = vadd.f32 0.0, %v4255
      %v4257 = vpop.f32.mrf.mxu0
      %4258 = vdwg.mxu0
      %4259 = vrot.lane.b32.xlu0 %v469, 120
      %v4260 = vpop.permute.xlu0 %4259
      %4261 = vrot.lane.b32.xlu0 %v470, 120
      %v4262 = vpop.permute.xlu0 %4261
      %4263 = vrot.lane.b32.xlu0 %v407, 108
      %v4264 = vpop.permute.xlu0 %4263
      %4265 = vrot.lane.b32.xlu0 %v412, 108
      %v4266 = vpop.permute.xlu0 %4265
      %v4267 = vsel %vm487, %v4260, 0
      %v4269 = vsel %vm487, %v4262, 0
      %v4271 = vsel %vm487, %v4264, 0
      %v4273 = vsel %vm487, %v4266, 0
      %4275 = vmatprep.subr.mxu0 0.0
      %4276 = vmatpush1.xpose.msra.mxu0 0.0
      %4277 = vmatprep.subr.mxu0 0.0
      %4278 = vmatpush1.xpose.msra.mxu0 0.0
      %4279 = vmatprep.subr.mxu0 0.0
      %4280 = vmatpush1.xpose.msra.mxu0 0.0
      %4281 = vmatprep.subr.mxu0 0.0
      %4282 = vmatpush1.xpose.msra.mxu0 0.0
      %4283 = vmatprep.subr.mxu0 0.0
      %4284 = vmatpush1.xpose.msra.mxu0 0.0
      %4285 = vmatprep.subr.mxu0 0.0
      %4286 = vmatpush1.xpose.msra.mxu0 0.0
      %4287 = vmatprep.subr.mxu0 0.0
      %4288 = vmatpush1.xpose.msra.mxu0 0.0
      %4289 = vmatprep.subr.mxu0 0.0
      %4290 = vmatpush1.xpose.msra.mxu0 0.0
      %4291 = vmatprep.subr.mxu0 0.0
      %4292 = vmatpush1.xpose.msra.mxu0 0.0
      %4293 = vmatprep.subr.mxu0 0.0
      %4294 = vmatpush1.xpose.msra.mxu0 0.0
      %4295 = vmatprep.subr.mxu0 0.0
      %4296 = vmatpush1.xpose.msra.mxu0 0.0
      %4297 = vmatprep.subr.mxu0 0.0
      %4298 = vmatpush1.xpose.msra.mxu0 0.0
      %4299 = vmatprep.subr.mxu0 0.0
      %4300 = vmatpush1.xpose.msra.mxu0 0.0
      %4301 = vmatprep.subr.mxu0 0.0
      %4302 = vmatpush1.xpose.msra.mxu0 0.0
      %4303 = vmatprep.subr.mxu0 0.0
      %4304 = vmatpush1.xpose.msra.mxu0 %v4273
      %4305 = vmatprep.subr.mxu0 0.0
      %4306 = vmatpush1.xpose.msra.mxu0 %v4271
      %4307 = vmatprep.subr.mxu0 0.0
      %4308 = vmatpush2.xpose.msra.mxu0 0.0
      %4309 = vmatprep.subr.mxu0 0.0
      %4310 = vmatpush2.xpose.msra.mxu0 0.0
      %4311 = vmatprep.subr.mxu0 0.0
      %4312 = vmatpush2.xpose.msra.mxu0 0.0
      %4313 = vmatprep.subr.mxu0 0.0
      %4314 = vmatpush2.xpose.msra.mxu0 0.0
      %4315 = vmatprep.subr.mxu0 0.0
      %4316 = vmatpush2.xpose.msra.mxu0 0.0
      %4317 = vmatprep.subr.mxu0 0.0
      %4318 = vmatpush2.xpose.msra.mxu0 0.0
      %4319 = vmatprep.subr.mxu0 0.0
      %4320 = vmatpush2.xpose.msra.mxu0 0.0
      %4321 = vmatprep.subr.mxu0 0.0
      %4322 = vmatpush2.xpose.msra.mxu0 0.0
      %4323 = vmatprep.subr.mxu0 0.0
      %4324 = vmatpush2.xpose.msra.mxu0 0.0
      %4325 = vmatprep.subr.mxu0 0.0
      %4326 = vmatpush2.xpose.msra.mxu0 0.0
      %4327 = vmatprep.subr.mxu0 0.0
      %4328 = vmatpush2.xpose.msra.mxu0 0.0
      %4329 = vmatprep.subr.mxu0 0.0
      %4330 = vmatpush2.xpose.msra.mxu0 0.0
      %4331 = vmatprep.subr.mxu0 0.0
      %4332 = vmatpush2.xpose.msra.mxu0 0.0
      %4333 = vmatprep.subr.mxu0 0.0
      %4334 = vmatpush2.xpose.msra.mxu0 0.0
      %4335 = vmatprep.subr.mxu0 0.0
      %4336 = vmatpush2.xpose.msra.mxu0 0.0
      %4337 = vmatprep.subr.mxu0 0.0
      %4338 = vmatpush2.xpose.msra.mxu0 0.0
      %4339 = vmatprep.mubr.f32.mxu0 0.0
      %4340 = vmatmul.mubr.f32.gmra.mxu0 %v4267
      %v4341 = vpop.f32.mrf.mxu0
      %v4342 = vadd.f32 0.0, %v4341
      %v4343 = vpop.f32.mrf.mxu0
      %4344 = vmatprep.mubr.f32.mxu0 0.0
      %4345 = vmatmul.mubr.f32.gmra.mxu0 %v4269
      %v4346 = vpop.f32.mrf.mxu0
      %v4347 = vadd.f32 0.0, %v4346
      %v4348 = vpop.f32.mrf.mxu0
      %4349 = vdwg.mxu0
      %4350 = vrot.lane.b32.xlu0 %v471, 120
      %v4351 = vpop.permute.xlu0 %4350
      %4352 = vrot.lane.b32.xlu0 %v472, 120
      %v4353 = vpop.permute.xlu0 %4352
      %4354 = vrot.lane.b32.xlu0 %v417, 108
      %v4355 = vpop.permute.xlu0 %4354
      %4356 = vrot.lane.b32.xlu0 %v422, 108
      %v4357 = vpop.permute.xlu0 %4356
      %v4358 = vsel %vm487, %v4351, 0
      %v4360 = vsel %vm487, %v4353, 0
      %v4362 = vsel %vm487, %v4355, 0
      %v4364 = vsel %vm487, %v4357, 0
      %4366 = vmatprep.subr.mxu0 0.0
      %4367 = vmatpush1.xpose.msra.mxu0 0.0
      %4368 = vmatprep.subr.mxu0 0.0
      %4369 = vmatpush1.xpose.msra.mxu0 0.0
      %4370 = vmatprep.subr.mxu0 0.0
      %4371 = vmatpush1.xpose.msra.mxu0 0.0
      %4372 = vmatprep.subr.mxu0 0.0
      %4373 = vmatpush1.xpose.msra.mxu0 0.0
      %4374 = vmatprep.subr.mxu0 0.0
      %4375 = vmatpush1.xpose.msra.mxu0 0.0
      %4376 = vmatprep.subr.mxu0 0.0
      %4377 = vmatpush1.xpose.msra.mxu0 0.0
      %4378 = vmatprep.subr.mxu0 0.0
      %4379 = vmatpush1.xpose.msra.mxu0 0.0
      %4380 = vmatprep.subr.mxu0 0.0
      %4381 = vmatpush1.xpose.msra.mxu0 0.0
      %4382 = vmatprep.subr.mxu0 0.0
      %4383 = vmatpush1.xpose.msra.mxu0 0.0
      %4384 = vmatprep.subr.mxu0 0.0
      %4385 = vmatpush1.xpose.msra.mxu0 0.0
      %4386 = vmatprep.subr.mxu0 0.0
      %4387 = vmatpush1.xpose.msra.mxu0 0.0
      %4388 = vmatprep.subr.mxu0 0.0
      %4389 = vmatpush1.xpose.msra.mxu0 0.0
      %4390 = vmatprep.subr.mxu0 0.0
      %4391 = vmatpush1.xpose.msra.mxu0 0.0
      %4392 = vmatprep.subr.mxu0 0.0
      %4393 = vmatpush1.xpose.msra.mxu0 0.0
      %4394 = vmatprep.subr.mxu0 0.0
      %4395 = vmatpush1.xpose.msra.mxu0 %v4364
      %4396 = vmatprep.subr.mxu0 0.0
      %4397 = vmatpush1.xpose.msra.mxu0 %v4362
      %4398 = vmatprep.subr.mxu0 0.0
      %4399 = vmatpush2.xpose.msra.mxu0 0.0
      %4400 = vmatprep.subr.mxu0 0.0
      %4401 = vmatpush2.xpose.msra.mxu0 0.0
      %4402 = vmatprep.subr.mxu0 0.0
      %4403 = vmatpush2.xpose.msra.mxu0 0.0
      %4404 = vmatprep.subr.mxu0 0.0
      %4405 = vmatpush2.xpose.msra.mxu0 0.0
      %4406 = vmatprep.subr.mxu0 0.0
      %4407 = vmatpush2.xpose.msra.mxu0 0.0
      %4408 = vmatprep.subr.mxu0 0.0
      %4409 = vmatpush2.xpose.msra.mxu0 0.0
      %4410 = vmatprep.subr.mxu0 0.0
      %4411 = vmatpush2.xpose.msra.mxu0 0.0
      %4412 = vmatprep.subr.mxu0 0.0
      %4413 = vmatpush2.xpose.msra.mxu0 0.0
      %4414 = vmatprep.subr.mxu0 0.0
      %4415 = vmatpush2.xpose.msra.mxu0 0.0
      %4416 = vmatprep.subr.mxu0 0.0
      %4417 = vmatpush2.xpose.msra.mxu0 0.0
      %4418 = vmatprep.subr.mxu0 0.0
      %4419 = vmatpush2.xpose.msra.mxu0 0.0
      %4420 = vmatprep.subr.mxu0 0.0
      %4421 = vmatpush2.xpose.msra.mxu0 0.0
      %4422 = vmatprep.subr.mxu0 0.0
      %4423 = vmatpush2.xpose.msra.mxu0 0.0
      %4424 = vmatprep.subr.mxu0 0.0
      %4425 = vmatpush2.xpose.msra.mxu0 0.0
      %4426 = vmatprep.subr.mxu0 0.0
      %4427 = vmatpush2.xpose.msra.mxu0 0.0
      %4428 = vmatprep.subr.mxu0 0.0
      %4429 = vmatpush2.xpose.msra.mxu0 0.0
      %4430 = vmatprep.mubr.f32.mxu0 0.0
      %4431 = vmatmul.mubr.f32.gmra.mxu0 %v4358
      %v4432 = vpop.f32.mrf.mxu0
      %v4433 = vadd.f32 0.0, %v4432
      %v4434 = vpop.f32.mrf.mxu0
      %4435 = vmatprep.mubr.f32.mxu0 0.0
      %4436 = vmatmul.mubr.f32.gmra.mxu0 %v4360
      %v4437 = vpop.f32.mrf.mxu0
      %v4438 = vadd.f32 0.0, %v4437
      %v4439 = vpop.f32.mrf.mxu0
      %4440 = vdwg.mxu0
      %4441 = vrot.lane.b32.xlu0 %v473, 120
      %v4442 = vpop.permute.xlu0 %4441
      %4443 = vrot.lane.b32.xlu0 %v474, 120
      %v4444 = vpop.permute.xlu0 %4443
      %4445 = vrot.lane.b32.xlu0 %v427, 108
      %v4446 = vpop.permute.xlu0 %4445
      %4447 = vrot.lane.b32.xlu0 %v432, 108
      %v4448 = vpop.permute.xlu0 %4447
      %v4449 = vsel %vm487, %v4442, 0
      %v4451 = vsel %vm487, %v4444, 0
      %v4453 = vsel %vm487, %v4446, 0
      %v4455 = vsel %vm487, %v4448, 0
      %4457 = vmatprep.subr.mxu0 0.0
      %4458 = vmatpush1.xpose.msra.mxu0 0.0
      %4459 = vmatprep.subr.mxu0 0.0
      %4460 = vmatpush1.xpose.msra.mxu0 0.0
      %4461 = vmatprep.subr.mxu0 0.0
      %4462 = vmatpush1.xpose.msra.mxu0 0.0
      %4463 = vmatprep.subr.mxu0 0.0
      %4464 = vmatpush1.xpose.msra.mxu0 0.0
      %4465 = vmatprep.subr.mxu0 0.0
      %4466 = vmatpush1.xpose.msra.mxu0 0.0
      %4467 = vmatprep.subr.mxu0 0.0
      %4468 = vmatpush1.xpose.msra.mxu0 0.0
      %4469 = vmatprep.subr.mxu0 0.0
      %4470 = vmatpush1.xpose.msra.mxu0 0.0
      %4471 = vmatprep.subr.mxu0 0.0
      %4472 = vmatpush1.xpose.msra.mxu0 0.0
      %4473 = vmatprep.subr.mxu0 0.0
      %4474 = vmatpush1.xpose.msra.mxu0 0.0
      %4475 = vmatprep.subr.mxu0 0.0
      %4476 = vmatpush1.xpose.msra.mxu0 0.0
      %4477 = vmatprep.subr.mxu0 0.0
      %4478 = vmatpush1.xpose.msra.mxu0 0.0
      %4479 = vmatprep.subr.mxu0 0.0
      %4480 = vmatpush1.xpose.msra.mxu0 0.0
      %4481 = vmatprep.subr.mxu0 0.0
      %4482 = vmatpush1.xpose.msra.mxu0 0.0
      %4483 = vmatprep.subr.mxu0 0.0
      %4484 = vmatpush1.xpose.msra.mxu0 0.0
      %4485 = vmatprep.subr.mxu0 0.0
      %4486 = vmatpush1.xpose.msra.mxu0 %v4455
      %4487 = vmatprep.subr.mxu0 0.0
      %4488 = vmatpush1.xpose.msra.mxu0 %v4453
      %4489 = vmatprep.subr.mxu0 0.0
      %4490 = vmatpush2.xpose.msra.mxu0 0.0
      %4491 = vmatprep.subr.mxu0 0.0
      %4492 = vmatpush2.xpose.msra.mxu0 0.0
      %4493 = vmatprep.subr.mxu0 0.0
      %4494 = vmatpush2.xpose.msra.mxu0 0.0
      %4495 = vmatprep.subr.mxu0 0.0
      %4496 = vmatpush2.xpose.msra.mxu0 0.0
      %4497 = vmatprep.subr.mxu0 0.0
      %4498 = vmatpush2.xpose.msra.mxu0 0.0
      %4499 = vmatprep.subr.mxu0 0.0
      %4500 = vmatpush2.xpose.msra.mxu0 0.0
      %4501 = vmatprep.subr.mxu0 0.0
      %4502 = vmatpush2.xpose.msra.mxu0 0.0
      %4503 = vmatprep.subr.mxu0 0.0
      %4504 = vmatpush2.xpose.msra.mxu0 0.0
      %4505 = vmatprep.subr.mxu0 0.0
      %4506 = vmatpush2.xpose.msra.mxu0 0.0
      %4507 = vmatprep.subr.mxu0 0.0
      %4508 = vmatpush2.xpose.msra.mxu0 0.0
      %4509 = vmatprep.subr.mxu0 0.0
      %4510 = vmatpush2.xpose.msra.mxu0 0.0
      %4511 = vmatprep.subr.mxu0 0.0
      %4512 = vmatpush2.xpose.msra.mxu0 0.0
      %4513 = vmatprep.subr.mxu0 0.0
      %4514 = vmatpush2.xpose.msra.mxu0 0.0
      %4515 = vmatprep.subr.mxu0 0.0
      %4516 = vmatpush2.xpose.msra.mxu0 0.0
      %4517 = vmatprep.subr.mxu0 0.0
      %4518 = vmatpush2.xpose.msra.mxu0 0.0
      %4519 = vmatprep.subr.mxu0 0.0
      %4520 = vmatpush2.xpose.msra.mxu0 0.0
      %4521 = vmatprep.mubr.f32.mxu0 0.0
      %4522 = vmatmul.mubr.f32.gmra.mxu0 %v4449
      %v4523 = vpop.f32.mrf.mxu0
      %v4524 = vadd.f32 0.0, %v4523
      %v4525 = vpop.f32.mrf.mxu0
      %4526 = vmatprep.mubr.f32.mxu0 0.0
      %4527 = vmatmul.mubr.f32.gmra.mxu0 %v4451
      %v4528 = vpop.f32.mrf.mxu0
      %v4529 = vadd.f32 0.0, %v4528
      %v4530 = vpop.f32.mrf.mxu0
      %4531 = vdwg.mxu0
      %4532 = vrot.lane.b32.xlu0 %v475, 120
      %v4533 = vpop.permute.xlu0 %4532
      %4534 = vrot.lane.b32.xlu0 %v476, 120
      %v4535 = vpop.permute.xlu0 %4534
      %4536 = vrot.lane.b32.xlu0 %v437, 108
      %v4537 = vpop.permute.xlu0 %4536
      %4538 = vrot.lane.b32.xlu0 %v442, 108
      %v4539 = vpop.permute.xlu0 %4538
      %v4540 = vsel %vm487, %v4533, 0
      %v4542 = vsel %vm487, %v4535, 0
      %v4544 = vsel %vm487, %v4537, 0
      %v4546 = vsel %vm487, %v4539, 0
      %4548 = vmatprep.subr.mxu0 0.0
      %4549 = vmatpush1.xpose.msra.mxu0 0.0
      %4550 = vmatprep.subr.mxu0 0.0
      %4551 = vmatpush1.xpose.msra.mxu0 0.0
      %4552 = vmatprep.subr.mxu0 0.0
      %4553 = vmatpush1.xpose.msra.mxu0 0.0
      %4554 = vmatprep.subr.mxu0 0.0
      %4555 = vmatpush1.xpose.msra.mxu0 0.0
      %4556 = vmatprep.subr.mxu0 0.0
      %4557 = vmatpush1.xpose.msra.mxu0 0.0
      %4558 = vmatprep.subr.mxu0 0.0
      %4559 = vmatpush1.xpose.msra.mxu0 0.0
      %4560 = vmatprep.subr.mxu0 0.0
      %4561 = vmatpush1.xpose.msra.mxu0 0.0
      %4562 = vmatprep.subr.mxu0 0.0
      %4563 = vmatpush1.xpose.msra.mxu0 0.0
      %4564 = vmatprep.subr.mxu0 0.0
      %4565 = vmatpush1.xpose.msra.mxu0 0.0
      %4566 = vmatprep.subr.mxu0 0.0
      %4567 = vmatpush1.xpose.msra.mxu0 0.0
      %4568 = vmatprep.subr.mxu0 0.0
      %4569 = vmatpush1.xpose.msra.mxu0 0.0
      %4570 = vmatprep.subr.mxu0 0.0
      %4571 = vmatpush1.xpose.msra.mxu0 0.0
      %4572 = vmatprep.subr.mxu0 0.0
      %4573 = vmatpush1.xpose.msra.mxu0 0.0
      %4574 = vmatprep.subr.mxu0 0.0
      %4575 = vmatpush1.xpose.msra.mxu0 0.0
      %4576 = vmatprep.subr.mxu0 0.0
      %4577 = vmatpush1.xpose.msra.mxu0 %v4546
      %4578 = vmatprep.subr.mxu0 0.0
      %4579 = vmatpush1.xpose.msra.mxu0 %v4544
      %4580 = vmatprep.subr.mxu0 0.0
      %4581 = vmatpush2.xpose.msra.mxu0 0.0
      %4582 = vmatprep.subr.mxu0 0.0
      %4583 = vmatpush2.xpose.msra.mxu0 0.0
      %4584 = vmatprep.subr.mxu0 0.0
      %4585 = vmatpush2.xpose.msra.mxu0 0.0
      %4586 = vmatprep.subr.mxu0 0.0
      %4587 = vmatpush2.xpose.msra.mxu0 0.0
      %4588 = vmatprep.subr.mxu0 0.0
      %4589 = vmatpush2.xpose.msra.mxu0 0.0
      %4590 = vmatprep.subr.mxu0 0.0
      %4591 = vmatpush2.xpose.msra.mxu0 0.0
      %4592 = vmatprep.subr.mxu0 0.0
      %4593 = vmatpush2.xpose.msra.mxu0 0.0
      %4594 = vmatprep.subr.mxu0 0.0
      %4595 = vmatpush2.xpose.msra.mxu0 0.0
      %4596 = vmatprep.subr.mxu0 0.0
      %4597 = vmatpush2.xpose.msra.mxu0 0.0
      %4598 = vmatprep.subr.mxu0 0.0
      %4599 = vmatpush2.xpose.msra.mxu0 0.0
      %4600 = vmatprep.subr.mxu0 0.0
      %4601 = vmatpush2.xpose.msra.mxu0 0.0
      %4602 = vmatprep.subr.mxu0 0.0
      %4603 = vmatpush2.xpose.msra.mxu0 0.0
      %4604 = vmatprep.subr.mxu0 0.0
      %4605 = vmatpush2.xpose.msra.mxu0 0.0
      %4606 = vmatprep.subr.mxu0 0.0
      %4607 = vmatpush2.xpose.msra.mxu0 0.0
      %4608 = vmatprep.subr.mxu0 0.0
      %4609 = vmatpush2.xpose.msra.mxu0 0.0
      %4610 = vmatprep.subr.mxu0 0.0
      %4611 = vmatpush2.xpose.msra.mxu0 0.0
      %4612 = vmatprep.mubr.f32.mxu0 0.0
      %4613 = vmatmul.mubr.f32.gmra.mxu0 %v4540
      %v4614 = vpop.f32.mrf.mxu0
      %v4615 = vadd.f32 0.0, %v4614
      %v4616 = vpop.f32.mrf.mxu0
      %4617 = vmatprep.mubr.f32.mxu0 0.0
      %4618 = vmatmul.mubr.f32.gmra.mxu0 %v4542
      %v4619 = vpop.f32.mrf.mxu0
      %v4620 = vadd.f32 0.0, %v4619
      %v4621 = vpop.f32.mrf.mxu0
      %4622 = vdwg.mxu0
      %4623 = vrot.lane.b32.xlu0 %v477, 120
      %v4624 = vpop.permute.xlu0 %4623
      %4625 = vrot.lane.b32.xlu0 %v478, 120
      %v4626 = vpop.permute.xlu0 %4625
      %4627 = vrot.lane.b32.xlu0 %v447, 108
      %v4628 = vpop.permute.xlu0 %4627
      %4629 = vrot.lane.b32.xlu0 %v452, 108
      %v4630 = vpop.permute.xlu0 %4629
      %v4631 = vsel %vm487, %v4624, 0
      %v4633 = vsel %vm487, %v4626, 0
      %v4635 = vsel %vm487, %v4628, 0
      %v4637 = vsel %vm487, %v4630, 0
      %4639 = vmatprep.subr.mxu0 0.0
      %4640 = vmatpush1.xpose.msra.mxu0 0.0
      %4641 = vmatprep.subr.mxu0 0.0
      %4642 = vmatpush1.xpose.msra.mxu0 0.0
      %4643 = vmatprep.subr.mxu0 0.0
      %4644 = vmatpush1.xpose.msra.mxu0 0.0
      %4645 = vmatprep.subr.mxu0 0.0
      %4646 = vmatpush1.xpose.msra.mxu0 0.0
      %4647 = vmatprep.subr.mxu0 0.0
      %4648 = vmatpush1.xpose.msra.mxu0 0.0
      %4649 = vmatprep.subr.mxu0 0.0
      %4650 = vmatpush1.xpose.msra.mxu0 0.0
      %4651 = vmatprep.subr.mxu0 0.0
      %4652 = vmatpush1.xpose.msra.mxu0 0.0
      %4653 = vmatprep.subr.mxu0 0.0
      %4654 = vmatpush1.xpose.msra.mxu0 0.0
      %4655 = vmatprep.subr.mxu0 0.0
      %4656 = vmatpush1.xpose.msra.mxu0 0.0
      %4657 = vmatprep.subr.mxu0 0.0
      %4658 = vmatpush1.xpose.msra.mxu0 0.0
      %4659 = vmatprep.subr.mxu0 0.0
      %4660 = vmatpush1.xpose.msra.mxu0 0.0
      %4661 = vmatprep.subr.mxu0 0.0
      %4662 = vmatpush1.xpose.msra.mxu0 0.0
      %4663 = vmatprep.subr.mxu0 0.0
      %4664 = vmatpush1.xpose.msra.mxu0 0.0
      %4665 = vmatprep.subr.mxu0 0.0
      %4666 = vmatpush1.xpose.msra.mxu0 0.0
      %4667 = vmatprep.subr.mxu0 0.0
      %4668 = vmatpush1.xpose.msra.mxu0 %v4637
      %4669 = vmatprep.subr.mxu0 0.0
      %4670 = vmatpush1.xpose.msra.mxu0 %v4635
      %4671 = vmatprep.subr.mxu0 0.0
      %4672 = vmatpush2.xpose.msra.mxu0 0.0
      %4673 = vmatprep.subr.mxu0 0.0
      %4674 = vmatpush2.xpose.msra.mxu0 0.0
      %4675 = vmatprep.subr.mxu0 0.0
      %4676 = vmatpush2.xpose.msra.mxu0 0.0
      %4677 = vmatprep.subr.mxu0 0.0
      %4678 = vmatpush2.xpose.msra.mxu0 0.0
      %4679 = vmatprep.subr.mxu0 0.0
      %4680 = vmatpush2.xpose.msra.mxu0 0.0
      %4681 = vmatprep.subr.mxu0 0.0
      %4682 = vmatpush2.xpose.msra.mxu0 0.0
      %4683 = vmatprep.subr.mxu0 0.0
      %4684 = vmatpush2.xpose.msra.mxu0 0.0
      %4685 = vmatprep.subr.mxu0 0.0
      %4686 = vmatpush2.xpose.msra.mxu0 0.0
      %4687 = vmatprep.subr.mxu0 0.0
      %4688 = vmatpush2.xpose.msra.mxu0 0.0
      %4689 = vmatprep.subr.mxu0 0.0
      %4690 = vmatpush2.xpose.msra.mxu0 0.0
      %4691 = vmatprep.subr.mxu0 0.0
      %4692 = vmatpush2.xpose.msra.mxu0 0.0
      %4693 = vmatprep.subr.mxu0 0.0
      %4694 = vmatpush2.xpose.msra.mxu0 0.0
      %4695 = vmatprep.subr.mxu0 0.0
      %4696 = vmatpush2.xpose.msra.mxu0 0.0
      %4697 = vmatprep.subr.mxu0 0.0
      %4698 = vmatpush2.xpose.msra.mxu0 0.0
      %4699 = vmatprep.subr.mxu0 0.0
      %4700 = vmatpush2.xpose.msra.mxu0 0.0
      %4701 = vmatprep.subr.mxu0 0.0
      %4702 = vmatpush2.xpose.msra.mxu0 0.0
      %4703 = vmatprep.mubr.f32.mxu0 0.0
      %4704 = vmatmul.mubr.f32.gmra.mxu0 %v4631
      %v4705 = vpop.f32.mrf.mxu0
      %v4706 = vadd.f32 0.0, %v4705
      %v4707 = vpop.f32.mrf.mxu0
      %4708 = vmatprep.mubr.f32.mxu0 0.0
      %4709 = vmatmul.mubr.f32.gmra.mxu0 %v4633
      %v4710 = vpop.f32.mrf.mxu0
      %v4711 = vadd.f32 0.0, %v4710
      %v4712 = vpop.f32.mrf.mxu0
      %4713 = vdwg.mxu0
      %4714 = vrot.lane.b32.xlu0 %v479, 120
      %v4715 = vpop.permute.xlu0 %4714
      %4716 = vrot.lane.b32.xlu0 %v480, 120
      %v4717 = vpop.permute.xlu0 %4716
      %4718 = vrot.lane.b32.xlu0 %v457, 108
      %v4719 = vpop.permute.xlu0 %4718
      %4720 = vrot.lane.b32.xlu0 %v462, 108
      %v4721 = vpop.permute.xlu0 %4720
      %v4722 = vsel %vm487, %v4715, 0
      %v4724 = vsel %vm487, %v4717, 0
      %v4726 = vsel %vm487, %v4719, 0
      %v4728 = vsel %vm487, %v4721, 0
      %4730 = vmatprep.subr.mxu0 0.0
      %4731 = vmatpush1.xpose.msra.mxu0 0.0
      %4732 = vmatprep.subr.mxu0 0.0
      %4733 = vmatpush1.xpose.msra.mxu0 0.0
      %4734 = vmatprep.subr.mxu0 0.0
      %4735 = vmatpush1.xpose.msra.mxu0 0.0
      %4736 = vmatprep.subr.mxu0 0.0
      %4737 = vmatpush1.xpose.msra.mxu0 0.0
      %4738 = vmatprep.subr.mxu0 0.0
      %4739 = vmatpush1.xpose.msra.mxu0 0.0
      %4740 = vmatprep.subr.mxu0 0.0
      %4741 = vmatpush1.xpose.msra.mxu0 0.0
      %4742 = vmatprep.subr.mxu0 0.0
      %4743 = vmatpush1.xpose.msra.mxu0 0.0
      %4744 = vmatprep.subr.mxu0 0.0
      %4745 = vmatpush1.xpose.msra.mxu0 0.0
      %4746 = vmatprep.subr.mxu0 0.0
      %4747 = vmatpush1.xpose.msra.mxu0 0.0
      %4748 = vmatprep.subr.mxu0 0.0
      %4749 = vmatpush1.xpose.msra.mxu0 0.0
      %4750 = vmatprep.subr.mxu0 0.0
      %4751 = vmatpush1.xpose.msra.mxu0 0.0
      %4752 = vmatprep.subr.mxu0 0.0
      %4753 = vmatpush1.xpose.msra.mxu0 0.0
      %4754 = vmatprep.subr.mxu0 0.0
      %4755 = vmatpush1.xpose.msra.mxu0 0.0
      %4756 = vmatprep.subr.mxu0 0.0
      %4757 = vmatpush1.xpose.msra.mxu0 0.0
      %4758 = vmatprep.subr.mxu0 0.0
      %4759 = vmatpush1.xpose.msra.mxu0 %v4728
      %4760 = vmatprep.subr.mxu0 0.0
      %4761 = vmatpush1.xpose.msra.mxu0 %v4726
      %4762 = vmatprep.subr.mxu0 0.0
      %4763 = vmatpush2.xpose.msra.mxu0 0.0
      %4764 = vmatprep.subr.mxu0 0.0
      %4765 = vmatpush2.xpose.msra.mxu0 0.0
      %4766 = vmatprep.subr.mxu0 0.0
      %4767 = vmatpush2.xpose.msra.mxu0 0.0
      %4768 = vmatprep.subr.mxu0 0.0
      %4769 = vmatpush2.xpose.msra.mxu0 0.0
      %4770 = vmatprep.subr.mxu0 0.0
      %4771 = vmatpush2.xpose.msra.mxu0 0.0
      %4772 = vmatprep.subr.mxu0 0.0
      %4773 = vmatpush2.xpose.msra.mxu0 0.0
      %4774 = vmatprep.subr.mxu0 0.0
      %4775 = vmatpush2.xpose.msra.mxu0 0.0
      %4776 = vmatprep.subr.mxu0 0.0
      %4777 = vmatpush2.xpose.msra.mxu0 0.0
      %4778 = vmatprep.subr.mxu0 0.0
      %4779 = vmatpush2.xpose.msra.mxu0 0.0
      %4780 = vmatprep.subr.mxu0 0.0
      %4781 = vmatpush2.xpose.msra.mxu0 0.0
      %4782 = vmatprep.subr.mxu0 0.0
      %4783 = vmatpush2.xpose.msra.mxu0 0.0
      %4784 = vmatprep.subr.mxu0 0.0
      %4785 = vmatpush2.xpose.msra.mxu0 0.0
      %4786 = vmatprep.subr.mxu0 0.0
      %4787 = vmatpush2.xpose.msra.mxu0 0.0
      %4788 = vmatprep.subr.mxu0 0.0
      %4789 = vmatpush2.xpose.msra.mxu0 0.0
      %4790 = vmatprep.subr.mxu0 0.0
      %4791 = vmatpush2.xpose.msra.mxu0 0.0
      %4792 = vmatprep.subr.mxu0 0.0
      %4793 = vmatpush2.xpose.msra.mxu0 0.0
      %4794 = vmatprep.mubr.f32.mxu0 0.0
      %4795 = vmatmul.mubr.f32.gmra.mxu0 %v4722
      %v4796 = vpop.f32.mrf.mxu0
      %v4797 = vadd.f32 0.0, %v4796
      %v4798 = vpop.f32.mrf.mxu0
      %4799 = vmatprep.mubr.f32.mxu0 0.0
      %4800 = vmatmul.mubr.f32.gmra.mxu0 %v4724
      %v4801 = vpop.f32.mrf.mxu0
      %v4802 = vadd.f32 0.0, %v4801
      %v4803 = vpop.f32.mrf.mxu0
      %4804 = vdwg.mxu0
      %v4805 = vsel %vm1210, %v4160, -inf
      %4806 = vmax.xlane.f32.xlu0 %v4805
      %v4807 = vpop.xlane.xlu0 %4806
      %v4808 = vsel %vm1210, %v4165, -inf
      %4809 = vmax.xlane.f32.xlu0 %v4808
      %v4810 = vpop.xlane.xlu0 %4809
      %v4811 = vsel %vm1210, %v4251, -inf
      %4812 = vmax.xlane.f32.xlu0 %v4811
      %v4813 = vpop.xlane.xlu0 %4812
      %v4814 = vsel %vm1210, %v4256, -inf
      %4815 = vmax.xlane.f32.xlu0 %v4814
      %v4816 = vpop.xlane.xlu0 %4815
      %v4817 = vsel %vm1210, %v4342, -inf
      %4818 = vmax.xlane.f32.xlu0 %v4817
      %v4819 = vpop.xlane.xlu0 %4818
      %v4820 = vsel %vm1210, %v4347, -inf
      %4821 = vmax.xlane.f32.xlu0 %v4820
      %v4822 = vpop.xlane.xlu0 %4821
      %v4823 = vsel %vm1210, %v4433, -inf
      %4824 = vmax.xlane.f32.xlu0 %v4823
      %v4825 = vpop.xlane.xlu0 %4824
      %v4826 = vsel %vm1210, %v4438, -inf
      %4827 = vmax.xlane.f32.xlu0 %v4826
      %v4828 = vpop.xlane.xlu0 %4827
      %v4829 = vsel %vm1210, %v4524, -inf
      %4830 = vmax.xlane.f32.xlu0 %v4829
      %v4831 = vpop.xlane.xlu0 %4830
      %v4832 = vsel %vm1210, %v4529, -inf
      %4833 = vmax.xlane.f32.xlu0 %v4832
      %v4834 = vpop.xlane.xlu0 %4833
      %v4835 = vsel %vm1210, %v4615, -inf
      %4836 = vmax.xlane.f32.xlu0 %v4835
      %v4837 = vpop.xlane.xlu0 %4836
      %v4838 = vsel %vm1210, %v4620, -inf
      %4839 = vmax.xlane.f32.xlu0 %v4838
      %v4840 = vpop.xlane.xlu0 %4839
      %v4841 = vsel %vm1210, %v4706, -inf
      %4842 = vmax.xlane.f32.xlu0 %v4841
      %v4843 = vpop.xlane.xlu0 %4842
      %v4844 = vsel %vm1210, %v4711, -inf
      %4845 = vmax.xlane.f32.xlu0 %v4844
      %v4846 = vpop.xlane.xlu0 %4845
      %v4847 = vsel %vm1210, %v4797, -inf
      %4848 = vmax.xlane.f32.xlu0 %v4847
      %v4849 = vpop.xlane.xlu0 %4848
      %v4850 = vsel %vm1210, %v4802, -inf
      %4851 = vmax.xlane.f32.xlu0 %v4850
      %v4852 = vpop.xlane.xlu0 %4851
      %v4853 = vsub.f32 %v4160, %v4807
      %v4854 = vsub.f32 %v4165, %v4810
      %v4855 = vsub.f32 %v4251, %v4813
      %v4856 = vsub.f32 %v4256, %v4816
      %v4857 = vsub.f32 %v4342, %v4819
      %v4858 = vsub.f32 %v4347, %v4822
      %v4859 = vsub.f32 %v4433, %v4825
      %v4860 = vsub.f32 %v4438, %v4828
      %v4861 = vsub.f32 %v4524, %v4831
      %v4862 = vsub.f32 %v4529, %v4834
      %v4863 = vsub.f32 %v4615, %v4837
      %v4864 = vsub.f32 %v4620, %v4840
      %v4865 = vsub.f32 %v4706, %v4843
      %v4866 = vsub.f32 %v4711, %v4846
      %v4867 = vsub.f32 %v4797, %v4849
      %v4868 = vsub.f32 %v4802, %v4852
      %v4869 = vmul.f32 %v4853, 1.442695
      %v4870 = vpow.pop %v4869
      %v4871 = vmul.f32 %v4854, 1.442695
      %v4872 = vpow.pop %v4871
      %v4873 = vmul.f32 %v4855, 1.442695
      %v4874 = vpow.pop %v4873
      %v4875 = vmul.f32 %v4856, 1.442695
      %v4876 = vpow.pop %v4875
      %v4877 = vmul.f32 %v4857, 1.442695
      %v4878 = vpow.pop %v4877
      %v4879 = vmul.f32 %v4858, 1.442695
      %v4880 = vpow.pop %v4879
      %v4881 = vmul.f32 %v4859, 1.442695
      %v4882 = vpow.pop %v4881
      %v4883 = vmul.f32 %v4860, 1.442695
      %v4884 = vpow.pop %v4883
      %v4885 = vmul.f32 %v4861, 1.442695
      %v4886 = vpow.pop %v4885
      %v4887 = vmul.f32 %v4862, 1.442695
      %v4888 = vpow.pop %v4887
      %v4889 = vmul.f32 %v4863, 1.442695
      %v4890 = vpow.pop %v4889
      %v4891 = vmul.f32 %v4864, 1.442695
      %v4892 = vpow.pop %v4891
      %v4893 = vmul.f32 %v4865, 1.442695
      %v4894 = vpow.pop %v4893
      %v4895 = vmul.f32 %v4866, 1.442695
      %v4896 = vpow.pop %v4895
      %v4897 = vmul.f32 %v4867, 1.442695
      %v4898 = vpow.pop %v4897
      %v4899 = vmul.f32 %v4868, 1.442695
      %v4900 = vpow.pop %v4899
      %v4901 = vsel %vm1210, %v4870, 0.0
      %4902 = vadd.xlane.f32.xlu0 %v4901
      %v4903 = vpop.xlane.xlu0 %4902
      %v4904 = vsel %vm1210, %v4872, 0.0
      %4905 = vadd.xlane.f32.xlu0 %v4904
      %v4906 = vpop.xlane.xlu0 %4905
      %v4907 = vsel %vm1210, %v4874, 0.0
      %4908 = vadd.xlane.f32.xlu0 %v4907
      %v4909 = vpop.xlane.xlu0 %4908
      %v4910 = vsel %vm1210, %v4876, 0.0
      %4911 = vadd.xlane.f32.xlu0 %v4910
      %v4912 = vpop.xlane.xlu0 %4911
      %v4913 = vsel %vm1210, %v4878, 0.0
      %4914 = vadd.xlane.f32.xlu0 %v4913
      %v4915 = vpop.xlane.xlu0 %4914
      %v4916 = vsel %vm1210, %v4880, 0.0
      %4917 = vadd.xlane.f32.xlu0 %v4916
      %v4918 = vpop.xlane.xlu0 %4917
      %v4919 = vsel %vm1210, %v4882, 0.0
      %4920 = vadd.xlane.f32.xlu0 %v4919
      %v4921 = vpop.xlane.xlu0 %4920
      %v4922 = vsel %vm1210, %v4884, 0.0
      %4923 = vadd.xlane.f32.xlu0 %v4922
      %v4924 = vpop.xlane.xlu0 %4923
      %v4925 = vsel %vm1210, %v4886, 0.0
      %4926 = vadd.xlane.f32.xlu0 %v4925
      %v4927 = vpop.xlane.xlu0 %4926
      %v4928 = vsel %vm1210, %v4888, 0.0
      %4929 = vadd.xlane.f32.xlu0 %v4928
      %v4930 = vpop.xlane.xlu0 %4929
      %v4931 = vsel %vm1210, %v4890, 0.0
      %4932 = vadd.xlane.f32.xlu0 %v4931
      %v4933 = vpop.xlane.xlu0 %4932
      %v4934 = vsel %vm1210, %v4892, 0.0
      %4935 = vadd.xlane.f32.xlu0 %v4934
      %v4936 = vpop.xlane.xlu0 %4935
      %v4937 = vsel %vm1210, %v4894, 0.0
      %4938 = vadd.xlane.f32.xlu0 %v4937
      %v4939 = vpop.xlane.xlu0 %4938
      %v4940 = vsel %vm1210, %v4896, 0.0
      %4941 = vadd.xlane.f32.xlu0 %v4940
      %v4942 = vpop.xlane.xlu0 %4941
      %v4943 = vsel %vm1210, %v4898, 0.0
      %4944 = vadd.xlane.f32.xlu0 %v4943
      %v4945 = vpop.xlane.xlu0 %4944
      %v4946 = vsel %vm1210, %v4900, 0.0
      %4947 = vadd.xlane.f32.xlu0 %v4946
      %v4948 = vpop.xlane.xlu0 %4947
      %v4949 = vrcp.pop %v4903
      %v4950 = vrcp.pop %v4906
      %v4951 = vrcp.pop %v4909
      %v4952 = vrcp.pop %v4912
      %v4953 = vrcp.pop %v4915
      %v4954 = vrcp.pop %v4918
      %v4955 = vrcp.pop %v4921
      %v4956 = vrcp.pop %v4924
      %v4957 = vrcp.pop %v4927
      %v4958 = vrcp.pop %v4930
      %v4959 = vrcp.pop %v4933
      %v4960 = vrcp.pop %v4936
      %v4961 = vrcp.pop %v4939
      %v4962 = vrcp.pop %v4942
      %v4963 = vrcp.pop %v4945
      %v4964 = vrcp.pop %v4948
      %v4965 = vmul.f32 %v4870, %v4949
      %v4966 = vmul.f32 %v4872, %v4950
      %v4967 = vmul.f32 %v4874, %v4951
      %v4968 = vmul.f32 %v4876, %v4952
      %v4969 = vmul.f32 %v4878, %v4953
      %v4970 = vmul.f32 %v4880, %v4954
      %v4971 = vmul.f32 %v4882, %v4955
      %v4972 = vmul.f32 %v4884, %v4956
      %v4973 = vmul.f32 %v4886, %v4957
      %v4974 = vmul.f32 %v4888, %v4958
      %v4975 = vmul.f32 %v4890, %v4959
      %v4976 = vmul.f32 %v4892, %v4960
      %v4977 = vmul.f32 %v4894, %v4961
      %v4978 = vmul.f32 %v4896, %v4962
      %v4979 = vmul.f32 %v4898, %v4963
      %v4980 = vmul.f32 %v4900, %v4964
      %4981 = vrot.lane.b32.xlu0 %v387, 96
      %v4982 = vpop.permute.xlu0 %4981
      %4983 = vrot.lane.b32.xlu0 %v392, 96
      %v4984 = vpop.permute.xlu0 %4983
      %v4988 = vsel %vm1210, %v4965, 0
      %v4991 = vsel %vm1210, %v4966, 0
      %4993 = vmatprep.subr.mxu0 0.0
      %4994 = vmatpush1.msra.mxu0 0.0
      %4995 = vmatprep.subr.mxu0 0.0
      %4996 = vmatpush1.msra.mxu0 0.0
      %4997 = vmatprep.subr.mxu0 0.0
      %4998 = vmatpush1.msra.mxu0 0.0
      %4999 = vmatprep.subr.mxu0 0.0
      %5000 = vmatpush1.msra.mxu0 0.0
      %5001 = vmatprep.subr.mxu0 0.0
      %5002 = vmatpush1.msra.mxu0 0.0
      %5003 = vmatprep.subr.mxu0 0.0
      %5004 = vmatpush1.msra.mxu0 0.0
      %5005 = vmatprep.subr.mxu0 0.0
      %5006 = vmatpush1.msra.mxu0 0.0
      %5007 = vmatprep.subr.mxu0 0.0
      %5008 = vmatpush1.msra.mxu0 0.0
      %5009 = vmatprep.subr.mxu0 0.0
      %5010 = vmatpush1.msra.mxu0 0.0
      %5011 = vmatprep.subr.mxu0 0.0
      %5012 = vmatpush1.msra.mxu0 0.0
      %5013 = vmatprep.subr.mxu0 0.0
      %5014 = vmatpush1.msra.mxu0 0.0
      %5015 = vmatprep.subr.mxu0 0.0
      %5016 = vmatpush1.msra.mxu0 0.0
      %5017 = vmatprep.subr.mxu0 0.0
      %5018 = vmatpush1.msra.mxu0 0.0
      %5019 = vmatprep.subr.mxu0 0.0
      %5020 = vmatpush1.msra.mxu0 0.0
      %5021 = vmatprep.subr.mxu0 0.0
      %5022 = vmatpush1.msra.mxu0 %v4984
      %5023 = vmatprep.subr.mxu0 0.0
      %5024 = vmatpush1.msra.mxu0 %v4982
      %5025 = vmatprep.subr.mxu0 0.0
      %5026 = vmatpush2.msra.mxu0 0.0
      %5027 = vmatprep.subr.mxu0 0.0
      %5028 = vmatpush2.msra.mxu0 0.0
      %5029 = vmatprep.subr.mxu0 0.0
      %5030 = vmatpush2.msra.mxu0 0.0
      %5031 = vmatprep.subr.mxu0 0.0
      %5032 = vmatpush2.msra.mxu0 0.0
      %5033 = vmatprep.subr.mxu0 0.0
      %5034 = vmatpush2.msra.mxu0 0.0
      %5035 = vmatprep.subr.mxu0 0.0
      %5036 = vmatpush2.msra.mxu0 0.0
      %5037 = vmatprep.subr.mxu0 0.0
      %5038 = vmatpush2.msra.mxu0 0.0
      %5039 = vmatprep.subr.mxu0 0.0
      %5040 = vmatpush2.msra.mxu0 0.0
      %5041 = vmatprep.subr.mxu0 0.0
      %5042 = vmatpush2.msra.mxu0 0.0
      %5043 = vmatprep.subr.mxu0 0.0
      %5044 = vmatpush2.msra.mxu0 0.0
      %5045 = vmatprep.subr.mxu0 0.0
      %5046 = vmatpush2.msra.mxu0 0.0
      %5047 = vmatprep.subr.mxu0 0.0
      %5048 = vmatpush2.msra.mxu0 0.0
      %5049 = vmatprep.subr.mxu0 0.0
      %5050 = vmatpush2.msra.mxu0 0.0
      %5051 = vmatprep.subr.mxu0 0.0
      %5052 = vmatpush2.msra.mxu0 0.0
      %5053 = vmatprep.subr.mxu0 0.0
      %5054 = vmatpush2.msra.mxu0 0.0
      %5055 = vmatprep.subr.mxu0 0.0
      %5056 = vmatpush2.msra.mxu0 0.0
      %5057 = vmatprep.mubr.f32.mxu0 0.0
      %5058 = vmatmul.mubr.f32.gmra.mxu0 %v4988
      %v5059 = vpop.f32.mrf.mxu0
      %v5060 = vadd.f32 0.0, %v5059
      %v5061 = vpop.f32.mrf.mxu0
      %5062 = vmatprep.mubr.f32.mxu0 0.0
      %5063 = vmatmul.mubr.f32.gmra.mxu0 %v4991
      %v5064 = vpop.f32.mrf.mxu0
      %v5065 = vadd.f32 0.0, %v5064
      %v5066 = vpop.f32.mrf.mxu0
      %5067 = vdwg.mxu0
      %5068 = vrot.lane.b32.xlu0 %v397, 96
      %v5069 = vpop.permute.xlu0 %5068
      %5070 = vrot.lane.b32.xlu0 %v402, 96
      %v5071 = vpop.permute.xlu0 %5070
      %v5075 = vsel %vm1210, %v4967, 0
      %v5078 = vsel %vm1210, %v4968, 0
      %5080 = vmatprep.subr.mxu0 0.0
      %5081 = vmatpush1.msra.mxu0 0.0
      %5082 = vmatprep.subr.mxu0 0.0
      %5083 = vmatpush1.msra.mxu0 0.0
      %5084 = vmatprep.subr.mxu0 0.0
      %5085 = vmatpush1.msra.mxu0 0.0
      %5086 = vmatprep.subr.mxu0 0.0
      %5087 = vmatpush1.msra.mxu0 0.0
      %5088 = vmatprep.subr.mxu0 0.0
      %5089 = vmatpush1.msra.mxu0 0.0
      %5090 = vmatprep.subr.mxu0 0.0
      %5091 = vmatpush1.msra.mxu0 0.0
      %5092 = vmatprep.subr.mxu0 0.0
      %5093 = vmatpush1.msra.mxu0 0.0
      %5094 = vmatprep.subr.mxu0 0.0
      %5095 = vmatpush1.msra.mxu0 0.0
      %5096 = vmatprep.subr.mxu0 0.0
      %5097 = vmatpush1.msra.mxu0 0.0
      %5098 = vmatprep.subr.mxu0 0.0
      %5099 = vmatpush1.msra.mxu0 0.0
      %5100 = vmatprep.subr.mxu0 0.0
      %5101 = vmatpush1.msra.mxu0 0.0
      %5102 = vmatprep.subr.mxu0 0.0
      %5103 = vmatpush1.msra.mxu0 0.0
      %5104 = vmatprep.subr.mxu0 0.0
      %5105 = vmatpush1.msra.mxu0 0.0
      %5106 = vmatprep.subr.mxu0 0.0
      %5107 = vmatpush1.msra.mxu0 0.0
      %5108 = vmatprep.subr.mxu0 0.0
      %5109 = vmatpush1.msra.mxu0 %v5071
      %5110 = vmatprep.subr.mxu0 0.0
      %5111 = vmatpush1.msra.mxu0 %v5069
      %5112 = vmatprep.subr.mxu0 0.0
      %5113 = vmatpush2.msra.mxu0 0.0
      %5114 = vmatprep.subr.mxu0 0.0
      %5115 = vmatpush2.msra.mxu0 0.0
      %5116 = vmatprep.subr.mxu0 0.0
      %5117 = vmatpush2.msra.mxu0 0.0
      %5118 = vmatprep.subr.mxu0 0.0
      %5119 = vmatpush2.msra.mxu0 0.0
      %5120 = vmatprep.subr.mxu0 0.0
      %5121 = vmatpush2.msra.mxu0 0.0
      %5122 = vmatprep.subr.mxu0 0.0
      %5123 = vmatpush2.msra.mxu0 0.0
      %5124 = vmatprep.subr.mxu0 0.0
      %5125 = vmatpush2.msra.mxu0 0.0
      %5126 = vmatprep.subr.mxu0 0.0
      %5127 = vmatpush2.msra.mxu0 0.0
      %5128 = vmatprep.subr.mxu0 0.0
      %5129 = vmatpush2.msra.mxu0 0.0
      %5130 = vmatprep.subr.mxu0 0.0
      %5131 = vmatpush2.msra.mxu0 0.0
      %5132 = vmatprep.subr.mxu0 0.0
      %5133 = vmatpush2.msra.mxu0 0.0
      %5134 = vmatprep.subr.mxu0 0.0
      %5135 = vmatpush2.msra.mxu0 0.0
      %5136 = vmatprep.subr.mxu0 0.0
      %5137 = vmatpush2.msra.mxu0 0.0
      %5138 = vmatprep.subr.mxu0 0.0
      %5139 = vmatpush2.msra.mxu0 0.0
      %5140 = vmatprep.subr.mxu0 0.0
      %5141 = vmatpush2.msra.mxu0 0.0
      %5142 = vmatprep.subr.mxu0 0.0
      %5143 = vmatpush2.msra.mxu0 0.0
      %5144 = vmatprep.mubr.f32.mxu0 0.0
      %5145 = vmatmul.mubr.f32.gmra.mxu0 %v5075
      %v5146 = vpop.f32.mrf.mxu0
      %v5147 = vadd.f32 0.0, %v5146
      %v5148 = vpop.f32.mrf.mxu0
      %5149 = vmatprep.mubr.f32.mxu0 0.0
      %5150 = vmatmul.mubr.f32.gmra.mxu0 %v5078
      %v5151 = vpop.f32.mrf.mxu0
      %v5152 = vadd.f32 0.0, %v5151
      %v5153 = vpop.f32.mrf.mxu0
      %5154 = vdwg.mxu0
      %5155 = vrot.lane.b32.xlu0 %v407, 96
      %v5156 = vpop.permute.xlu0 %5155
      %5157 = vrot.lane.b32.xlu0 %v412, 96
      %v5158 = vpop.permute.xlu0 %5157
      %v5162 = vsel %vm1210, %v4969, 0
      %v5165 = vsel %vm1210, %v4970, 0
      %5167 = vmatprep.subr.mxu0 0.0
      %5168 = vmatpush1.msra.mxu0 0.0
      %5169 = vmatprep.subr.mxu0 0.0
      %5170 = vmatpush1.msra.mxu0 0.0
      %5171 = vmatprep.subr.mxu0 0.0
      %5172 = vmatpush1.msra.mxu0 0.0
      %5173 = vmatprep.subr.mxu0 0.0
      %5174 = vmatpush1.msra.mxu0 0.0
      %5175 = vmatprep.subr.mxu0 0.0
      %5176 = vmatpush1.msra.mxu0 0.0
      %5177 = vmatprep.subr.mxu0 0.0
      %5178 = vmatpush1.msra.mxu0 0.0
      %5179 = vmatprep.subr.mxu0 0.0
      %5180 = vmatpush1.msra.mxu0 0.0
      %5181 = vmatprep.subr.mxu0 0.0
      %5182 = vmatpush1.msra.mxu0 0.0
      %5183 = vmatprep.subr.mxu0 0.0
      %5184 = vmatpush1.msra.mxu0 0.0
      %5185 = vmatprep.subr.mxu0 0.0
      %5186 = vmatpush1.msra.mxu0 0.0
      %5187 = vmatprep.subr.mxu0 0.0
      %5188 = vmatpush1.msra.mxu0 0.0
      %5189 = vmatprep.subr.mxu0 0.0
      %5190 = vmatpush1.msra.mxu0 0.0
      %5191 = vmatprep.subr.mxu0 0.0
      %5192 = vmatpush1.msra.mxu0 0.0
      %5193 = vmatprep.subr.mxu0 0.0
      %5194 = vmatpush1.msra.mxu0 0.0
      %5195 = vmatprep.subr.mxu0 0.0
      %5196 = vmatpush1.msra.mxu0 %v5158
      %5197 = vmatprep.subr.mxu0 0.0
      %5198 = vmatpush1.msra.mxu0 %v5156
      %5199 = vmatprep.subr.mxu0 0.0
      %5200 = vmatpush2.msra.mxu0 0.0
      %5201 = vmatprep.subr.mxu0 0.0
      %5202 = vmatpush2.msra.mxu0 0.0
      %5203 = vmatprep.subr.mxu0 0.0
      %5204 = vmatpush2.msra.mxu0 0.0
      %5205 = vmatprep.subr.mxu0 0.0
      %5206 = vmatpush2.msra.mxu0 0.0
      %5207 = vmatprep.subr.mxu0 0.0
      %5208 = vmatpush2.msra.mxu0 0.0
      %5209 = vmatprep.subr.mxu0 0.0
      %5210 = vmatpush2.msra.mxu0 0.0
      %5211 = vmatprep.subr.mxu0 0.0
      %5212 = vmatpush2.msra.mxu0 0.0
      %5213 = vmatprep.subr.mxu0 0.0
      %5214 = vmatpush2.msra.mxu0 0.0
      %5215 = vmatprep.subr.mxu0 0.0
      %5216 = vmatpush2.msra.mxu0 0.0
      %5217 = vmatprep.subr.mxu0 0.0
      %5218 = vmatpush2.msra.mxu0 0.0
      %5219 = vmatprep.subr.mxu0 0.0
      %5220 = vmatpush2.msra.mxu0 0.0
      %5221 = vmatprep.subr.mxu0 0.0
      %5222 = vmatpush2.msra.mxu0 0.0
      %5223 = vmatprep.subr.mxu0 0.0
      %5224 = vmatpush2.msra.mxu0 0.0
      %5225 = vmatprep.subr.mxu0 0.0
      %5226 = vmatpush2.msra.mxu0 0.0
      %5227 = vmatprep.subr.mxu0 0.0
      %5228 = vmatpush2.msra.mxu0 0.0
      %5229 = vmatprep.subr.mxu0 0.0
      %5230 = vmatpush2.msra.mxu0 0.0
      %5231 = vmatprep.mubr.f32.mxu0 0.0
      %5232 = vmatmul.mubr.f32.gmra.mxu0 %v5162
      %v5233 = vpop.f32.mrf.mxu0
      %v5234 = vadd.f32 0.0, %v5233
      %v5235 = vpop.f32.mrf.mxu0
      %5236 = vmatprep.mubr.f32.mxu0 0.0
      %5237 = vmatmul.mubr.f32.gmra.mxu0 %v5165
      %v5238 = vpop.f32.mrf.mxu0
      %v5239 = vadd.f32 0.0, %v5238
      %v5240 = vpop.f32.mrf.mxu0
      %5241 = vdwg.mxu0
      %5242 = vrot.lane.b32.xlu0 %v417, 96
      %v5243 = vpop.permute.xlu0 %5242
      %5244 = vrot.lane.b32.xlu0 %v422, 96
      %v5245 = vpop.permute.xlu0 %5244
      %v5249 = vsel %vm1210, %v4971, 0
      %v5252 = vsel %vm1210, %v4972, 0
      %5254 = vmatprep.subr.mxu0 0.0
      %5255 = vmatpush1.msra.mxu0 0.0
      %5256 = vmatprep.subr.mxu0 0.0
      %5257 = vmatpush1.msra.mxu0 0.0
      %5258 = vmatprep.subr.mxu0 0.0
      %5259 = vmatpush1.msra.mxu0 0.0
      %5260 = vmatprep.subr.mxu0 0.0
      %5261 = vmatpush1.msra.mxu0 0.0
      %5262 = vmatprep.subr.mxu0 0.0
      %5263 = vmatpush1.msra.mxu0 0.0
      %5264 = vmatprep.subr.mxu0 0.0
      %5265 = vmatpush1.msra.mxu0 0.0
      %5266 = vmatprep.subr.mxu0 0.0
      %5267 = vmatpush1.msra.mxu0 0.0
      %5268 = vmatprep.subr.mxu0 0.0
      %5269 = vmatpush1.msra.mxu0 0.0
      %5270 = vmatprep.subr.mxu0 0.0
      %5271 = vmatpush1.msra.mxu0 0.0
      %5272 = vmatprep.subr.mxu0 0.0
      %5273 = vmatpush1.msra.mxu0 0.0
      %5274 = vmatprep.subr.mxu0 0.0
      %5275 = vmatpush1.msra.mxu0 0.0
      %5276 = vmatprep.subr.mxu0 0.0
      %5277 = vmatpush1.msra.mxu0 0.0
      %5278 = vmatprep.subr.mxu0 0.0
      %5279 = vmatpush1.msra.mxu0 0.0
      %5280 = vmatprep.subr.mxu0 0.0
      %5281 = vmatpush1.msra.mxu0 0.0
      %5282 = vmatprep.subr.mxu0 0.0
      %5283 = vmatpush1.msra.mxu0 %v5245
      %5284 = vmatprep.subr.mxu0 0.0
      %5285 = vmatpush1.msra.mxu0 %v5243
      %5286 = vmatprep.subr.mxu0 0.0
      %5287 = vmatpush2.msra.mxu0 0.0
      %5288 = vmatprep.subr.mxu0 0.0
      %5289 = vmatpush2.msra.mxu0 0.0
      %5290 = vmatprep.subr.mxu0 0.0
      %5291 = vmatpush2.msra.mxu0 0.0
      %5292 = vmatprep.subr.mxu0 0.0
      %5293 = vmatpush2.msra.mxu0 0.0
      %5294 = vmatprep.subr.mxu0 0.0
      %5295 = vmatpush2.msra.mxu0 0.0
      %5296 = vmatprep.subr.mxu0 0.0
      %5297 = vmatpush2.msra.mxu0 0.0
      %5298 = vmatprep.subr.mxu0 0.0
      %5299 = vmatpush2.msra.mxu0 0.0
      %5300 = vmatprep.subr.mxu0 0.0
      %5301 = vmatpush2.msra.mxu0 0.0
      %5302 = vmatprep.subr.mxu0 0.0
      %5303 = vmatpush2.msra.mxu0 0.0
      %5304 = vmatprep.subr.mxu0 0.0
      %5305 = vmatpush2.msra.mxu0 0.0
      %5306 = vmatprep.subr.mxu0 0.0
      %5307 = vmatpush2.msra.mxu0 0.0
      %5308 = vmatprep.subr.mxu0 0.0
      %5309 = vmatpush2.msra.mxu0 0.0
      %5310 = vmatprep.subr.mxu0 0.0
      %5311 = vmatpush2.msra.mxu0 0.0
      %5312 = vmatprep.subr.mxu0 0.0
      %5313 = vmatpush2.msra.mxu0 0.0
      %5314 = vmatprep.subr.mxu0 0.0
      %5315 = vmatpush2.msra.mxu0 0.0
      %5316 = vmatprep.subr.mxu0 0.0
      %5317 = vmatpush2.msra.mxu0 0.0
      %5318 = vmatprep.mubr.f32.mxu0 0.0
      %5319 = vmatmul.mubr.f32.gmra.mxu0 %v5249
      %v5320 = vpop.f32.mrf.mxu0
      %v5321 = vadd.f32 0.0, %v5320
      %v5322 = vpop.f32.mrf.mxu0
      %5323 = vmatprep.mubr.f32.mxu0 0.0
      %5324 = vmatmul.mubr.f32.gmra.mxu0 %v5252
      %v5325 = vpop.f32.mrf.mxu0
      %v5326 = vadd.f32 0.0, %v5325
      %v5327 = vpop.f32.mrf.mxu0
      %5328 = vdwg.mxu0
      %5329 = vrot.lane.b32.xlu0 %v427, 96
      %v5330 = vpop.permute.xlu0 %5329
      %5331 = vrot.lane.b32.xlu0 %v432, 96
      %v5332 = vpop.permute.xlu0 %5331
      %v5336 = vsel %vm1210, %v4973, 0
      %v5339 = vsel %vm1210, %v4974, 0
      %5341 = vmatprep.subr.mxu0 0.0
      %5342 = vmatpush1.msra.mxu0 0.0
      %5343 = vmatprep.subr.mxu0 0.0
      %5344 = vmatpush1.msra.mxu0 0.0
      %5345 = vmatprep.subr.mxu0 0.0
      %5346 = vmatpush1.msra.mxu0 0.0
      %5347 = vmatprep.subr.mxu0 0.0
      %5348 = vmatpush1.msra.mxu0 0.0
      %5349 = vmatprep.subr.mxu0 0.0
      %5350 = vmatpush1.msra.mxu0 0.0
      %5351 = vmatprep.subr.mxu0 0.0
      %5352 = vmatpush1.msra.mxu0 0.0
      %5353 = vmatprep.subr.mxu0 0.0
      %5354 = vmatpush1.msra.mxu0 0.0
      %5355 = vmatprep.subr.mxu0 0.0
      %5356 = vmatpush1.msra.mxu0 0.0
      %5357 = vmatprep.subr.mxu0 0.0
      %5358 = vmatpush1.msra.mxu0 0.0
      %5359 = vmatprep.subr.mxu0 0.0
      %5360 = vmatpush1.msra.mxu0 0.0
      %5361 = vmatprep.subr.mxu0 0.0
      %5362 = vmatpush1.msra.mxu0 0.0
      %5363 = vmatprep.subr.mxu0 0.0
      %5364 = vmatpush1.msra.mxu0 0.0
      %5365 = vmatprep.subr.mxu0 0.0
      %5366 = vmatpush1.msra.mxu0 0.0
      %5367 = vmatprep.subr.mxu0 0.0
      %5368 = vmatpush1.msra.mxu0 0.0
      %5369 = vmatprep.subr.mxu0 0.0
      %5370 = vmatpush1.msra.mxu0 %v5332
      %5371 = vmatprep.subr.mxu0 0.0
      %5372 = vmatpush1.msra.mxu0 %v5330
      %5373 = vmatprep.subr.mxu0 0.0
      %5374 = vmatpush2.msra.mxu0 0.0
      %5375 = vmatprep.subr.mxu0 0.0
      %5376 = vmatpush2.msra.mxu0 0.0
      %5377 = vmatprep.subr.mxu0 0.0
      %5378 = vmatpush2.msra.mxu0 0.0
      %5379 = vmatprep.subr.mxu0 0.0
      %5380 = vmatpush2.msra.mxu0 0.0
      %5381 = vmatprep.subr.mxu0 0.0
      %5382 = vmatpush2.msra.mxu0 0.0
      %5383 = vmatprep.subr.mxu0 0.0
      %5384 = vmatpush2.msra.mxu0 0.0
      %5385 = vmatprep.subr.mxu0 0.0
      %5386 = vmatpush2.msra.mxu0 0.0
      %5387 = vmatprep.subr.mxu0 0.0
      %5388 = vmatpush2.msra.mxu0 0.0
      %5389 = vmatprep.subr.mxu0 0.0
      %5390 = vmatpush2.msra.mxu0 0.0
      %5391 = vmatprep.subr.mxu0 0.0
      %5392 = vmatpush2.msra.mxu0 0.0
      %5393 = vmatprep.subr.mxu0 0.0
      %5394 = vmatpush2.msra.mxu0 0.0
      %5395 = vmatprep.subr.mxu0 0.0
      %5396 = vmatpush2.msra.mxu0 0.0
      %5397 = vmatprep.subr.mxu0 0.0
      %5398 = vmatpush2.msra.mxu0 0.0
      %5399 = vmatprep.subr.mxu0 0.0
      %5400 = vmatpush2.msra.mxu0 0.0
      %5401 = vmatprep.subr.mxu0 0.0
      %5402 = vmatpush2.msra.mxu0 0.0
      %5403 = vmatprep.subr.mxu0 0.0
      %5404 = vmatpush2.msra.mxu0 0.0
      %5405 = vmatprep.mubr.f32.mxu0 0.0
      %5406 = vmatmul.mubr.f32.gmra.mxu0 %v5336
      %v5407 = vpop.f32.mrf.mxu0
      %v5408 = vadd.f32 0.0, %v5407
      %v5409 = vpop.f32.mrf.mxu0
      %5410 = vmatprep.mubr.f32.mxu0 0.0
      %5411 = vmatmul.mubr.f32.gmra.mxu0 %v5339
      %v5412 = vpop.f32.mrf.mxu0
      %v5413 = vadd.f32 0.0, %v5412
      %v5414 = vpop.f32.mrf.mxu0
      %5415 = vdwg.mxu0
      %5416 = vrot.lane.b32.xlu0 %v437, 96
      %v5417 = vpop.permute.xlu0 %5416
      %5418 = vrot.lane.b32.xlu0 %v442, 96
      %v5419 = vpop.permute.xlu0 %5418
      %v5423 = vsel %vm1210, %v4975, 0
      %v5426 = vsel %vm1210, %v4976, 0
      %5428 = vmatprep.subr.mxu0 0.0
      %5429 = vmatpush1.msra.mxu0 0.0
      %5430 = vmatprep.subr.mxu0 0.0
      %5431 = vmatpush1.msra.mxu0 0.0
      %5432 = vmatprep.subr.mxu0 0.0
      %5433 = vmatpush1.msra.mxu0 0.0
      %5434 = vmatprep.subr.mxu0 0.0
      %5435 = vmatpush1.msra.mxu0 0.0
      %5436 = vmatprep.subr.mxu0 0.0
      %5437 = vmatpush1.msra.mxu0 0.0
      %5438 = vmatprep.subr.mxu0 0.0
      %5439 = vmatpush1.msra.mxu0 0.0
      %5440 = vmatprep.subr.mxu0 0.0
      %5441 = vmatpush1.msra.mxu0 0.0
      %5442 = vmatprep.subr.mxu0 0.0
      %5443 = vmatpush1.msra.mxu0 0.0
      %5444 = vmatprep.subr.mxu0 0.0
      %5445 = vmatpush1.msra.mxu0 0.0
      %5446 = vmatprep.subr.mxu0 0.0
      %5447 = vmatpush1.msra.mxu0 0.0
      %5448 = vmatprep.subr.mxu0 0.0
      %5449 = vmatpush1.msra.mxu0 0.0
      %5450 = vmatprep.subr.mxu0 0.0
      %5451 = vmatpush1.msra.mxu0 0.0
      %5452 = vmatprep.subr.mxu0 0.0
      %5453 = vmatpush1.msra.mxu0 0.0
      %5454 = vmatprep.subr.mxu0 0.0
      %5455 = vmatpush1.msra.mxu0 0.0
      %5456 = vmatprep.subr.mxu0 0.0
      %5457 = vmatpush1.msra.mxu0 %v5419
      %5458 = vmatprep.subr.mxu0 0.0
      %5459 = vmatpush1.msra.mxu0 %v5417
      %5460 = vmatprep.subr.mxu0 0.0
      %5461 = vmatpush2.msra.mxu0 0.0
      %5462 = vmatprep.subr.mxu0 0.0
      %5463 = vmatpush2.msra.mxu0 0.0
      %5464 = vmatprep.subr.mxu0 0.0
      %5465 = vmatpush2.msra.mxu0 0.0
      %5466 = vmatprep.subr.mxu0 0.0
      %5467 = vmatpush2.msra.mxu0 0.0
      %5468 = vmatprep.subr.mxu0 0.0
      %5469 = vmatpush2.msra.mxu0 0.0
      %5470 = vmatprep.subr.mxu0 0.0
      %5471 = vmatpush2.msra.mxu0 0.0
      %5472 = vmatprep.subr.mxu0 0.0
      %5473 = vmatpush2.msra.mxu0 0.0
      %5474 = vmatprep.subr.mxu0 0.0
      %5475 = vmatpush2.msra.mxu0 0.0
      %5476 = vmatprep.subr.mxu0 0.0
      %5477 = vmatpush2.msra.mxu0 0.0
      %5478 = vmatprep.subr.mxu0 0.0
      %5479 = vmatpush2.msra.mxu0 0.0
      %5480 = vmatprep.subr.mxu0 0.0
      %5481 = vmatpush2.msra.mxu0 0.0
      %5482 = vmatprep.subr.mxu0 0.0
      %5483 = vmatpush2.msra.mxu0 0.0
      %5484 = vmatprep.subr.mxu0 0.0
      %5485 = vmatpush2.msra.mxu0 0.0
      %5486 = vmatprep.subr.mxu0 0.0
      %5487 = vmatpush2.msra.mxu0 0.0
      %5488 = vmatprep.subr.mxu0 0.0
      %5489 = vmatpush2.msra.mxu0 0.0
      %5490 = vmatprep.subr.mxu0 0.0
      %5491 = vmatpush2.msra.mxu0 0.0
      %5492 = vmatprep.mubr.f32.mxu0 0.0
      %5493 = vmatmul.mubr.f32.gmra.mxu0 %v5423
      %v5494 = vpop.f32.mrf.mxu0
      %v5495 = vadd.f32 0.0, %v5494
      %v5496 = vpop.f32.mrf.mxu0
      %5497 = vmatprep.mubr.f32.mxu0 0.0
      %5498 = vmatmul.mubr.f32.gmra.mxu0 %v5426
      %v5499 = vpop.f32.mrf.mxu0
      %v5500 = vadd.f32 0.0, %v5499
      %v5501 = vpop.f32.mrf.mxu0
      %5502 = vdwg.mxu0
      %5503 = vrot.lane.b32.xlu0 %v447, 96
      %v5504 = vpop.permute.xlu0 %5503
      %5505 = vrot.lane.b32.xlu0 %v452, 96
      %v5506 = vpop.permute.xlu0 %5505
      %v5510 = vsel %vm1210, %v4977, 0
      %v5513 = vsel %vm1210, %v4978, 0
      %5515 = vmatprep.subr.mxu0 0.0
      %5516 = vmatpush1.msra.mxu0 0.0
      %5517 = vmatprep.subr.mxu0 0.0
      %5518 = vmatpush1.msra.mxu0 0.0
      %5519 = vmatprep.subr.mxu0 0.0
      %5520 = vmatpush1.msra.mxu0 0.0
      %5521 = vmatprep.subr.mxu0 0.0
      %5522 = vmatpush1.msra.mxu0 0.0
      %5523 = vmatprep.subr.mxu0 0.0
      %5524 = vmatpush1.msra.mxu0 0.0
      %5525 = vmatprep.subr.mxu0 0.0
      %5526 = vmatpush1.msra.mxu0 0.0
      %5527 = vmatprep.subr.mxu0 0.0
      %5528 = vmatpush1.msra.mxu0 0.0
      %5529 = vmatprep.subr.mxu0 0.0
      %5530 = vmatpush1.msra.mxu0 0.0
      %5531 = vmatprep.subr.mxu0 0.0
      %5532 = vmatpush1.msra.mxu0 0.0
      %5533 = vmatprep.subr.mxu0 0.0
      %5534 = vmatpush1.msra.mxu0 0.0
      %5535 = vmatprep.subr.mxu0 0.0
      %5536 = vmatpush1.msra.mxu0 0.0
      %5537 = vmatprep.subr.mxu0 0.0
      %5538 = vmatpush1.msra.mxu0 0.0
      %5539 = vmatprep.subr.mxu0 0.0
      %5540 = vmatpush1.msra.mxu0 0.0
      %5541 = vmatprep.subr.mxu0 0.0
      %5542 = vmatpush1.msra.mxu0 0.0
      %5543 = vmatprep.subr.mxu0 0.0
      %5544 = vmatpush1.msra.mxu0 %v5506
      %5545 = vmatprep.subr.mxu0 0.0
      %5546 = vmatpush1.msra.mxu0 %v5504
      %5547 = vmatprep.subr.mxu0 0.0
      %5548 = vmatpush2.msra.mxu0 0.0
      %5549 = vmatprep.subr.mxu0 0.0
      %5550 = vmatpush2.msra.mxu0 0.0
      %5551 = vmatprep.subr.mxu0 0.0
      %5552 = vmatpush2.msra.mxu0 0.0
      %5553 = vmatprep.subr.mxu0 0.0
      %5554 = vmatpush2.msra.mxu0 0.0
      %5555 = vmatprep.subr.mxu0 0.0
      %5556 = vmatpush2.msra.mxu0 0.0
      %5557 = vmatprep.subr.mxu0 0.0
      %5558 = vmatpush2.msra.mxu0 0.0
      %5559 = vmatprep.subr.mxu0 0.0
      %5560 = vmatpush2.msra.mxu0 0.0
      %5561 = vmatprep.subr.mxu0 0.0
      %5562 = vmatpush2.msra.mxu0 0.0
      %5563 = vmatprep.subr.mxu0 0.0
      %5564 = vmatpush2.msra.mxu0 0.0
      %5565 = vmatprep.subr.mxu0 0.0
      %5566 = vmatpush2.msra.mxu0 0.0
      %5567 = vmatprep.subr.mxu0 0.0
      %5568 = vmatpush2.msra.mxu0 0.0
      %5569 = vmatprep.subr.mxu0 0.0
      %5570 = vmatpush2.msra.mxu0 0.0
      %5571 = vmatprep.subr.mxu0 0.0
      %5572 = vmatpush2.msra.mxu0 0.0
      %5573 = vmatprep.subr.mxu0 0.0
      %5574 = vmatpush2.msra.mxu0 0.0
      %5575 = vmatprep.subr.mxu0 0.0
      %5576 = vmatpush2.msra.mxu0 0.0
      %5577 = vmatprep.subr.mxu0 0.0
      %5578 = vmatpush2.msra.mxu0 0.0
      %5579 = vmatprep.mubr.f32.mxu0 0.0
      %5580 = vmatmul.mubr.f32.gmra.mxu0 %v5510
      %v5581 = vpop.f32.mrf.mxu0
      %v5582 = vadd.f32 0.0, %v5581
      %v5583 = vpop.f32.mrf.mxu0
      %5584 = vmatprep.mubr.f32.mxu0 0.0
      %5585 = vmatmul.mubr.f32.gmra.mxu0 %v5513
      %v5586 = vpop.f32.mrf.mxu0
      %v5587 = vadd.f32 0.0, %v5586
      %v5588 = vpop.f32.mrf.mxu0
      %5589 = vdwg.mxu0
      %5590 = vrot.lane.b32.xlu0 %v457, 96
      %v5591 = vpop.permute.xlu0 %5590
      %5592 = vrot.lane.b32.xlu0 %v462, 96
      %v5593 = vpop.permute.xlu0 %5592
      %v5597 = vsel %vm1210, %v4979, 0
      %v5600 = vsel %vm1210, %v4980, 0
      %5602 = vmatprep.subr.mxu0 0.0
      %5603 = vmatpush1.msra.mxu0 0.0
      %5604 = vmatprep.subr.mxu0 0.0
      %5605 = vmatpush1.msra.mxu0 0.0
      %5606 = vmatprep.subr.mxu0 0.0
      %5607 = vmatpush1.msra.mxu0 0.0
      %5608 = vmatprep.subr.mxu0 0.0
      %5609 = vmatpush1.msra.mxu0 0.0
      %5610 = vmatprep.subr.mxu0 0.0
      %5611 = vmatpush1.msra.mxu0 0.0
      %5612 = vmatprep.subr.mxu0 0.0
      %5613 = vmatpush1.msra.mxu0 0.0
      %5614 = vmatprep.subr.mxu0 0.0
      %5615 = vmatpush1.msra.mxu0 0.0
      %5616 = vmatprep.subr.mxu0 0.0
      %5617 = vmatpush1.msra.mxu0 0.0
      %5618 = vmatprep.subr.mxu0 0.0
      %5619 = vmatpush1.msra.mxu0 0.0
      %5620 = vmatprep.subr.mxu0 0.0
      %5621 = vmatpush1.msra.mxu0 0.0
      %5622 = vmatprep.subr.mxu0 0.0
      %5623 = vmatpush1.msra.mxu0 0.0
      %5624 = vmatprep.subr.mxu0 0.0
      %5625 = vmatpush1.msra.mxu0 0.0
      %5626 = vmatprep.subr.mxu0 0.0
      %5627 = vmatpush1.msra.mxu0 0.0
      %5628 = vmatprep.subr.mxu0 0.0
      %5629 = vmatpush1.msra.mxu0 0.0
      %5630 = vmatprep.subr.mxu0 0.0
      %5631 = vmatpush1.msra.mxu0 %v5593
      %5632 = vmatprep.subr.mxu0 0.0
      %5633 = vmatpush1.msra.mxu0 %v5591
      %5634 = vmatprep.subr.mxu0 0.0
      %5635 = vmatpush2.msra.mxu0 0.0
      %5636 = vmatprep.subr.mxu0 0.0
      %5637 = vmatpush2.msra.mxu0 0.0
      %5638 = vmatprep.subr.mxu0 0.0
      %5639 = vmatpush2.msra.mxu0 0.0
      %5640 = vmatprep.subr.mxu0 0.0
      %5641 = vmatpush2.msra.mxu0 0.0
      %5642 = vmatprep.subr.mxu0 0.0
      %5643 = vmatpush2.msra.mxu0 0.0
      %5644 = vmatprep.subr.mxu0 0.0
      %5645 = vmatpush2.msra.mxu0 0.0
      %5646 = vmatprep.subr.mxu0 0.0
      %5647 = vmatpush2.msra.mxu0 0.0
      %5648 = vmatprep.subr.mxu0 0.0
      %5649 = vmatpush2.msra.mxu0 0.0
      %5650 = vmatprep.subr.mxu0 0.0
      %5651 = vmatpush2.msra.mxu0 0.0
      %5652 = vmatprep.subr.mxu0 0.0
      %5653 = vmatpush2.msra.mxu0 0.0
      %5654 = vmatprep.subr.mxu0 0.0
      %5655 = vmatpush2.msra.mxu0 0.0
      %5656 = vmatprep.subr.mxu0 0.0
      %5657 = vmatpush2.msra.mxu0 0.0
      %5658 = vmatprep.subr.mxu0 0.0
      %5659 = vmatpush2.msra.mxu0 0.0
      %5660 = vmatprep.subr.mxu0 0.0
      %5661 = vmatpush2.msra.mxu0 0.0
      %5662 = vmatprep.subr.mxu0 0.0
      %5663 = vmatpush2.msra.mxu0 0.0
      %5664 = vmatprep.subr.mxu0 0.0
      %5665 = vmatpush2.msra.mxu0 0.0
      %5666 = vmatprep.mubr.f32.mxu0 0.0
      %5667 = vmatmul.mubr.f32.gmra.mxu0 %v5597
      %v5668 = vpop.f32.mrf.mxu0
      %v5669 = vadd.f32 0.0, %v5668
      %v5670 = vpop.f32.mrf.mxu0
      %5671 = vmatprep.mubr.f32.mxu0 0.0
      %5672 = vmatmul.mubr.f32.gmra.mxu0 %v5600
      %v5673 = vpop.f32.mrf.mxu0
      %v5674 = vadd.f32 0.0, %v5673
      %v5675 = vpop.f32.mrf.mxu0
      %5676 = vdwg.mxu0
      %v5677 = vld [vmem:[%s3 + $0x8] sm:$0xf]
      %v5679 = vsel %vm487, %v5060, 0
      %v5682 = vsel %vm487, %v5065, 0
      %v5685 = vsel %vm487, %v5147, 0
      %v5688 = vsel %vm487, %v5152, 0
      %v5691 = vsel %vm487, %v5234, 0
      %v5694 = vsel %vm487, %v5239, 0
      %v5697 = vsel %vm487, %v5321, 0
      %v5700 = vsel %vm487, %v5326, 0
      %v5703 = vsel %vm487, %v5408, 0
      %v5706 = vsel %vm487, %v5413, 0
      %v5709 = vsel %vm487, %v5495, 0
      %v5712 = vsel %vm487, %v5500, 0
      %v5715 = vsel %vm487, %v5582, 0
      %v5718 = vsel %vm487, %v5587, 0
      %v5721 = vsel %vm487, %v5669, 0
      %v5724 = vsel %vm487, %v5674, 0
      %v5727 = vsel %vm316, %v5677, 0
      %5729 = vmatprep.subr.mxu0 0.0
      %5730 = vmatpush1.msra.mxu0 0.0
      %5731 = vmatprep.subr.mxu0 0.0
      %5732 = vmatpush1.msra.mxu0 0.0
      %5733 = vmatprep.subr.mxu0 0.0
      %5734 = vmatpush1.msra.mxu0 0.0
      %5735 = vmatprep.subr.mxu0 0.0
      %5736 = vmatpush1.msra.mxu0 0.0
      %5737 = vmatprep.subr.mxu0 0.0
      %5738 = vmatpush1.msra.mxu0 0.0
      %5739 = vmatprep.subr.mxu0 0.0
      %5740 = vmatpush1.msra.mxu0 0.0
      %5741 = vmatprep.subr.mxu0 0.0
      %5742 = vmatpush1.msra.mxu0 0.0
      %5743 = vmatprep.subr.mxu0 0.0
      %5744 = vmatpush1.msra.mxu0 0.0
      %5745 = vmatprep.subr.mxu0 0.0
      %5746 = vmatpush1.msra.mxu0 0.0
      %5747 = vmatprep.subr.mxu0 0.0
      %5748 = vmatpush1.msra.mxu0 0.0
      %5749 = vmatprep.subr.mxu0 0.0
      %5750 = vmatpush1.msra.mxu0 0.0
      %5751 = vmatprep.subr.mxu0 0.0
      %5752 = vmatpush1.msra.mxu0 0.0
      %5753 = vmatprep.subr.mxu0 0.0
      %5754 = vmatpush1.msra.mxu0 0.0
      %5755 = vmatprep.subr.mxu0 0.0
      %5756 = vmatpush1.msra.mxu0 0.0
      %5757 = vmatprep.subr.mxu0 0.0
      %5758 = vmatpush1.msra.mxu0 0.0
      %5759 = vmatprep.subr.mxu0 0.0
      %5760 = vmatpush1.msra.mxu0 %v5727
      %5761 = vmatprep.subr.mxu0 0.0
      %5762 = vmatpush2.msra.mxu0 0.0
      %5763 = vmatprep.subr.mxu0 0.0
      %5764 = vmatpush2.msra.mxu0 0.0
      %5765 = vmatprep.subr.mxu0 0.0
      %5766 = vmatpush2.msra.mxu0 0.0
      %5767 = vmatprep.subr.mxu0 0.0
      %5768 = vmatpush2.msra.mxu0 0.0
      %5769 = vmatprep.subr.mxu0 0.0
      %5770 = vmatpush2.msra.mxu0 0.0
      %5771 = vmatprep.subr.mxu0 0.0
      %5772 = vmatpush2.msra.mxu0 0.0
      %5773 = vmatprep.subr.mxu0 0.0
      %5774 = vmatpush2.msra.mxu0 0.0
      %5775 = vmatprep.subr.mxu0 0.0
      %5776 = vmatpush2.msra.mxu0 0.0
      %5777 = vmatprep.subr.mxu0 0.0
      %5778 = vmatpush2.msra.mxu0 0.0
      %5779 = vmatprep.subr.mxu0 0.0
      %5780 = vmatpush2.msra.mxu0 0.0
      %5781 = vmatprep.subr.mxu0 0.0
      %5782 = vmatpush2.msra.mxu0 0.0
      %5783 = vmatprep.subr.mxu0 0.0
      %5784 = vmatpush2.msra.mxu0 0.0
      %5785 = vmatprep.subr.mxu0 0.0
      %5786 = vmatpush2.msra.mxu0 0.0
      %5787 = vmatprep.subr.mxu0 0.0
      %5788 = vmatpush2.msra.mxu0 0.0
      %5789 = vmatprep.subr.mxu0 0.0
      %5790 = vmatpush2.msra.mxu0 0.0
      %5791 = vmatprep.subr.mxu0 0.0
      %5792 = vmatpush2.msra.mxu0 0.0
      %5793 = vmatprep.mubr.f32.mxu0 0.0
      %5794 = vmatmul.mubr.f32.gmra.mxu0 %v5679
      %v5795 = vpop.f32.mrf.mxu0
      %v5796 = vadd.f32 0.0, %v5795
      %v5797 = vpop.f32.mrf.mxu0
      %5798 = vmatprep.mubr.f32.mxu0 0.0
      %5799 = vmatmul.mubr.f32.gmra.mxu0 %v5682
      %v5800 = vpop.f32.mrf.mxu0
      %v5801 = vadd.f32 0.0, %v5800
      %v5802 = vpop.f32.mrf.mxu0
      %5803 = vmatprep.mubr.f32.mxu0 0.0
      %5804 = vmatmul.mubr.f32.gmra.mxu0 %v5685
      %v5805 = vpop.f32.mrf.mxu0
      %v5806 = vadd.f32 0.0, %v5805
      %v5807 = vpop.f32.mrf.mxu0
      %5808 = vmatprep.mubr.f32.mxu0 0.0
      %5809 = vmatmul.mubr.f32.gmra.mxu0 %v5688
      %v5810 = vpop.f32.mrf.mxu0
      %v5811 = vadd.f32 0.0, %v5810
      %v5812 = vpop.f32.mrf.mxu0
      %5813 = vmatprep.mubr.f32.mxu0 0.0
      %5814 = vmatmul.mubr.f32.gmra.mxu0 %v5691
      %v5815 = vpop.f32.mrf.mxu0
      %v5816 = vadd.f32 0.0, %v5815
      %v5817 = vpop.f32.mrf.mxu0
      %5818 = vmatprep.mubr.f32.mxu0 0.0
      %5819 = vmatmul.mubr.f32.gmra.mxu0 %v5694
      %v5820 = vpop.f32.mrf.mxu0
      %v5821 = vadd.f32 0.0, %v5820
      %v5822 = vpop.f32.mrf.mxu0
      %5823 = vmatprep.mubr.f32.mxu0 0.0
      %5824 = vmatmul.mubr.f32.gmra.mxu0 %v5697
      %v5825 = vpop.f32.mrf.mxu0
      %v5826 = vadd.f32 0.0, %v5825
      %v5827 = vpop.f32.mrf.mxu0
      %5828 = vmatprep.mubr.f32.mxu0 0.0
      %5829 = vmatmul.mubr.f32.gmra.mxu0 %v5700
      %v5830 = vpop.f32.mrf.mxu0
      %v5831 = vadd.f32 0.0, %v5830
      %v5832 = vpop.f32.mrf.mxu0
      %5833 = vmatprep.mubr.f32.mxu0 0.0
      %5834 = vmatmul.mubr.f32.gmra.mxu0 %v5703
      %v5835 = vpop.f32.mrf.mxu0
      %v5836 = vadd.f32 0.0, %v5835
      %v5837 = vpop.f32.mrf.mxu0
      %5838 = vmatprep.mubr.f32.mxu0 0.0
      %5839 = vmatmul.mubr.f32.gmra.mxu0 %v5706
      %v5840 = vpop.f32.mrf.mxu0
      %v5841 = vadd.f32 0.0, %v5840
      %v5842 = vpop.f32.mrf.mxu0
      %5843 = vmatprep.mubr.f32.mxu0 0.0
      %5844 = vmatmul.mubr.f32.gmra.mxu0 %v5709
      %v5845 = vpop.f32.mrf.mxu0
      %v5846 = vadd.f32 0.0, %v5845
      %v5847 = vpop.f32.mrf.mxu0
      %5848 = vmatprep.mubr.f32.mxu0 0.0
      %5849 = vmatmul.mubr.f32.gmra.mxu0 %v5712
      %v5850 = vpop.f32.mrf.mxu0
      %v5851 = vadd.f32 0.0, %v5850
      %v5852 = vpop.f32.mrf.mxu0
      %5853 = vmatprep.mubr.f32.mxu0 0.0
      %5854 = vmatmul.mubr.f32.gmra.mxu0 %v5715
      %v5855 = vpop.f32.mrf.mxu0
      %v5856 = vadd.f32 0.0, %v5855
      %v5857 = vpop.f32.mrf.mxu0
      %5858 = vmatprep.mubr.f32.mxu0 0.0
      %5859 = vmatmul.mubr.f32.gmra.mxu0 %v5718
      %v5860 = vpop.f32.mrf.mxu0
      %v5861 = vadd.f32 0.0, %v5860
      %v5862 = vpop.f32.mrf.mxu0
      %5863 = vmatprep.mubr.f32.mxu0 0.0
      %5864 = vmatmul.mubr.f32.gmra.mxu0 %v5721
      %v5865 = vpop.f32.mrf.mxu0
      %v5866 = vadd.f32 0.0, %v5865
      %v5867 = vpop.f32.mrf.mxu0
      %5868 = vmatprep.mubr.f32.mxu0 0.0
      %5869 = vmatmul.mubr.f32.gmra.mxu0 %v5724
      %v5870 = vpop.f32.mrf.mxu0
      %v5871 = vadd.f32 0.0, %v5870
      %v5872 = vpop.f32.mrf.mxu0
      %5873 = vdwg.mxu0
      %v5874 = vadd.f32 %v3999, %v5796
      %v5875 = vadd.f32 %v4004, %v5801
      %v5876 = vadd.f32 %v4009, %v5806
      %v5877 = vadd.f32 %v4014, %v5811
      %v5878 = vadd.f32 %v4019, %v5816
      %v5879 = vadd.f32 %v4024, %v5821
      %v5880 = vadd.f32 %v4029, %v5826
      %v5881 = vadd.f32 %v4034, %v5831
      %v5882 = vadd.f32 %v4039, %v5836
      %v5883 = vadd.f32 %v4044, %v5841
      %v5884 = vadd.f32 %v4049, %v5846
      %v5885 = vadd.f32 %v4054, %v5851
      %v5886 = vadd.f32 %v4059, %v5856
      %v5887 = vadd.f32 %v4064, %v5861
      %v5888 = vadd.f32 %v4069, %v5866
      %v5889 = vadd.f32 %v4074, %v5871
      %5890 = vst.msk [vmem:[%s240] sm:$0xff] %vm267, %v5874
      %5891 = vst.msk [vmem:[%s240 + $0x8] sm:$0xff] %vm267, %v5875
      %5892 = vst.msk [vmem:[%s240 + $0x10] sm:$0xff] %vm267, %v5876
      %5893 = vst.msk [vmem:[%s240 + $0x18] sm:$0xff] %vm267, %v5877
      %5894 = vst.msk [vmem:[%s240 + $0x20] sm:$0xff] %vm267, %v5878
      %5895 = vst.msk [vmem:[%s240 + $0x28] sm:$0xff] %vm267, %v5879
      %5896 = vst.msk [vmem:[%s240 + $0x30] sm:$0xff] %vm267, %v5880
      %5897 = vst.msk [vmem:[%s240 + $0x38] sm:$0xff] %vm267, %v5881
      %5898 = vst.msk [vmem:[%s240 + $0x40] sm:$0xff] %vm267, %v5882
      %5899 = vst.msk [vmem:[%s240 + $0x48] sm:$0xff] %vm267, %v5883
      %5900 = vst.msk [vmem:[%s240 + $0x50] sm:$0xff] %vm267, %v5884
      %5901 = vst.msk [vmem:[%s240 + $0x58] sm:$0xff] %vm267, %v5885
      %5902 = vst.msk [vmem:[%s240 + $0x60] sm:$0xff] %vm267, %v5886
      %5903 = vst.msk [vmem:[%s240 + $0x68] sm:$0xff] %vm267, %v5887
      %5904 = vst.msk [vmem:[%s240 + $0x70] sm:$0xff] %vm267, %v5888
      %5905 = vst.msk [vmem:[%s240 + $0x78] sm:$0xff] %vm267, %v5889
      %s5906 = smul.u32 8, %s20
      %p5907 = scmp.lt.s32.totalorder %s19, 1
      %s5908 = scalar_select %p5907, %s19, 1
      %p5909 = scmp.lt.s32.totalorder %s5906, 15
      %s5910 = scalar_select %p5909, %s5906, 15
      %s5911 = smul.addr %s5910, 2
      %s5912 = smul.addr %s5908, 32
      %s5913 = sadd.s32 %s5911, %s5912
      %s5914 = smul.addr %s5913, 8
      %s5915 = scalar_lea.vmem %s4, %s5914
      // Predicated region
      $region37: #{windowed_mhsa.1} parent=35 // pred_check
        %p5916 = pneg %p138
      $region38: #{windowed_mhsa.1} parent=35 // pred_check_branch
        %5918 = sbr.rel (%p5916) target = $region40
      $region39: #{windowed_mhsa.1} parent=35 // pred_region
        %s5919 = smul.u32 8, %s20
      $region40: #{windowed_mhsa.1} parent=35 // pred_fallthru
        _
    $region36: #{windowed_mhsa.1} parent=5 // pred_fallthru
      _
    %p5920 = scmp.le.s32.totalorder 2, %s10
    // Predicated region
    $region41: #{windowed_mhsa.1} parent=5 // pred_check
      %p5921 = pneg %p5920
    $region42: #{windowed_mhsa.1} parent=5 // pred_check_branch
      %5923 = sbr.rel (%p5921) target = $region44
    $region43: #{windowed_mhsa.1} parent=5 // pred_region
      %s5924 = ssub.s32 %s10, 2
      // Predicated region
      $region45: #{windowed_mhsa.1} parent=43 // pred_check
        %p5925 = pneg %p144
      $region46: #{windowed_mhsa.1} parent=43 // pred_check_branch
        %5927 = sbr.rel (%p5925) target = $region48
      $region47: #{windowed_mhsa.1} parent=43 // pred_region
        %s5928 = smul.u32 8, %s22
        %p5929 = scmp.lt.s32.totalorder %s21, 1
        %s5930 = scalar_select %p5929, %s21, 1
        %p5931 = scmp.lt.s32.totalorder %s5928, 15
        %s5932 = scalar_select %p5931, %s5928, 15
        %s5933 = smul.addr %s5932, 2
        %s5934 = smul.addr %s5930, 32
        %s5935 = sadd.s32 %s5933, %s5934
        %s5936 = smul.addr %s5935, 8
        %s5937 = scalar_lea.vmem %s4, %s5936
      $region48: #{windowed_mhsa.1} parent=43 // pred_fallthru
        _
    $region44: #{windowed_mhsa.1} parent=5 // pred_fallthru
      _
  $region6: #{windowed_mhsa.1} parent=0 // loop_footer
    %s14 = sadd.s32 1, %s10
  $region7: #{windowed_mhsa.1} parent=0 // loop_footer_branch
    %9 = sbr.rel target = $region3
  $region8: #{windowed_mhsa.1} parent=0 // loop_exit
    _

</llo_original>
